<compile_context>
chip_gen: v6e
topology: v6e:2x2x1
jax: 0.10.0
libtpu: 0.0.40
codegen_flags: <defaults>
</compile_context>

<pallas_src>
import numpy as np
import jax
import jax.numpy as jnp
from jax.experimental import pallas as pl
from jax.experimental.pallas import tpu as pltpu

OC1, OC2, OC3 = 32, 64, 64
K1, S1 = 8, 4
K2, S2 = 4, 2
K3, S3 = 3, 1
FC1_OUT, HID = 256, 448
CW = K2 * OC1          # 128: lane width of one conv2 kernel-row chunk


# ----------------------------- fused Pallas kernel ---------------------------

def _make_fused_kernel(Bp, U, V, A, D, n_actions):
    """Bp: padded batch; (U,V): conv1 out spatial; (A,D): conv2 out spatial (conv3 out = 1x1)."""
    rpv = U * Bp            # rows per conv1 output column v in the conv1 GEMM result
    AD = A * D

    def kernel(p1_ref, w1_ref, b1_ref, w2_ref, b2_ref, w3_ref, b3_ref,
               fc1_w, fc1_b, fc2_w, fc2_b, ex_b, head_b,
               exw_hbm, headw_hbm,
               out_ref,
               x1_sr, x2im, x3_sr, hlhs_sr, exw_vm, headw_vm, dma_sem):
        # ---- kick off DMA of the late-stage weights; overlapped with the conv stack.
        ex_cp = pltpu.make_async_copy(exw_hbm, exw_vm, dma_sem.at[0])
        hd_cp = pltpu.make_async_copy(headw_hbm, headw_vm, dma_sem.at[1])
        ex_cp.start()
        hd_cp.start()

        # ---- conv1: ONE GEMM (1/255 folded into w1 at init). Result rows ordered (v, u, b).
        y1 = jnp.dot(p1_ref[...], w1_ref[...], preferred_element_type=jnp.float32)
        y1 = jnp.maximum(y1 + b1_ref[...], 0.0).astype(jnp.bfloat16)
        # Re-layout to rows=(u,b), cols=(v,c1) so conv2's im2col is contiguous static slices.
        for v in range(V):
            x1_sr[:, v * OC1:(v + 1) * OC1] = y1[v * rpv:(v + 1) * rpv, :]

        # ---- conv2: build im2col scratch (A*D*Bp, K2*K2*OC1) with static copies, ONE GEMM.
        for a in range(A):
            for d in range(D):
                q = a * D + d
                col0 = (S2 * d) * OC1
                for i in range(K2):
                    u = S2 * a + i
                    x2im[q * Bp:(q + 1) * Bp, i * CW:(i + 1) * CW] = \
                        x1_sr[u * Bp:(u + 1) * Bp, col0:col0 + CW].astype(jnp.float32)
        y2 = jnp.dot(x2im[...].astype(jnp.bfloat16), w2_ref[...],
                     preferred_element_type=jnp.float32)
        y2 = jnp.maximum(y2 + b2_ref[...], 0.0)                     # rows (a, d, b)

        # ---- conv3 (1x1 spatial output): flatten per batch to cols=(a,d,c), then one FC
        #      (w3 permuted at init to the matching (kh,kw,cin) order).
        for q in range(AD):
            x3_sr[:, q * OC2:(q + 1) * OC2] = \
                y2[q * Bp:(q + 1) * Bp, :].astype(jnp.bfloat16)

        def lin(x_bf16, w, b):
            return jnp.dot(x_bf16, w, preferred_element_type=jnp.float32) + b

        y3 = jnp.maximum(lin(x3_sr[...], w3_ref[...], b3_ref[...]), 0.0)      # (Bp, 64)

        # ---- FC trunk
        h1 = jnp.maximum(lin(y3.astype(jnp.bfloat16), fc1_w[...], fc1_b[...]), 0.0)
        h2 = jnp.maximum(lin(h1.astype(jnp.bfloat16), fc2_w[...], fc2_b[...]), 0.0)
        h2b = h2.astype(jnp.bfloat16)

        # extra_value_fc / extra_policy_fc merged into one (448, 896) RHS -> one GEMM.
        ex_cp.wait()
        ex = lin(h2b, exw_vm[...], ex_b[...])                                  # (Bp, 896)
        x_v = h2 + jnp.maximum(ex[:, :HID], 0.0)
        x_pi = h2 + jnp.maximum(ex[:, HID:], 0.0)

        # Fused policy / int_value / ext_value head: stacked [x_pi; x_v] -> one GEMM.
        hlhs_sr[:Bp, :] = x_pi
        hlhs_sr[Bp:, :] = x_v
        hd_cp.wait()
        hout = lin(hlhs_sr[...].astype(jnp.bfloat16), headw_vm[...], head_b[...])  # (2Bp,128)

        pi_rows = hout[:Bp, :]          # policy logits live in cols [0:n_actions]
        v_rows = hout[Bp:, :]           # int/ext values live in cols [n_actions:n_actions+2]
        col = jax.lax.broadcasted_iota(jnp.int32, (Bp, 128), 1)
        logits = jnp.where(col < n_actions, pi_rows, jnp.float32(-1e30))
        m = jnp.max(logits, axis=-1, keepdims=True)
        e = jnp.exp(logits - m)                                  # masked lanes underflow to 0
        probs = e / jnp.sum(e, axis=-1, keepdims=True)           # exact normalization
        vals = jnp.where((col >= n_actions) & (col < n_actions + 2), v_rows, 0.0)
        out_ref[...] = (probs + vals).astype(out_ref.dtype)      # single lane-dense store

    return kernel


def _full_specs(arrays):
    specs = []
    for a in arrays:
        nd = a.ndim
        specs.append(pl.BlockSpec(a.shape, lambda i, _nd=nd: (0,) * _nd))
    return specs


def _fused_call(p, patches, Bp, n_actions, U, V, A, D):
    kernel = _make_fused_kernel(Bp, U, V, A, D, n_actions)
    vmem_args = [patches,
                 p["w1"], p["b1"], p["w2"], p["b2"], p["w3"], p["b3"],
                 p["fc1_w"], p["fc1_b"], p["fc2_w"], p["fc2_b"],
                 p["ex_b"], p["head_b"]]
    hbm_args = [p["ex_w"], p["head_w"]]      # DMA'd inside the kernel, overlapped with convs
    return pl.pallas_call(
        kernel,
        out_shape=jax.ShapeDtypeStruct((Bp, 128), jnp.float32),
        grid=(1,),
        in_specs=(_full_specs(vmem_args)
                  + [pl.BlockSpec(memory_space=pl.ANY) for _ in hbm_args]),
        out_specs=pl.BlockSpec((Bp, 128), lambda i: (0, 0)),
        scratch_shapes=[
            pltpu.VMEM((U * Bp, V * OC1), jnp.bfloat16),        # conv1 activation (u,b)x(v,c)
            pltpu.VMEM((A * D * Bp, K2 * CW), jnp.float32),     # conv2 im2col
            pltpu.VMEM((Bp, A * D * OC2), jnp.bfloat16),        # flattened conv2 act (conv3 in)
            pltpu.VMEM((2 * Bp, HID), jnp.float32),             # stacked [x_pi; x_v] head LHS
            pltpu.VMEM(p["ex_w"].shape, jnp.bfloat16),          # prefetched merged extra-FC W
            pltpu.VMEM(p["head_w"].shape, jnp.bfloat16),        # prefetched fused head W
            pltpu.SemaphoreType.DMA((2,)),
        ],
        # batch fits one tile; for large batches a leading 'parallel' grid axis over batch
        # tiles would let v7x's two TensorCores split the work.
        compiler_params=pltpu.CompilerParams(dimension_semantics=("arbitrary",)),
    )(*vmem_args, *hbm_args)


# ------------------------------ wrapper glue ---------------------------------

def conv_shape(inp, kernel_size, stride, padding=0):
    return (inp + 2 * padding - kernel_size) // stride + 1


def conv1_patches(x_nchw, U, V):
    """x: (Bp, C, H, W) bf16 -> patch matrix (V*U*Bp, K1*K1*C) bf16.
    Rows ordered (v, u, b); cols ordered (kh, kw, c) to match w1's init-time permutation."""
    Bp, C = x_nchw.shape[0], x_nchw.shape[1]
    cols = []
    for kh in range(K1):
        for kw in range(K1):
            cols.append(x_nchw[:, :, kh:kh + S1 * U:S1, kw:kw + S1 * V:S1])  # (Bp, C, U, V)
    w6 = jnp.stack(cols, axis=-1).reshape(Bp, C, U, V, K1, K1)
    pm = w6.transpose(3, 2, 0, 4, 5, 1).reshape(V * U * Bp, K1 * K1 * C)
    return pm.astype(jnp.bfloat16)


def half_policy_forward(params, inputs, n_actions, geom):
    C, U, V, A, D = geom
    B = inputs.shape[0]
    Bp = ((B + 7) // 8) * 8                      # pad batch to a sublane multiple
    # HalfPolicyModel: inputs.half(); the /255 scaling is folded into w1 at init.
    x = inputs.astype(jnp.float16).astype(jnp.bfloat16)
    if Bp != B:
        x = jnp.pad(x, ((0, Bp - B), (0, 0), (0, 0), (0, 0)))
    patches = conv1_patches(x, U, V)
    out = _fused_call(params, patches, Bp, n_actions, U, V, A, D)
    probs = out[:B, :n_actions]
    int_value = out[:B, n_actions:n_actions + 1]
    ext_value = out[:B, n_actions + 1:n_actions + 2]
    # TODO(synk): torch.distributions.Categorical(probs) has no JAX-array equivalent to
    # return; probs (its sufficient statistic) is returned instead.
    return (int_value.astype(jnp.float16),
            ext_value.astype(jnp.float16),
            probs.astype(jnp.float16))


# --------------------------- parameter init ----------------------------------

def orthogonal(key, shape, gain):
    rows = shape[0]
    cols = int(np.prod(shape[1:]))
    n, m = (rows, cols) if rows >= cols else (cols, rows)
    a = jax.random.normal(key, (n, m), dtype=jnp.float32)
    q, r = jnp.linalg.qr(a)
    q = q * jnp.sign(jnp.diagonal(r))
    if rows < cols:
        q = q.T
    return (gain * q).reshape(shape)


def init_params(key, state_shape, n_actions):
    """Kernel-ready parameters: pre-permuted/transposed/merged, fp16-quantized, bf16 operands."""
    c, w, h = state_shape
    U = conv_shape(h, K1, S1); V = conv_shape(w, K1, S1)
    A = conv_shape(U, K2, S2); D = conv_shape(V, K2, S2)
    c3h = conv_shape(A, K3, S3); c3w = conv_shape(D, K3, S3)
    assert c3h == 1 and c3w == 1, "fused kernel assumes conv3 spatial output is 1x1"
    assert n_actions + 2 <= 128
    assert K2 * OC1 == 128
    flatten = c3h * c3w * OC3

    ks = jax.random.split(key, 10)
    g2, g01, g001 = np.sqrt(2.0), np.sqrt(0.1), np.sqrt(0.01)

    def q16(x):            # mimic model.half() storage quantization
        return x.astype(jnp.float16).astype(jnp.float32)

    def mxu(x):            # bf16 MXU operand
        return q16(x).astype(jnp.bfloat16)

    conv1_w = orthogonal(ks[0], (OC1, c, K1, K1), g2)
    conv2_w = orthogonal(ks[1], (OC2, OC1, K2, K2), g2)
    conv3_w = orthogonal(ks[2], (OC3, OC2, K3, K3), g2)
    fc1_w = orthogonal(ks[3], (FC1_OUT, flatten), g2)
    fc2_w = orthogonal(ks[4], (HID, FC1_OUT), g2)
    evf_w = orthogonal(ks[5], (HID, HID), g01)
    epf_w = orthogonal(ks[6], (HID, HID), g01)
    pol_w = orthogonal(ks[7], (n_actions, HID), g001)
    iv_w = orthogonal(ks[8], (1, HID), g001)
    ev_w = orthogonal(ks[9], (1, HID), g001)

    # conv weights permuted to (KH, KW, Cin, OC) and flattened -> (KH*KW*Cin, OC).
    # 1/255 input scaling folded into w1 (quantize to fp16 first to match .half() storage).
    w1 = (q16(conv1_w).transpose(2, 3, 1, 0).reshape(K1 * K1 * c, OC1)
          * np.float32(1.0 / 255.0)).astype(jnp.bfloat16)

    # extra_value_fc / extra_policy_fc merged: cols [0:448]=value branch, [448:896]=policy.
    ex_w = jnp.concatenate([q16(evf_w).T, q16(epf_w).T], axis=1).astype(jnp.bfloat16)

    # fused head: cols [0:n_actions]=policy, [n_actions]=int_value, [n_actions+1]=ext_value.
    head_w = (jnp.zeros((HID, 128), jnp.float32)
              .at[:, :n_actions].set(q16(pol_w).T)
              .at[:, n_actions].set(q16(iv_w)[0])
              .at[:, n_actions + 1].set(q16(ev_w)[0])).astype(jnp.bfloat16)

    p = {
        "w1": w1, "b1": jnp.zeros((1, OC1), jnp.float32),
        "w2": mxu(conv2_w.transpose(2, 3, 1, 0).reshape(K2 * K2 * OC1, OC2)),
        "b2": jnp.zeros((1, OC2), jnp.float32),
        "w3": mxu(conv3_w.transpose(2, 3, 1, 0).reshape(K3 * K3 * OC2, OC3)),
        "b3": jnp.zeros((1, OC3), jnp.float32),
        "fc1_w": mxu(fc1_w.T), "fc1_b": jnp.zeros((1, FC1_OUT), jnp.float32),
        "fc2_w": mxu(fc2_w.T), "fc2_b": jnp.zeros((1, HID), jnp.float32),
        "ex_w": ex_w, "ex_b": jnp.zeros((1, 2 * HID), jnp.float32),
        "head_w": head_w, "head_b": jnp.zeros((1, 128), jnp.float32),
    }
    geom = (c, U, V, A, D)
    return p, geom


# ---------------------------------- main --------------------------------------

if __name__ == "__main__":
    state_shape = (4, 36, 36)          # smallest spatial size the conv stack admits
    n_actions = 6
    batch = 2

    key = jax.random.PRNGKey(0)
    pkey, xkey = jax.random.split(key)
    params, geom = init_params(pkey, state_shape, n_actions)
    inputs = jax.random.uniform(xkey, (batch,) + state_shape,
                                dtype=jnp.float32, minval=0.0, maxval=255.0)

    fwd = jax.jit(lambda p, x: half_policy_forward(p, x, n_actions, geom))
    int_value, ext_value, probs = fwd(params, inputs)
    jax.block_until_ready((int_value, ext_value, probs))

    assert int_value.shape == (batch, 1) and int_value.dtype == jnp.float16
    assert ext_value.shape == (batch, 1) and ext_value.dtype == jnp.float16
    assert probs.shape == (batch, n_actions) and probs.dtype == jnp.float16
    assert bool(jnp.all(jnp.isfinite(probs.astype(jnp.float32))))
    assert bool(jnp.all(probs.astype(jnp.float32) >= 0.0))
    assert bool(jnp.allclose(jnp.sum(probs.astype(jnp.float32), axis=-1), 1.0, atol=1e-2))
    assert bool(jnp.all(jnp.isfinite(int_value.astype(jnp.float32))))
    assert bool(jnp.all(jnp.isfinite(ext_value.astype(jnp.float32))))
    print("KERNEL_OK")
</pallas_src>

<mosaic_0001>
module attributes {stable_mosaic.version = 11 : i64} {
  func.func @kernel(%arg0: i32, %arg1: memref<512x256xbf16, #tpu.memory_space<vmem>>, %arg2: memref<256x32xbf16, #tpu.memory_space<vmem>>, %arg3: memref<1x32xf32, #tpu.memory_space<vmem>>, %arg4: memref<512x64xbf16, #tpu.memory_space<vmem>>, %arg5: memref<1x64xf32, #tpu.memory_space<vmem>>, %arg6: memref<576x64xbf16, #tpu.memory_space<vmem>>, %arg7: memref<1x64xf32, #tpu.memory_space<vmem>>, %arg8: memref<64x256xbf16, #tpu.memory_space<vmem>>, %arg9: memref<1x256xf32, #tpu.memory_space<vmem>>, %arg10: memref<256x448xbf16, #tpu.memory_space<vmem>>, %arg11: memref<1x448xf32, #tpu.memory_space<vmem>>, %arg12: memref<1x896xf32, #tpu.memory_space<vmem>>, %arg13: memref<1x128xf32, #tpu.memory_space<vmem>>, %arg14: memref<448x896xbf16, #tpu.memory_space<any>>, %arg15: memref<448x128xbf16, #tpu.memory_space<any>>, %arg16: memref<8x128xf32, #tpu.memory_space<vmem>>, %arg17: memref<64x256xbf16, #tpu.memory_space<vmem>>, %arg18: memref<72x512xf32, #tpu.memory_space<vmem>>, %arg19: memref<8x576xbf16, #tpu.memory_space<vmem>>, %arg20: memref<16x448xf32, #tpu.memory_space<vmem>>, %arg21: memref<448x896xbf16, #tpu.memory_space<vmem>>, %arg22: memref<448x128xbf16, #tpu.memory_space<vmem>>, %arg23: memref<2x!tpu.dma_semaphore, #tpu.memory_space<semaphore_mem>>) attributes {dimension_semantics = [#tpu.dimension_semantics<arbitrary>], iteration_bounds = array<i64: 1>, scalar_prefetch = 0 : i64, scratch_operands = 7 : i64, tpu.core_type = #tpu.core_type<tc>, window_params = [{pipeline_mode = #tpu.pipeline_mode<synchronous>, transform_indices = @transform_0, window_bounds = array<i64: 512, 256>}, {pipeline_mode = #tpu.pipeline_mode<synchronous>, transform_indices = @transform_1, window_bounds = array<i64: 256, 32>}, {pipeline_mode = #tpu.pipeline_mode<synchronous>, transform_indices = @transform_2, window_bounds = array<i64: 1, 32>}, {pipeline_mode = #tpu.pipeline_mode<synchronous>, transform_indices = @transform_3, window_bounds = array<i64: 512, 64>}, {pipeline_mode = #tpu.pipeline_mode<synchronous>, transform_indices = @transform_4, window_bounds = array<i64: 1, 64>}, {pipeline_mode = #tpu.pipeline_mode<synchronous>, transform_indices = @transform_5, window_bounds = array<i64: 576, 64>}, {pipeline_mode = #tpu.pipeline_mode<synchronous>, transform_indices = @transform_6, window_bounds = array<i64: 1, 64>}, {pipeline_mode = #tpu.pipeline_mode<synchronous>, transform_indices = @transform_7, window_bounds = array<i64: 64, 256>}, {pipeline_mode = #tpu.pipeline_mode<synchronous>, transform_indices = @transform_8, window_bounds = array<i64: 1, 256>}, {pipeline_mode = #tpu.pipeline_mode<synchronous>, transform_indices = @transform_9, window_bounds = array<i64: 256, 448>}, {pipeline_mode = #tpu.pipeline_mode<synchronous>, transform_indices = @transform_10, window_bounds = array<i64: 1, 448>}, {pipeline_mode = #tpu.pipeline_mode<synchronous>, transform_indices = @transform_11, window_bounds = array<i64: 1, 896>}, {pipeline_mode = #tpu.pipeline_mode<synchronous>, transform_indices = @transform_12, window_bounds = array<i64: 1, 128>}, {}, {}, {pipeline_mode = #tpu.pipeline_mode<synchronous>, transform_indices = @transform_15, window_bounds = array<i64: 8, 128>}]} {
    %c0_i32 = arith.constant 0 : i32
    %0 = tpu.memref_slice %arg23[%c0_i32] : memref<2x!tpu.dma_semaphore, #tpu.memory_space<semaphore_mem>> -> memref<1x!tpu.dma_semaphore, #tpu.memory_space<semaphore_mem>>
    %1 = tpu.memref_squeeze %0 : memref<1x!tpu.dma_semaphore, #tpu.memory_space<semaphore_mem>> -> memref<!tpu.dma_semaphore, #tpu.memory_space<semaphore_mem>>
    tpu.enqueue_dma source(%arg14 : memref<448x896xbf16, #tpu.memory_space<any>>) target(%arg21 : memref<448x896xbf16, #tpu.memory_space<vmem>>) target_semaphore(%1 : memref<!tpu.dma_semaphore, #tpu.memory_space<semaphore_mem>>)
    %c1_i32 = arith.constant 1 : i32
    %2 = tpu.memref_slice %arg23[%c1_i32] : memref<2x!tpu.dma_semaphore, #tpu.memory_space<semaphore_mem>> -> memref<1x!tpu.dma_semaphore, #tpu.memory_space<semaphore_mem>>
    %3 = tpu.memref_squeeze %2 : memref<1x!tpu.dma_semaphore, #tpu.memory_space<semaphore_mem>> -> memref<!tpu.dma_semaphore, #tpu.memory_space<semaphore_mem>>
    tpu.enqueue_dma source(%arg15 : memref<448x128xbf16, #tpu.memory_space<any>>) target(%arg22 : memref<448x128xbf16, #tpu.memory_space<vmem>>) target_semaphore(%3 : memref<!tpu.dma_semaphore, #tpu.memory_space<semaphore_mem>>)
    %c0 = arith.constant 0 : index
    %c0_0 = arith.constant 0 : index
    %4 = vector.load %arg1[%c0, %c0_0] : memref<512x256xbf16, #tpu.memory_space<vmem>>, vector<512x256xbf16>
    %c0_1 = arith.constant 0 : index
    %c0_2 = arith.constant 0 : index
    %5 = vector.load %arg2[%c0_1, %c0_2] : memref<256x32xbf16, #tpu.memory_space<vmem>>, vector<256x32xbf16>
    %cst = arith.constant dense<0.000000e+00> : vector<512x32xf32>
    %6 = tpu.matmul %4, %5, %cst {dimension_numbers = #tpu.dot_dimension_numbers<[1], [0], [0], [1], [0, 0, 1, 1], [], []>} : vector<512x256xbf16>, vector<256x32xbf16>, vector<512x32xf32> -> vector<512x32xf32>
    %c0_3 = arith.constant 0 : index
    %c0_4 = arith.constant 0 : index
    %7 = vector.load %arg3[%c0_3, %c0_4] : memref<1x32xf32, #tpu.memory_space<vmem>>, vector<1x32xf32>
    %8 = vector.broadcast %7 : vector<1x32xf32> to vector<512x32xf32>
    %9 = arith.addf %6, %8 : vector<512x32xf32>
    %cst_5 = arith.constant 0.000000e+00 : f32
    %10 = vector.broadcast %cst_5 : f32 to vector<512x32xf32>
    %11 = arith.maximumf %9, %10 : vector<512x32xf32>
    %12 = arith.truncf %11 : vector<512x32xf32> to vector<512x32xbf16>
    %13 = vector.extract_strided_slice %12 {offsets = [0, 0], sizes = [64, 32], strides = [1, 1]} : vector<512x32xbf16> to vector<64x32xbf16>
    %c0_6 = arith.constant 0 : index
    %c0_7 = arith.constant 0 : index
    %14 = vector.load %arg17[%c0_6, %c0_7] : memref<64x256xbf16, #tpu.memory_space<vmem>>, vector<64x32xbf16>
    tpu.vector_store %arg17[%c0_6, %c0_7], %13 {strides = array<i32>} : memref<64x256xbf16, #tpu.memory_space<vmem>>, vector<64x32xbf16>,
    %15 = vector.extract_strided_slice %12 {offsets = [64, 0], sizes = [64, 32], strides = [1, 1]} : vector<512x32xbf16> to vector<64x32xbf16>
    %c0_8 = arith.constant 0 : index
    %c32 = arith.constant 32 : index
    %16 = vector.load %arg17[%c0_8, %c32] : memref<64x256xbf16, #tpu.memory_space<vmem>>, vector<64x32xbf16>
    tpu.vector_store %arg17[%c0_8, %c32], %15 {strides = array<i32>} : memref<64x256xbf16, #tpu.memory_space<vmem>>, vector<64x32xbf16>,
    %17 = vector.extract_strided_slice %12 {offsets = [128, 0], sizes = [64, 32], strides = [1, 1]} : vector<512x32xbf16> to vector<64x32xbf16>
    %c0_9 = arith.constant 0 : index
    %c64 = arith.constant 64 : index
    %18 = vector.load %arg17[%c0_9, %c64] : memref<64x256xbf16, #tpu.memory_space<vmem>>, vector<64x32xbf16>
    tpu.vector_store %arg17[%c0_9, %c64], %17 {strides = array<i32>} : memref<64x256xbf16, #tpu.memory_space<vmem>>, vector<64x32xbf16>,
    %19 = vector.extract_strided_slice %12 {offsets = [192, 0], sizes = [64, 32], strides = [1, 1]} : vector<512x32xbf16> to vector<64x32xbf16>
    %c0_10 = arith.constant 0 : index
    %c96 = arith.constant 96 : index
    %20 = vector.load %arg17[%c0_10, %c96] : memref<64x256xbf16, #tpu.memory_space<vmem>>, vector<64x32xbf16>
    tpu.vector_store %arg17[%c0_10, %c96], %19 {strides = array<i32>} : memref<64x256xbf16, #tpu.memory_space<vmem>>, vector<64x32xbf16>,
    %21 = vector.extract_strided_slice %12 {offsets = [256, 0], sizes = [64, 32], strides = [1, 1]} : vector<512x32xbf16> to vector<64x32xbf16>
    %c0_11 = arith.constant 0 : index
    %c128 = arith.constant 128 : index
    %22 = vector.load %arg17[%c0_11, %c128] : memref<64x256xbf16, #tpu.memory_space<vmem>>, vector<64x32xbf16>
    tpu.vector_store %arg17[%c0_11, %c128], %21 {strides = array<i32>} : memref<64x256xbf16, #tpu.memory_space<vmem>>, vector<64x32xbf16>,
    %23 = vector.extract_strided_slice %12 {offsets = [320, 0], sizes = [64, 32], strides = [1, 1]} : vector<512x32xbf16> to vector<64x32xbf16>
    %c0_12 = arith.constant 0 : index
    %c160 = arith.constant 160 : index
    %24 = vector.load %arg17[%c0_12, %c160] : memref<64x256xbf16, #tpu.memory_space<vmem>>, vector<64x32xbf16>
    tpu.vector_store %arg17[%c0_12, %c160], %23 {strides = array<i32>} : memref<64x256xbf16, #tpu.memory_space<vmem>>, vector<64x32xbf16>,
    %25 = vector.extract_strided_slice %12 {offsets = [384, 0], sizes = [64, 32], strides = [1, 1]} : vector<512x32xbf16> to vector<64x32xbf16>
    %c0_13 = arith.constant 0 : index
    %c192 = arith.constant 192 : index
    %26 = vector.load %arg17[%c0_13, %c192] : memref<64x256xbf16, #tpu.memory_space<vmem>>, vector<64x32xbf16>
    tpu.vector_store %arg17[%c0_13, %c192], %25 {strides = array<i32>} : memref<64x256xbf16, #tpu.memory_space<vmem>>, vector<64x32xbf16>,
    %27 = vector.extract_strided_slice %12 {offsets = [448, 0], sizes = [64, 32], strides = [1, 1]} : vector<512x32xbf16> to vector<64x32xbf16>
    %c0_14 = arith.constant 0 : index
    %c224 = arith.constant 224 : index
    %28 = vector.load %arg17[%c0_14, %c224] : memref<64x256xbf16, #tpu.memory_space<vmem>>, vector<64x32xbf16>
    tpu.vector_store %arg17[%c0_14, %c224], %27 {strides = array<i32>} : memref<64x256xbf16, #tpu.memory_space<vmem>>, vector<64x32xbf16>,
    %c0_15 = arith.constant 0 : index
    %c0_16 = arith.constant 0 : index
    %29 = vector.load %arg17[%c0_15, %c0_16] : memref<64x256xbf16, #tpu.memory_space<vmem>>, vector<8x128xbf16>
    %30 = arith.extf %29 : vector<8x128xbf16> to vector<8x128xf32>
    %c0_17 = arith.constant 0 : index
    %c0_18 = arith.constant 0 : index
    %31 = vector.load %arg18[%c0_17, %c0_18] : memref<72x512xf32, #tpu.memory_space<vmem>>, vector<8x128xf32>
    tpu.vector_store %arg18[%c0_17, %c0_18], %30 {strides = array<i32>} : memref<72x512xf32, #tpu.memory_space<vmem>>, vector<8x128xf32>,
    %c8 = arith.constant 8 : index
    %c0_19 = arith.constant 0 : index
    %32 = vector.load %arg17[%c8, %c0_19] : memref<64x256xbf16, #tpu.memory_space<vmem>>, vector<8x128xbf16>
    %33 = arith.extf %32 : vector<8x128xbf16> to vector<8x128xf32>
    %c0_20 = arith.constant 0 : index
    %c128_21 = arith.constant 128 : index
    %34 = vector.load %arg18[%c0_20, %c128_21] : memref<72x512xf32, #tpu.memory_space<vmem>>, vector<8x128xf32>
    tpu.vector_store %arg18[%c0_20, %c128_21], %33 {strides = array<i32>} : memref<72x512xf32, #tpu.memory_space<vmem>>, vector<8x128xf32>,
    %c16 = arith.constant 16 : index
    %c0_22 = arith.constant 0 : index
    %35 = vector.load %arg17[%c16, %c0_22] : memref<64x256xbf16, #tpu.memory_space<vmem>>, vector<8x128xbf16>
    %36 = arith.extf %35 : vector<8x128xbf16> to vector<8x128xf32>
    %c0_23 = arith.constant 0 : index
    %c256 = arith.constant 256 : index
    %37 = vector.load %arg18[%c0_23, %c256] : memref<72x512xf32, #tpu.memory_space<vmem>>, vector<8x128xf32>
    tpu.vector_store %arg18[%c0_23, %c256], %36 {strides = array<i32>} : memref<72x512xf32, #tpu.memory_space<vmem>>, vector<8x128xf32>,
    %c24 = arith.constant 24 : index
    %c0_24 = arith.constant 0 : index
    %38 = vector.load %arg17[%c24, %c0_24] : memref<64x256xbf16, #tpu.memory_space<vmem>>, vector<8x128xbf16>
    %39 = arith.extf %38 : vector<8x128xbf16> to vector<8x128xf32>
    %c0_25 = arith.constant 0 : index
    %c384 = arith.constant 384 : index
    %40 = vector.load %arg18[%c0_25, %c384] : memref<72x512xf32, #tpu.memory_space<vmem>>, vector<8x128xf32>
    tpu.vector_store %arg18[%c0_25, %c384], %39 {strides = array<i32>} : memref<72x512xf32, #tpu.memory_space<vmem>>, vector<8x128xf32>,
    %c0_26 = arith.constant 0 : index
    %c64_27 = arith.constant 64 : index
    %41 = vector.load %arg17[%c0_26, %c64_27] : memref<64x256xbf16, #tpu.memory_space<vmem>>, vector<8x128xbf16>
    %42 = arith.extf %41 : vector<8x128xbf16> to vector<8x128xf32>
    %c8_28 = arith.constant 8 : index
    %c0_29 = arith.constant 0 : index
    %43 = vector.load %arg18[%c8_28, %c0_29] : memref<72x512xf32, #tpu.memory_space<vmem>>, vector<8x128xf32>
    tpu.vector_store %arg18[%c8_28, %c0_29], %42 {strides = array<i32>} : memref<72x512xf32, #tpu.memory_space<vmem>>, vector<8x128xf32>,
    %c8_30 = arith.constant 8 : index
    %c64_31 = arith.constant 64 : index
    %44 = vector.load %arg17[%c8_30, %c64_31] : memref<64x256xbf16, #tpu.memory_space<vmem>>, vector<8x128xbf16>
    %45 = arith.extf %44 : vector<8x128xbf16> to vector<8x128xf32>
    %c8_32 = arith.constant 8 : index
    %c128_33 = arith.constant 128 : index
    %46 = vector.load %arg18[%c8_32, %c128_33] : memref<72x512xf32, #tpu.memory_space<vmem>>, vector<8x128xf32>
    tpu.vector_store %arg18[%c8_32, %c128_33], %45 {strides = array<i32>} : memref<72x512xf32, #tpu.memory_space<vmem>>, vector<8x128xf32>,
    %c16_34 = arith.constant 16 : index
    %c64_35 = arith.constant 64 : index
    %47 = vector.load %arg17[%c16_34, %c64_35] : memref<64x256xbf16, #tpu.memory_space<vmem>>, vector<8x128xbf16>
    %48 = arith.extf %47 : vector<8x128xbf16> to vector<8x128xf32>
    %c8_36 = arith.constant 8 : index
    %c256_37 = arith.constant 256 : index
    %49 = vector.load %arg18[%c8_36, %c256_37] : memref<72x512xf32, #tpu.memory_space<vmem>>, vector<8x128xf32>
    tpu.vector_store %arg18[%c8_36, %c256_37], %48 {strides = array<i32>} : memref<72x512xf32, #tpu.memory_space<vmem>>, vector<8x128xf32>,
    %c24_38 = arith.constant 24 : index
    %c64_39 = arith.constant 64 : index
    %50 = vector.load %arg17[%c24_38, %c64_39] : memref<64x256xbf16, #tpu.memory_space<vmem>>, vector<8x128xbf16>
    %51 = arith.extf %50 : vector<8x128xbf16> to vector<8x128xf32>
    %c8_40 = arith.constant 8 : index
    %c384_41 = arith.constant 384 : index
    %52 = vector.load %arg18[%c8_40, %c384_41] : memref<72x512xf32, #tpu.memory_space<vmem>>, vector<8x128xf32>
    tpu.vector_store %arg18[%c8_40, %c384_41], %51 {strides = array<i32>} : memref<72x512xf32, #tpu.memory_space<vmem>>, vector<8x128xf32>,
    %c0_42 = arith.constant 0 : index
    %c128_43 = arith.constant 128 : index
    %53 = vector.load %arg17[%c0_42, %c128_43] : memref<64x256xbf16, #tpu.memory_space<vmem>>, vector<8x128xbf16>
    %54 = arith.extf %53 : vector<8x128xbf16> to vector<8x128xf32>
    %c16_44 = arith.constant 16 : index
    %c0_45 = arith.constant 0 : index
    %55 = vector.load %arg18[%c16_44, %c0_45] : memref<72x512xf32, #tpu.memory_space<vmem>>, vector<8x128xf32>
    tpu.vector_store %arg18[%c16_44, %c0_45], %54 {strides = array<i32>} : memref<72x512xf32, #tpu.memory_space<vmem>>, vector<8x128xf32>,
    %c8_46 = arith.constant 8 : index
    %c128_47 = arith.constant 128 : index
    %56 = vector.load %arg17[%c8_46, %c128_47] : memref<64x256xbf16, #tpu.memory_space<vmem>>, vector<8x128xbf16>
    %57 = arith.extf %56 : vector<8x128xbf16> to vector<8x128xf32>
    %c16_48 = arith.constant 16 : index
    %c128_49 = arith.constant 128 : index
    %58 = vector.load %arg18[%c16_48, %c128_49] : memref<72x512xf32, #tpu.memory_space<vmem>>, vector<8x128xf32>
    tpu.vector_store %arg18[%c16_48, %c128_49], %57 {strides = array<i32>} : memref<72x512xf32, #tpu.memory_space<vmem>>, vector<8x128xf32>,
    %c16_50 = arith.constant 16 : index
    %c128_51 = arith.constant 128 : index
    %59 = vector.load %arg17[%c16_50, %c128_51] : memref<64x256xbf16, #tpu.memory_space<vmem>>, vector<8x128xbf16>
    %60 = arith.extf %59 : vector<8x128xbf16> to vector<8x128xf32>
    %c16_52 = arith.constant 16 : index
    %c256_53 = arith.constant 256 : index
    %61 = vector.load %arg18[%c16_52, %c256_53] : memref<72x512xf32, #tpu.memory_space<vmem>>, vector<8x128xf32>
    tpu.vector_store %arg18[%c16_52, %c256_53], %60 {strides = array<i32>} : memref<72x512xf32, #tpu.memory_space<vmem>>, vector<8x128xf32>,
    %c24_54 = arith.constant 24 : index
    %c128_55 = arith.constant 128 : index
    %62 = vector.load %arg17[%c24_54, %c128_55] : memref<64x256xbf16, #tpu.memory_space<vmem>>, vector<8x128xbf16>
    %63 = arith.extf %62 : vector<8x128xbf16> to vector<8x128xf32>
    %c16_56 = arith.constant 16 : index
    %c384_57 = arith.constant 384 : index
    %64 = vector.load %arg18[%c16_56, %c384_57] : memref<72x512xf32, #tpu.memory_space<vmem>>, vector<8x128xf32>
    tpu.vector_store %arg18[%c16_56, %c384_57], %63 {strides = array<i32>} : memref<72x512xf32, #tpu.memory_space<vmem>>, vector<8x128xf32>,
    %c16_58 = arith.constant 16 : index
    %c0_59 = arith.constant 0 : index
    %65 = vector.load %arg17[%c16_58, %c0_59] : memref<64x256xbf16, #tpu.memory_space<vmem>>, vector<8x128xbf16>
    %66 = arith.extf %65 : vector<8x128xbf16> to vector<8x128xf32>
    %c24_60 = arith.constant 24 : index
    %c0_61 = arith.constant 0 : index
    %67 = vector.load %arg18[%c24_60, %c0_61] : memref<72x512xf32, #tpu.memory_space<vmem>>, vector<8x128xf32>
    tpu.vector_store %arg18[%c24_60, %c0_61], %66 {strides = array<i32>} : memref<72x512xf32, #tpu.memory_space<vmem>>, vector<8x128xf32>,
    %c24_62 = arith.constant 24 : index
    %c0_63 = arith.constant 0 : index
    %68 = vector.load %arg17[%c24_62, %c0_63] : memref<64x256xbf16, #tpu.memory_space<vmem>>, vector<8x128xbf16>
    %69 = arith.extf %68 : vector<8x128xbf16> to vector<8x128xf32>
    %c24_64 = arith.constant 24 : index
    %c128_65 = arith.constant 128 : index
    %70 = vector.load %arg18[%c24_64, %c128_65] : memref<72x512xf32, #tpu.memory_space<vmem>>, vector<8x128xf32>
    tpu.vector_store %arg18[%c24_64, %c128_65], %69 {strides = array<i32>} : memref<72x512xf32, #tpu.memory_space<vmem>>, vector<8x128xf32>,
    %c32_66 = arith.constant 32 : index
    %c0_67 = arith.constant 0 : index
    %71 = vector.load %arg17[%c32_66, %c0_67] : memref<64x256xbf16, #tpu.memory_space<vmem>>, vector<8x128xbf16>
    %72 = arith.extf %71 : vector<8x128xbf16> to vector<8x128xf32>
    %c24_68 = arith.constant 24 : index
    %c256_69 = arith.constant 256 : index
    %73 = vector.load %arg18[%c24_68, %c256_69] : memref<72x512xf32, #tpu.memory_space<vmem>>, vector<8x128xf32>
    tpu.vector_store %arg18[%c24_68, %c256_69], %72 {strides = array<i32>} : memref<72x512xf32, #tpu.memory_space<vmem>>, vector<8x128xf32>,
    %c40 = arith.constant 40 : index
    %c0_70 = arith.constant 0 : index
    %74 = vector.load %arg17[%c40, %c0_70] : memref<64x256xbf16, #tpu.memory_space<vmem>>, vector<8x128xbf16>
    %75 = arith.extf %74 : vector<8x128xbf16> to vector<8x128xf32>
    %c24_71 = arith.constant 24 : index
    %c384_72 = arith.constant 384 : index
    %76 = vector.load %arg18[%c24_71, %c384_72] : memref<72x512xf32, #tpu.memory_space<vmem>>, vector<8x128xf32>
    tpu.vector_store %arg18[%c24_71, %c384_72], %75 {strides = array<i32>} : memref<72x512xf32, #tpu.memory_space<vmem>>, vector<8x128xf32>,
    %c16_73 = arith.constant 16 : index
    %c64_74 = arith.constant 64 : index
    %77 = vector.load %arg17[%c16_73, %c64_74] : memref<64x256xbf16, #tpu.memory_space<vmem>>, vector<8x128xbf16>
    %78 = arith.extf %77 : vector<8x128xbf16> to vector<8x128xf32>
    %c32_75 = arith.constant 32 : index
    %c0_76 = arith.constant 0 : index
    %79 = vector.load %arg18[%c32_75, %c0_76] : memref<72x512xf32, #tpu.memory_space<vmem>>, vector<8x128xf32>
    tpu.vector_store %arg18[%c32_75, %c0_76], %78 {strides = array<i32>} : memref<72x512xf32, #tpu.memory_space<vmem>>, vector<8x128xf32>,
    %c24_77 = arith.constant 24 : index
    %c64_78 = arith.constant 64 : index
    %80 = vector.load %arg17[%c24_77, %c64_78] : memref<64x256xbf16, #tpu.memory_space<vmem>>, vector<8x128xbf16>
    %81 = arith.extf %80 : vector<8x128xbf16> to vector<8x128xf32>
    %c32_79 = arith.constant 32 : index
    %c128_80 = arith.constant 128 : index
    %82 = vector.load %arg18[%c32_79, %c128_80] : memref<72x512xf32, #tpu.memory_space<vmem>>, vector<8x128xf32>
    tpu.vector_store %arg18[%c32_79, %c128_80], %81 {strides = array<i32>} : memref<72x512xf32, #tpu.memory_space<vmem>>, vector<8x128xf32>,
    %c32_81 = arith.constant 32 : index
    %c64_82 = arith.constant 64 : index
    %83 = vector.load %arg17[%c32_81, %c64_82] : memref<64x256xbf16, #tpu.memory_space<vmem>>, vector<8x128xbf16>
    %84 = arith.extf %83 : vector<8x128xbf16> to vector<8x128xf32>
    %c32_83 = arith.constant 32 : index
    %c256_84 = arith.constant 256 : index
    %85 = vector.load %arg18[%c32_83, %c256_84] : memref<72x512xf32, #tpu.memory_space<vmem>>, vector<8x128xf32>
    tpu.vector_store %arg18[%c32_83, %c256_84], %84 {strides = array<i32>} : memref<72x512xf32, #tpu.memory_space<vmem>>, vector<8x128xf32>,
    %c40_85 = arith.constant 40 : index
    %c64_86 = arith.constant 64 : index
    %86 = vector.load %arg17[%c40_85, %c64_86] : memref<64x256xbf16, #tpu.memory_space<vmem>>, vector<8x128xbf16>
    %87 = arith.extf %86 : vector<8x128xbf16> to vector<8x128xf32>
    %c32_87 = arith.constant 32 : index
    %c384_88 = arith.constant 384 : index
    %88 = vector.load %arg18[%c32_87, %c384_88] : memref<72x512xf32, #tpu.memory_space<vmem>>, vector<8x128xf32>
    tpu.vector_store %arg18[%c32_87, %c384_88], %87 {strides = array<i32>} : memref<72x512xf32, #tpu.memory_space<vmem>>, vector<8x128xf32>,
    %c16_89 = arith.constant 16 : index
    %c128_90 = arith.constant 128 : index
    %89 = vector.load %arg17[%c16_89, %c128_90] : memref<64x256xbf16, #tpu.memory_space<vmem>>, vector<8x128xbf16>
    %90 = arith.extf %89 : vector<8x128xbf16> to vector<8x128xf32>
    %c40_91 = arith.constant 40 : index
    %c0_92 = arith.constant 0 : index
    %91 = vector.load %arg18[%c40_91, %c0_92] : memref<72x512xf32, #tpu.memory_space<vmem>>, vector<8x128xf32>
    tpu.vector_store %arg18[%c40_91, %c0_92], %90 {strides = array<i32>} : memref<72x512xf32, #tpu.memory_space<vmem>>, vector<8x128xf32>,
    %c24_93 = arith.constant 24 : index
    %c128_94 = arith.constant 128 : index
    %92 = vector.load %arg17[%c24_93, %c128_94] : memref<64x256xbf16, #tpu.memory_space<vmem>>, vector<8x128xbf16>
    %93 = arith.extf %92 : vector<8x128xbf16> to vector<8x128xf32>
    %c40_95 = arith.constant 40 : index
    %c128_96 = arith.constant 128 : index
    %94 = vector.load %arg18[%c40_95, %c128_96] : memref<72x512xf32, #tpu.memory_space<vmem>>, vector<8x128xf32>
    tpu.vector_store %arg18[%c40_95, %c128_96], %93 {strides = array<i32>} : memref<72x512xf32, #tpu.memory_space<vmem>>, vector<8x128xf32>,
    %c32_97 = arith.constant 32 : index
    %c128_98 = arith.constant 128 : index
    %95 = vector.load %arg17[%c32_97, %c128_98] : memref<64x256xbf16, #tpu.memory_space<vmem>>, vector<8x128xbf16>
    %96 = arith.extf %95 : vector<8x128xbf16> to vector<8x128xf32>
    %c40_99 = arith.constant 40 : index
    %c256_100 = arith.constant 256 : index
    %97 = vector.load %arg18[%c40_99, %c256_100] : memref<72x512xf32, #tpu.memory_space<vmem>>, vector<8x128xf32>
    tpu.vector_store %arg18[%c40_99, %c256_100], %96 {strides = array<i32>} : memref<72x512xf32, #tpu.memory_space<vmem>>, vector<8x128xf32>,
    %c40_101 = arith.constant 40 : index
    %c128_102 = arith.constant 128 : index
    %98 = vector.load %arg17[%c40_101, %c128_102] : memref<64x256xbf16, #tpu.memory_space<vmem>>, vector<8x128xbf16>
    %99 = arith.extf %98 : vector<8x128xbf16> to vector<8x128xf32>
    %c40_103 = arith.constant 40 : index
    %c384_104 = arith.constant 384 : index
    %100 = vector.load %arg18[%c40_103, %c384_104] : memref<72x512xf32, #tpu.memory_space<vmem>>, vector<8x128xf32>
    tpu.vector_store %arg18[%c40_103, %c384_104], %99 {strides = array<i32>} : memref<72x512xf32, #tpu.memory_space<vmem>>, vector<8x128xf32>,
    %c32_105 = arith.constant 32 : index
    %c0_106 = arith.constant 0 : index
    %101 = vector.load %arg17[%c32_105, %c0_106] : memref<64x256xbf16, #tpu.memory_space<vmem>>, vector<8x128xbf16>
    %102 = arith.extf %101 : vector<8x128xbf16> to vector<8x128xf32>
    %c48 = arith.constant 48 : index
    %c0_107 = arith.constant 0 : index
    %103 = vector.load %arg18[%c48, %c0_107] : memref<72x512xf32, #tpu.memory_space<vmem>>, vector<8x128xf32>
    tpu.vector_store %arg18[%c48, %c0_107], %102 {strides = array<i32>} : memref<72x512xf32, #tpu.memory_space<vmem>>, vector<8x128xf32>,
    %c40_108 = arith.constant 40 : index
    %c0_109 = arith.constant 0 : index
    %104 = vector.load %arg17[%c40_108, %c0_109] : memref<64x256xbf16, #tpu.memory_space<vmem>>, vector<8x128xbf16>
    %105 = arith.extf %104 : vector<8x128xbf16> to vector<8x128xf32>
    %c48_110 = arith.constant 48 : index
    %c128_111 = arith.constant 128 : index
    %106 = vector.load %arg18[%c48_110, %c128_111] : memref<72x512xf32, #tpu.memory_space<vmem>>, vector<8x128xf32>
    tpu.vector_store %arg18[%c48_110, %c128_111], %105 {strides = array<i32>} : memref<72x512xf32, #tpu.memory_space<vmem>>, vector<8x128xf32>,
    %c48_112 = arith.constant 48 : index
    %c0_113 = arith.constant 0 : index
    %107 = vector.load %arg17[%c48_112, %c0_113] : memref<64x256xbf16, #tpu.memory_space<vmem>>, vector<8x128xbf16>
    %108 = arith.extf %107 : vector<8x128xbf16> to vector<8x128xf32>
    %c48_114 = arith.constant 48 : index
    %c256_115 = arith.constant 256 : index
    %109 = vector.load %arg18[%c48_114, %c256_115] : memref<72x512xf32, #tpu.memory_space<vmem>>, vector<8x128xf32>
    tpu.vector_store %arg18[%c48_114, %c256_115], %108 {strides = array<i32>} : memref<72x512xf32, #tpu.memory_space<vmem>>, vector<8x128xf32>,
    %c56 = arith.constant 56 : index
    %c0_116 = arith.constant 0 : index
    %110 = vector.load %arg17[%c56, %c0_116] : memref<64x256xbf16, #tpu.memory_space<vmem>>, vector<8x128xbf16>
    %111 = arith.extf %110 : vector<8x128xbf16> to vector<8x128xf32>
    %c48_117 = arith.constant 48 : index
    %c384_118 = arith.constant 384 : index
    %112 = vector.load %arg18[%c48_117, %c384_118] : memref<72x512xf32, #tpu.memory_space<vmem>>, vector<8x128xf32>
    tpu.vector_store %arg18[%c48_117, %c384_118], %111 {strides = array<i32>} : memref<72x512xf32, #tpu.memory_space<vmem>>, vector<8x128xf32>,
    %c32_119 = arith.constant 32 : index
    %c64_120 = arith.constant 64 : index
    %113 = vector.load %arg17[%c32_119, %c64_120] : memref<64x256xbf16, #tpu.memory_space<vmem>>, vector<8x128xbf16>
    %114 = arith.extf %113 : vector<8x128xbf16> to vector<8x128xf32>
    %c56_121 = arith.constant 56 : index
    %c0_122 = arith.constant 0 : index
    %115 = vector.load %arg18[%c56_121, %c0_122] : memref<72x512xf32, #tpu.memory_space<vmem>>, vector<8x128xf32>
    tpu.vector_store %arg18[%c56_121, %c0_122], %114 {strides = array<i32>} : memref<72x512xf32, #tpu.memory_space<vmem>>, vector<8x128xf32>,
    %c40_123 = arith.constant 40 : index
    %c64_124 = arith.constant 64 : index
    %116 = vector.load %arg17[%c40_123, %c64_124] : memref<64x256xbf16, #tpu.memory_space<vmem>>, vector<8x128xbf16>
    %117 = arith.extf %116 : vector<8x128xbf16> to vector<8x128xf32>
    %c56_125 = arith.constant 56 : index
    %c128_126 = arith.constant 128 : index
    %118 = vector.load %arg18[%c56_125, %c128_126] : memref<72x512xf32, #tpu.memory_space<vmem>>, vector<8x128xf32>
    tpu.vector_store %arg18[%c56_125, %c128_126], %117 {strides = array<i32>} : memref<72x512xf32, #tpu.memory_space<vmem>>, vector<8x128xf32>,
    %c48_127 = arith.constant 48 : index
    %c64_128 = arith.constant 64 : index
    %119 = vector.load %arg17[%c48_127, %c64_128] : memref<64x256xbf16, #tpu.memory_space<vmem>>, vector<8x128xbf16>
    %120 = arith.extf %119 : vector<8x128xbf16> to vector<8x128xf32>
    %c56_129 = arith.constant 56 : index
    %c256_130 = arith.constant 256 : index
    %121 = vector.load %arg18[%c56_129, %c256_130] : memref<72x512xf32, #tpu.memory_space<vmem>>, vector<8x128xf32>
    tpu.vector_store %arg18[%c56_129, %c256_130], %120 {strides = array<i32>} : memref<72x512xf32, #tpu.memory_space<vmem>>, vector<8x128xf32>,
    %c56_131 = arith.constant 56 : index
    %c64_132 = arith.constant 64 : index
    %122 = vector.load %arg17[%c56_131, %c64_132] : memref<64x256xbf16, #tpu.memory_space<vmem>>, vector<8x128xbf16>
    %123 = arith.extf %122 : vector<8x128xbf16> to vector<8x128xf32>
    %c56_133 = arith.constant 56 : index
    %c384_134 = arith.constant 384 : index
    %124 = vector.load %arg18[%c56_133, %c384_134] : memref<72x512xf32, #tpu.memory_space<vmem>>, vector<8x128xf32>
    tpu.vector_store %arg18[%c56_133, %c384_134], %123 {strides = array<i32>} : memref<72x512xf32, #tpu.memory_space<vmem>>, vector<8x128xf32>,
    %c32_135 = arith.constant 32 : index
    %c128_136 = arith.constant 128 : index
    %125 = vector.load %arg17[%c32_135, %c128_136] : memref<64x256xbf16, #tpu.memory_space<vmem>>, vector<8x128xbf16>
    %126 = arith.extf %125 : vector<8x128xbf16> to vector<8x128xf32>
    %c64_137 = arith.constant 64 : index
    %c0_138 = arith.constant 0 : index
    %127 = vector.load %arg18[%c64_137, %c0_138] : memref<72x512xf32, #tpu.memory_space<vmem>>, vector<8x128xf32>
    tpu.vector_store %arg18[%c64_137, %c0_138], %126 {strides = array<i32>} : memref<72x512xf32, #tpu.memory_space<vmem>>, vector<8x128xf32>,
    %c40_139 = arith.constant 40 : index
    %c128_140 = arith.constant 128 : index
    %128 = vector.load %arg17[%c40_139, %c128_140] : memref<64x256xbf16, #tpu.memory_space<vmem>>, vector<8x128xbf16>
    %129 = arith.extf %128 : vector<8x128xbf16> to vector<8x128xf32>
    %c64_141 = arith.constant 64 : index
    %c128_142 = arith.constant 128 : index
    %130 = vector.load %arg18[%c64_141, %c128_142] : memref<72x512xf32, #tpu.memory_space<vmem>>, vector<8x128xf32>
    tpu.vector_store %arg18[%c64_141, %c128_142], %129 {strides = array<i32>} : memref<72x512xf32, #tpu.memory_space<vmem>>, vector<8x128xf32>,
    %c48_143 = arith.constant 48 : index
    %c128_144 = arith.constant 128 : index
    %131 = vector.load %arg17[%c48_143, %c128_144] : memref<64x256xbf16, #tpu.memory_space<vmem>>, vector<8x128xbf16>
    %132 = arith.extf %131 : vector<8x128xbf16> to vector<8x128xf32>
    %c64_145 = arith.constant 64 : index
    %c256_146 = arith.constant 256 : index
    %133 = vector.load %arg18[%c64_145, %c256_146] : memref<72x512xf32, #tpu.memory_space<vmem>>, vector<8x128xf32>
    tpu.vector_store %arg18[%c64_145, %c256_146], %132 {strides = array<i32>} : memref<72x512xf32, #tpu.memory_space<vmem>>, vector<8x128xf32>,
    %c56_147 = arith.constant 56 : index
    %c128_148 = arith.constant 128 : index
    %134 = vector.load %arg17[%c56_147, %c128_148] : memref<64x256xbf16, #tpu.memory_space<vmem>>, vector<8x128xbf16>
    %135 = arith.extf %134 : vector<8x128xbf16> to vector<8x128xf32>
    %c64_149 = arith.constant 64 : index
    %c384_150 = arith.constant 384 : index
    %136 = vector.load %arg18[%c64_149, %c384_150] : memref<72x512xf32, #tpu.memory_space<vmem>>, vector<8x128xf32>
    tpu.vector_store %arg18[%c64_149, %c384_150], %135 {strides = array<i32>} : memref<72x512xf32, #tpu.memory_space<vmem>>, vector<8x128xf32>,
    %c0_151 = arith.constant 0 : index
    %c0_152 = arith.constant 0 : index
    %137 = vector.load %arg18[%c0_151, %c0_152] : memref<72x512xf32, #tpu.memory_space<vmem>>, vector<72x512xf32>
    %138 = arith.truncf %137 : vector<72x512xf32> to vector<72x512xbf16>
    %c0_153 = arith.constant 0 : index
    %c0_154 = arith.constant 0 : index
    %139 = vector.load %arg4[%c0_153, %c0_154] : memref<512x64xbf16, #tpu.memory_space<vmem>>, vector<512x64xbf16>
    %cst_155 = arith.constant dense<0.000000e+00> : vector<72x64xf32>
    %140 = tpu.matmul %138, %139, %cst_155 {dimension_numbers = #tpu.dot_dimension_numbers<[1], [0], [0], [1], [0, 0, 1, 1], [], []>} : vector<72x512xbf16>, vector<512x64xbf16>, vector<72x64xf32> -> vector<72x64xf32>
    %c0_156 = arith.constant 0 : index
    %c0_157 = arith.constant 0 : index
    %141 = vector.load %arg5[%c0_156, %c0_157] : memref<1x64xf32, #tpu.memory_space<vmem>>, vector<1x64xf32>
    %142 = vector.broadcast %141 : vector<1x64xf32> to vector<72x64xf32>
    %143 = arith.addf %140, %142 : vector<72x64xf32>
    %cst_158 = arith.constant 0.000000e+00 : f32
    %144 = vector.broadcast %cst_158 : f32 to vector<72x64xf32>
    %145 = arith.maximumf %143, %144 : vector<72x64xf32>
    %146 = vector.extract_strided_slice %145 {offsets = [0, 0], sizes = [8, 64], strides = [1, 1]} : vector<72x64xf32> to vector<8x64xf32>
    %147 = arith.truncf %146 : vector<8x64xf32> to vector<8x64xbf16>
    %c0_159 = arith.constant 0 : index
    %c0_160 = arith.constant 0 : index
    %148 = vector.load %arg19[%c0_159, %c0_160] : memref<8x576xbf16, #tpu.memory_space<vmem>>, vector<8x64xbf16>
    tpu.vector_store %arg19[%c0_159, %c0_160], %147 {strides = array<i32>} : memref<8x576xbf16, #tpu.memory_space<vmem>>, vector<8x64xbf16>,
    %149 = vector.extract_strided_slice %145 {offsets = [8, 0], sizes = [8, 64], strides = [1, 1]} : vector<72x64xf32> to vector<8x64xf32>
    %150 = arith.truncf %149 : vector<8x64xf32> to vector<8x64xbf16>
    %c0_161 = arith.constant 0 : index
    %c64_162 = arith.constant 64 : index
    %151 = vector.load %arg19[%c0_161, %c64_162] : memref<8x576xbf16, #tpu.memory_space<vmem>>, vector<8x64xbf16>
    tpu.vector_store %arg19[%c0_161, %c64_162], %150 {strides = array<i32>} : memref<8x576xbf16, #tpu.memory_space<vmem>>, vector<8x64xbf16>,
    %152 = vector.extract_strided_slice %145 {offsets = [16, 0], sizes = [8, 64], strides = [1, 1]} : vector<72x64xf32> to vector<8x64xf32>
    %153 = arith.truncf %152 : vector<8x64xf32> to vector<8x64xbf16>
    %c0_163 = arith.constant 0 : index
    %c128_164 = arith.constant 128 : index
    %154 = vector.load %arg19[%c0_163, %c128_164] : memref<8x576xbf16, #tpu.memory_space<vmem>>, vector<8x64xbf16>
    tpu.vector_store %arg19[%c0_163, %c128_164], %153 {strides = array<i32>} : memref<8x576xbf16, #tpu.memory_space<vmem>>, vector<8x64xbf16>,
    %155 = vector.extract_strided_slice %145 {offsets = [24, 0], sizes = [8, 64], strides = [1, 1]} : vector<72x64xf32> to vector<8x64xf32>
    %156 = arith.truncf %155 : vector<8x64xf32> to vector<8x64xbf16>
    %c0_165 = arith.constant 0 : index
    %c192_166 = arith.constant 192 : index
    %157 = vector.load %arg19[%c0_165, %c192_166] : memref<8x576xbf16, #tpu.memory_space<vmem>>, vector<8x64xbf16>
    tpu.vector_store %arg19[%c0_165, %c192_166], %156 {strides = array<i32>} : memref<8x576xbf16, #tpu.memory_space<vmem>>, vector<8x64xbf16>,
    %158 = vector.extract_strided_slice %145 {offsets = [32, 0], sizes = [8, 64], strides = [1, 1]} : vector<72x64xf32> to vector<8x64xf32>
    %159 = arith.truncf %158 : vector<8x64xf32> to vector<8x64xbf16>
    %c0_167 = arith.constant 0 : index
    %c256_168 = arith.constant 256 : index
    %160 = vector.load %arg19[%c0_167, %c256_168] : memref<8x576xbf16, #tpu.memory_space<vmem>>, vector<8x64xbf16>
    tpu.vector_store %arg19[%c0_167, %c256_168], %159 {strides = array<i32>} : memref<8x576xbf16, #tpu.memory_space<vmem>>, vector<8x64xbf16>,
    %161 = vector.extract_strided_slice %145 {offsets = [40, 0], sizes = [8, 64], strides = [1, 1]} : vector<72x64xf32> to vector<8x64xf32>
    %162 = arith.truncf %161 : vector<8x64xf32> to vector<8x64xbf16>
    %c0_169 = arith.constant 0 : index
    %c320 = arith.constant 320 : index
    %163 = vector.load %arg19[%c0_169, %c320] : memref<8x576xbf16, #tpu.memory_space<vmem>>, vector<8x64xbf16>
    tpu.vector_store %arg19[%c0_169, %c320], %162 {strides = array<i32>} : memref<8x576xbf16, #tpu.memory_space<vmem>>, vector<8x64xbf16>,
    %164 = vector.extract_strided_slice %145 {offsets = [48, 0], sizes = [8, 64], strides = [1, 1]} : vector<72x64xf32> to vector<8x64xf32>
    %165 = arith.truncf %164 : vector<8x64xf32> to vector<8x64xbf16>
    %c0_170 = arith.constant 0 : index
    %c384_171 = arith.constant 384 : index
    %166 = vector.load %arg19[%c0_170, %c384_171] : memref<8x576xbf16, #tpu.memory_space<vmem>>, vector<8x64xbf16>
    tpu.vector_store %arg19[%c0_170, %c384_171], %165 {strides = array<i32>} : memref<8x576xbf16, #tpu.memory_space<vmem>>, vector<8x64xbf16>,
    %167 = vector.extract_strided_slice %145 {offsets = [56, 0], sizes = [8, 64], strides = [1, 1]} : vector<72x64xf32> to vector<8x64xf32>
    %168 = arith.truncf %167 : vector<8x64xf32> to vector<8x64xbf16>
    %c0_172 = arith.constant 0 : index
    %c448 = arith.constant 448 : index
    %169 = vector.load %arg19[%c0_172, %c448] : memref<8x576xbf16, #tpu.memory_space<vmem>>, vector<8x64xbf16>
    tpu.vector_store %arg19[%c0_172, %c448], %168 {strides = array<i32>} : memref<8x576xbf16, #tpu.memory_space<vmem>>, vector<8x64xbf16>,
    %170 = vector.extract_strided_slice %145 {offsets = [64, 0], sizes = [8, 64], strides = [1, 1]} : vector<72x64xf32> to vector<8x64xf32>
    %171 = arith.truncf %170 : vector<8x64xf32> to vector<8x64xbf16>
    %c0_173 = arith.constant 0 : index
    %c512 = arith.constant 512 : index
    %172 = vector.load %arg19[%c0_173, %c512] : memref<8x576xbf16, #tpu.memory_space<vmem>>, vector<8x64xbf16>
    tpu.vector_store %arg19[%c0_173, %c512], %171 {strides = array<i32>} : memref<8x576xbf16, #tpu.memory_space<vmem>>, vector<8x64xbf16>,
    %c0_174 = arith.constant 0 : index
    %c0_175 = arith.constant 0 : index
    %173 = vector.load %arg19[%c0_174, %c0_175] : memref<8x576xbf16, #tpu.memory_space<vmem>>, vector<8x576xbf16>
    %c0_176 = arith.constant 0 : index
    %c0_177 = arith.constant 0 : index
    %174 = vector.load %arg6[%c0_176, %c0_177] : memref<576x64xbf16, #tpu.memory_space<vmem>>, vector<576x64xbf16>
    %c0_178 = arith.constant 0 : index
    %c0_179 = arith.constant 0 : index
    %175 = vector.load %arg7[%c0_178, %c0_179] : memref<1x64xf32, #tpu.memory_space<vmem>>, vector<1x64xf32>
    %cst_180 = arith.constant dense<0.000000e+00> : vector<8x64xf32>
    %176 = tpu.matmul %173, %174, %cst_180 {dimension_numbers = #tpu.dot_dimension_numbers<[1], [0], [0], [1], [0, 0, 1, 1], [], []>} : vector<8x576xbf16>, vector<576x64xbf16>, vector<8x64xf32> -> vector<8x64xf32>
    %177 = vector.broadcast %175 : vector<1x64xf32> to vector<8x64xf32>
    %178 = arith.addf %176, %177 : vector<8x64xf32>
    %cst_181 = arith.constant 0.000000e+00 : f32
    %179 = vector.broadcast %cst_181 : f32 to vector<8x64xf32>
    %180 = arith.maximumf %178, %179 : vector<8x64xf32>
    %181 = arith.truncf %180 : vector<8x64xf32> to vector<8x64xbf16>
    %c0_182 = arith.constant 0 : index
    %c0_183 = arith.constant 0 : index
    %182 = vector.load %arg8[%c0_182, %c0_183] : memref<64x256xbf16, #tpu.memory_space<vmem>>, vector<64x256xbf16>
    %c0_184 = arith.constant 0 : index
    %c0_185 = arith.constant 0 : index
    %183 = vector.load %arg9[%c0_184, %c0_185] : memref<1x256xf32, #tpu.memory_space<vmem>>, vector<1x256xf32>
    %cst_186 = arith.constant dense<0.000000e+00> : vector<8x256xf32>
    %184 = tpu.matmul %181, %182, %cst_186 {dimension_numbers = #tpu.dot_dimension_numbers<[1], [0], [0], [1], [0, 0, 1, 1], [], []>} : vector<8x64xbf16>, vector<64x256xbf16>, vector<8x256xf32> -> vector<8x256xf32>
    %185 = vector.broadcast %183 : vector<1x256xf32> to vector<8x256xf32>
    %186 = arith.addf %184, %185 : vector<8x256xf32>
    %cst_187 = arith.constant 0.000000e+00 : f32
    %187 = vector.broadcast %cst_187 : f32 to vector<8x256xf32>
    %188 = arith.maximumf %186, %187 : vector<8x256xf32>
    %189 = arith.truncf %188 : vector<8x256xf32> to vector<8x256xbf16>
    %c0_188 = arith.constant 0 : index
    %c0_189 = arith.constant 0 : index
    %190 = vector.load %arg10[%c0_188, %c0_189] : memref<256x448xbf16, #tpu.memory_space<vmem>>, vector<256x448xbf16>
    %c0_190 = arith.constant 0 : index
    %c0_191 = arith.constant 0 : index
    %191 = vector.load %arg11[%c0_190, %c0_191] : memref<1x448xf32, #tpu.memory_space<vmem>>, vector<1x448xf32>
    %cst_192 = arith.constant dense<0.000000e+00> : vector<8x448xf32>
    %192 = tpu.matmul %189, %190, %cst_192 {dimension_numbers = #tpu.dot_dimension_numbers<[1], [0], [0], [1], [0, 0, 1, 1], [], []>} : vector<8x256xbf16>, vector<256x448xbf16>, vector<8x448xf32> -> vector<8x448xf32>
    %193 = vector.broadcast %191 : vector<1x448xf32> to vector<8x448xf32>
    %194 = arith.addf %192, %193 : vector<8x448xf32>
    %cst_193 = arith.constant 0.000000e+00 : f32
    %195 = vector.broadcast %cst_193 : f32 to vector<8x448xf32>
    %196 = arith.maximumf %194, %195 : vector<8x448xf32>
    %197 = arith.truncf %196 : vector<8x448xf32> to vector<8x448xbf16>
    %c0_i32_194 = arith.constant 0 : i32
    %198 = tpu.memref_slice %arg23[%c0_i32_194] : memref<2x!tpu.dma_semaphore, #tpu.memory_space<semaphore_mem>> -> memref<1x!tpu.dma_semaphore, #tpu.memory_space<semaphore_mem>>
    %199 = tpu.memref_squeeze %198 : memref<1x!tpu.dma_semaphore, #tpu.memory_space<semaphore_mem>> -> memref<!tpu.dma_semaphore, #tpu.memory_space<semaphore_mem>>
    tpu.wait_dma2 semaphore(%199 : memref<!tpu.dma_semaphore, #tpu.memory_space<semaphore_mem>>) src(%arg14 : memref<448x896xbf16, #tpu.memory_space<any>>) dst(%arg21 : memref<448x896xbf16, #tpu.memory_space<vmem>>)
    %c0_195 = arith.constant 0 : index
    %c0_196 = arith.constant 0 : index
    %200 = vector.load %arg21[%c0_195, %c0_196] : memref<448x896xbf16, #tpu.memory_space<vmem>>, vector<448x896xbf16>
    %c0_197 = arith.constant 0 : index
    %c0_198 = arith.constant 0 : index
    %201 = vector.load %arg12[%c0_197, %c0_198] : memref<1x896xf32, #tpu.memory_space<vmem>>, vector<1x896xf32>
    %cst_199 = arith.constant dense<0.000000e+00> : vector<8x896xf32>
    %202 = tpu.matmul %197, %200, %cst_199 {dimension_numbers = #tpu.dot_dimension_numbers<[1], [0], [0], [1], [0, 0, 1, 1], [], []>} : vector<8x448xbf16>, vector<448x896xbf16>, vector<8x896xf32> -> vector<8x896xf32>
    %203 = vector.broadcast %201 : vector<1x896xf32> to vector<8x896xf32>
    %204 = arith.addf %202, %203 : vector<8x896xf32>
    %205 = vector.extract_strided_slice %204 {offsets = [0, 0], sizes = [8, 448], strides = [1, 1]} : vector<8x896xf32> to vector<8x448xf32>
    %cst_200 = arith.constant 0.000000e+00 : f32
    %206 = vector.broadcast %cst_200 : f32 to vector<8x448xf32>
    %207 = arith.maximumf %205, %206 : vector<8x448xf32>
    %208 = arith.addf %196, %207 : vector<8x448xf32>
    %209 = vector.extract_strided_slice %204 {offsets = [0, 448], sizes = [8, 448], strides = [1, 1]} : vector<8x896xf32> to vector<8x448xf32>
    %cst_201 = arith.constant 0.000000e+00 : f32
    %210 = vector.broadcast %cst_201 : f32 to vector<8x448xf32>
    %211 = arith.maximumf %209, %210 : vector<8x448xf32>
    %212 = arith.addf %196, %211 : vector<8x448xf32>
    %c0_202 = arith.constant 0 : index
    %c0_203 = arith.constant 0 : index
    %213 = vector.load %arg20[%c0_202, %c0_203] : memref<16x448xf32, #tpu.memory_space<vmem>>, vector<8x448xf32>
    tpu.vector_store %arg20[%c0_202, %c0_203], %212 {strides = array<i32>} : memref<16x448xf32, #tpu.memory_space<vmem>>, vector<8x448xf32>,
    %c8_204 = arith.constant 8 : index
    %c0_205 = arith.constant 0 : index
    %214 = vector.load %arg20[%c8_204, %c0_205] : memref<16x448xf32, #tpu.memory_space<vmem>>, vector<8x448xf32>
    tpu.vector_store %arg20[%c8_204, %c0_205], %208 {strides = array<i32>} : memref<16x448xf32, #tpu.memory_space<vmem>>, vector<8x448xf32>,
    %c1_i32_206 = arith.constant 1 : i32
    %215 = tpu.memref_slice %arg23[%c1_i32_206] : memref<2x!tpu.dma_semaphore, #tpu.memory_space<semaphore_mem>> -> memref<1x!tpu.dma_semaphore, #tpu.memory_space<semaphore_mem>>
    %216 = tpu.memref_squeeze %215 : memref<1x!tpu.dma_semaphore, #tpu.memory_space<semaphore_mem>> -> memref<!tpu.dma_semaphore, #tpu.memory_space<semaphore_mem>>
    tpu.wait_dma2 semaphore(%216 : memref<!tpu.dma_semaphore, #tpu.memory_space<semaphore_mem>>) src(%arg15 : memref<448x128xbf16, #tpu.memory_space<any>>) dst(%arg22 : memref<448x128xbf16, #tpu.memory_space<vmem>>)
    %c0_207 = arith.constant 0 : index
    %c0_208 = arith.constant 0 : index
    %217 = vector.load %arg20[%c0_207, %c0_208] : memref<16x448xf32, #tpu.memory_space<vmem>>, vector<16x448xf32>
    %218 = arith.truncf %217 : vector<16x448xf32> to vector<16x448xbf16>
    %c0_209 = arith.constant 0 : index
    %c0_210 = arith.constant 0 : index
    %219 = vector.load %arg22[%c0_209, %c0_210] : memref<448x128xbf16, #tpu.memory_space<vmem>>, vector<448x128xbf16>
    %c0_211 = arith.constant 0 : index
    %c0_212 = arith.constant 0 : index
    %220 = vector.load %arg13[%c0_211, %c0_212] : memref<1x128xf32, #tpu.memory_space<vmem>>, vector<1x128xf32>
    %cst_213 = arith.constant dense<0.000000e+00> : vector<16x128xf32>
    %221 = tpu.matmul %218, %219, %cst_213 {dimension_numbers = #tpu.dot_dimension_numbers<[1], [0], [0], [1], [0, 0, 1, 1], [], []>} : vector<16x448xbf16>, vector<448x128xbf16>, vector<16x128xf32> -> vector<16x128xf32>
    %222 = vector.broadcast %220 : vector<1x128xf32> to vector<16x128xf32>
    %223 = arith.addf %221, %222 : vector<16x128xf32>
    %224 = vector.extract_strided_slice %223 {offsets = [0, 0], sizes = [8, 128], strides = [1, 1]} : vector<16x128xf32> to vector<8x128xf32>
    %225 = vector.extract_strided_slice %223 {offsets = [8, 0], sizes = [8, 128], strides = [1, 1]} : vector<16x128xf32> to vector<8x128xf32>
    %226 = tpu.iota {dimensions = array<i32: 1>} : vector<8x128xi32>
    %c6_i32 = arith.constant 6 : i32
    %227 = vector.broadcast %c6_i32 : i32 to vector<8x128xi32>
    %228 = arith.cmpi slt, %226, %227 : vector<8x128xi32>
    %cst_214 = arith.constant -1.000000e+30 : f32
    %229 = vector.broadcast %cst_214 : f32 to vector<8x128xf32>
    %230 = arith.select %228, %224, %229 : vector<8x128xi1>, vector<8x128xf32>
    %cst_215 = arith.constant dense<0xFF800000> : vector<8xf32>
    %231 = vector.multi_reduction <maximumf>, %230, %cst_215 [1] : vector<8x128xf32> to vector<8xf32>
    %232 = vector.shape_cast %231 : vector<8xf32> to vector<8x1xf32>
    %233 = vector.broadcast %232 : vector<8x1xf32> to vector<8x128xf32>
    %234 = arith.subf %230, %233 : vector<8x128xf32>
    %235 = math.exp %234 : vector<8x128xf32>
    %cst_216 = arith.constant dense<0.000000e+00> : vector<8xf32>
    %236 = vector.multi_reduction <add>, %235, %cst_216 [1] : vector<8x128xf32> to vector<8xf32>
    %237 = vector.shape_cast %236 : vector<8xf32> to vector<8x1xf32>
    %238 = vector.broadcast %237 : vector<8x1xf32> to vector<8x128xf32>
    %239 = arith.divf %235, %238 : vector<8x128xf32>
    %c6_i32_217 = arith.constant 6 : i32
    %240 = vector.broadcast %c6_i32_217 : i32 to vector<8x128xi32>
    %241 = arith.cmpi sge, %226, %240 : vector<8x128xi32>
    %c8_i32 = arith.constant 8 : i32
    %242 = vector.broadcast %c8_i32 : i32 to vector<8x128xi32>
    %243 = arith.cmpi slt, %226, %242 : vector<8x128xi32>
    %244 = arith.andi %241, %243 : vector<8x128xi1>
    %cst_218 = arith.constant 0.000000e+00 : f32
    %245 = vector.broadcast %cst_218 : f32 to vector<8x128xf32>
    %246 = arith.select %244, %225, %245 : vector<8x128xi1>, vector<8x128xf32>
    %247 = arith.addf %239, %246 : vector<8x128xf32>
    %c0_219 = arith.constant 0 : index
    %c0_220 = arith.constant 0 : index
    %248 = vector.load %arg16[%c0_219, %c0_220] : memref<8x128xf32, #tpu.memory_space<vmem>>, vector<8x128xf32>
    tpu.vector_store %arg16[%c0_219, %c0_220], %247 {strides = array<i32>} : memref<8x128xf32, #tpu.memory_space<vmem>>, vector<8x128xf32>,
    return
  }
  func.func @transform_0(%arg0: i32) -> (i32, i32) {
    %c0_i32 = arith.constant 0 : i32
    %c0_i32_0 = arith.constant 0 : i32
    %c0_i32_1 = arith.constant 0 : i32
    return %c0_i32, %c0_i32_0 : i32, i32
  }
  func.func @transform_1(%arg0: i32) -> (i32, i32) {
    %c0_i32 = arith.constant 0 : i32
    %c0_i32_0 = arith.constant 0 : i32
    %c0_i32_1 = arith.constant 0 : i32
    return %c0_i32, %c0_i32_0 : i32, i32
  }
  func.func @transform_2(%arg0: i32) -> (i32, i32) {
    %c0_i32 = arith.constant 0 : i32
    %c0_i32_0 = arith.constant 0 : i32
    %c0_i32_1 = arith.constant 0 : i32
    return %c0_i32, %c0_i32_0 : i32, i32
  }
  func.func @transform_3(%arg0: i32) -> (i32, i32) {
    %c0_i32 = arith.constant 0 : i32
    %c0_i32_0 = arith.constant 0 : i32
    %c0_i32_1 = arith.constant 0 : i32
    return %c0_i32, %c0_i32_0 : i32, i32
  }
  func.func @transform_4(%arg0: i32) -> (i32, i32) {
    %c0_i32 = arith.constant 0 : i32
    %c0_i32_0 = arith.constant 0 : i32
    %c0_i32_1 = arith.constant 0 : i32
    return %c0_i32, %c0_i32_0 : i32, i32
  }
  func.func @transform_5(%arg0: i32) -> (i32, i32) {
    %c0_i32 = arith.constant 0 : i32
    %c0_i32_0 = arith.constant 0 : i32
    %c0_i32_1 = arith.constant 0 : i32
    return %c0_i32, %c0_i32_0 : i32, i32
  }
  func.func @transform_6(%arg0: i32) -> (i32, i32) {
    %c0_i32 = arith.constant 0 : i32
    %c0_i32_0 = arith.constant 0 : i32
    %c0_i32_1 = arith.constant 0 : i32
    return %c0_i32, %c0_i32_0 : i32, i32
  }
  func.func @transform_7(%arg0: i32) -> (i32, i32) {
    %c0_i32 = arith.constant 0 : i32
    %c0_i32_0 = arith.constant 0 : i32
    %c0_i32_1 = arith.constant 0 : i32
    return %c0_i32, %c0_i32_0 : i32, i32
  }
  func.func @transform_8(%arg0: i32) -> (i32, i32) {
    %c0_i32 = arith.constant 0 : i32
    %c0_i32_0 = arith.constant 0 : i32
    %c0_i32_1 = arith.constant 0 : i32
    return %c0_i32, %c0_i32_0 : i32, i32
  }
  func.func @transform_9(%arg0: i32) -> (i32, i32) {
    %c0_i32 = arith.constant 0 : i32
    %c0_i32_0 = arith.constant 0 : i32
    %c0_i32_1 = arith.constant 0 : i32
    return %c0_i32, %c0_i32_0 : i32, i32
  }
  func.func @transform_10(%arg0: i32) -> (i32, i32) {
    %c0_i32 = arith.constant 0 : i32
    %c0_i32_0 = arith.constant 0 : i32
    %c0_i32_1 = arith.constant 0 : i32
    return %c0_i32, %c0_i32_0 : i32, i32
  }
  func.func @transform_11(%arg0: i32) -> (i32, i32) {
    %c0_i32 = arith.constant 0 : i32
    %c0_i32_0 = arith.constant 0 : i32
    %c0_i32_1 = arith.constant 0 : i32
    return %c0_i32, %c0_i32_0 : i32, i32
  }
  func.func @transform_12(%arg0: i32) -> (i32, i32) {
    %c0_i32 = arith.constant 0 : i32
    %c0_i32_0 = arith.constant 0 : i32
    %c0_i32_1 = arith.constant 0 : i32
    return %c0_i32, %c0_i32_0 : i32, i32
  }
  func.func @transform_15(%arg0: i32) -> (i32, i32) {
    %c0_i32 = arith.constant 0 : i32
    %c0_i32_0 = arith.constant 0 : i32
    %c0_i32_1 = arith.constant 0 : i32
    return %c0_i32, %c0_i32_0 : i32, i32
  }
}

</mosaic_0001>

<llo_original>
// kernel: _lambda_.1
$region0: #{_lambda_.1}
  #allocation0 [shape = 'u32[]', space=smem, size = 0x4, offset = 0x4, fixed_abs, tag = 'smem constant byte address 0x4 - core index']
  #allocation1 [shape = 'u32[144,128]{1,0:T(1,128)}', space=vmem, size = 0x12000, scoped, tag = 'internal scratch']
  #allocation2 [shape = 'bf16[64,256]{1,0:T(8,128)(2,1)}', space=vmem, size = 0x8000, scoped, tag = 'scratch operand']
  #allocation3 [shape = 'f32[72,512]{1,0:T(8,128)}', space=vmem, size = 0x24000, scoped, tag = 'scratch operand']
  #allocation4 [shape = 'bf16[8,576]{1,0:T(8,128)(2,1)}', space=vmem, size = 0x2800, scoped, tag = 'scratch operand']
  #allocation5 [shape = 'f32[16,448]{1,0:T(8,128)}', space=vmem, size = 0x8000, scoped, tag = 'scratch operand']
  #allocation6 [shape = 'bf16[448,896]{1,0:T(8,128)(2,1)}', space=vmem, size = 0xc4000, scoped, tag = 'scratch operand']
  #allocation7 [shape = 'bf16[448,128]{1,0:T(8,128)(2,1)}', space=vmem, size = 0x1c000, scoped, tag = 'scratch operand']
  #allocation8 [shape = 's32[2]{0}', space=sflag, size = 0x8, scoped, tag = 'scratch operand']
  #allocation9 [shape = 's32[]', space=sflag, size = 0x4, offset = 0, fixed_abs, tag = 'sflag constant byte address 0x0 - dummy sync flag']
  #allocation10 [shape = 's32[]', space=sflag, size = 0x4, offset = 0, fixed_abs, tag = 'sflag constant byte address 0x0 - dummy sync flag']
  %s0 = inlined_call_operand.vmem [shape: bf16[512,256], index: 0, kind: input, shape index: {}]
  %s1 = inlined_call_operand.vmem [shape: bf16[256,32], index: 1, kind: input, shape index: {}]
  %s2 = inlined_call_operand.vmem [shape: f32[1,32], index: 2, kind: input, shape index: {}]
  %s3 = inlined_call_operand.vmem [shape: bf16[512,64], index: 3, kind: input, shape index: {}]
  %s4 = inlined_call_operand.vmem [shape: f32[1,64], index: 4, kind: input, shape index: {}]
  %s5 = inlined_call_operand.vmem [shape: bf16[576,64], index: 5, kind: input, shape index: {}]
  %s6 = inlined_call_operand.vmem [shape: f32[1,64], index: 6, kind: input, shape index: {}]
  %s7 = inlined_call_operand.vmem [shape: bf16[64,256], index: 7, kind: input, shape index: {}]
  %s8 = inlined_call_operand.vmem [shape: f32[1,256], index: 8, kind: input, shape index: {}]
  %s9 = inlined_call_operand.vmem [shape: bf16[256,448], index: 9, kind: input, shape index: {}]
  %s10 = inlined_call_operand.vmem [shape: f32[1,448], index: 10, kind: input, shape index: {}]
  %s11 = inlined_call_operand.vmem [shape: f32[1,896], index: 11, kind: input, shape index: {}]
  %s12 = inlined_call_operand.vmem [shape: f32[1,128], index: 12, kind: input, shape index: {}]
  %s13 = inlined_call_operand.vmem [shape: bf16[448,896], index: 13, kind: input, shape index: {}]
  %s14 = inlined_call_operand.vmem [shape: bf16[448,128], index: 14, kind: input, shape index: {}]
  %s15 = inlined_call_operand.vmem [shape: f32[8,128], index: 15, kind: output, shape index: {}]
  %s16 = sld [smem:[#allocation0]]
  $region130: #{_lambda_.1} parent=0
    _
  %s18 = ssub.s32 1, %s16
  %s19 = scalar_select 0, %s18, %s16
  // Predicated region
  $region2: #{_lambda_.1} parent=0 // pred_check
    _
  $region3: #{_lambda_.1} parent=0 // pred_check_branch
    %21 = sbr.rel (0) target = $region5
  $region4: #{_lambda_.1} parent=0 // pred_region
    _
  $region5: #{_lambda_.1} parent=0 // pred_fallthru
    _
  // Predicated region
  $region6: #{_lambda_.1} parent=0 // pred_check
    _
  $region7: #{_lambda_.1} parent=0 // pred_check_branch
    %23 = sbr.rel (0) target = $region9
  $region8: #{_lambda_.1} parent=0 // pred_region
    _
  $region9: #{_lambda_.1} parent=0 // pred_fallthru
    _
  // Predicated region
  $region10: #{_lambda_.1} parent=0 // pred_check
    _
  $region11: #{_lambda_.1} parent=0 // pred_check_branch
    %25 = sbr.rel (0) target = $region13
  $region12: #{_lambda_.1} parent=0 // pred_region
    _
  $region13: #{_lambda_.1} parent=0 // pred_fallthru
    _
  // Predicated region
  $region14: #{_lambda_.1} parent=0 // pred_check
    _
  $region15: #{_lambda_.1} parent=0 // pred_check_branch
    %27 = sbr.rel (0) target = $region17
  $region16: #{_lambda_.1} parent=0 // pred_region
    _
  $region17: #{_lambda_.1} parent=0 // pred_fallthru
    _
  // Predicated region
  $region18: #{_lambda_.1} parent=0 // pred_check
    _
  $region19: #{_lambda_.1} parent=0 // pred_check_branch
    %29 = sbr.rel (0) target = $region21
  $region20: #{_lambda_.1} parent=0 // pred_region
    _
  $region21: #{_lambda_.1} parent=0 // pred_fallthru
    _
  // Predicated region
  $region22: #{_lambda_.1} parent=0 // pred_check
    _
  $region23: #{_lambda_.1} parent=0 // pred_check_branch
    %31 = sbr.rel (0) target = $region25
  $region24: #{_lambda_.1} parent=0 // pred_region
    _
  $region25: #{_lambda_.1} parent=0 // pred_fallthru
    _
  // Predicated region
  $region26: #{_lambda_.1} parent=0 // pred_check
    _
  $region27: #{_lambda_.1} parent=0 // pred_check_branch
    %33 = sbr.rel (0) target = $region29
  $region28: #{_lambda_.1} parent=0 // pred_region
    _
  $region29: #{_lambda_.1} parent=0 // pred_fallthru
    _
  // Predicated region
  $region30: #{_lambda_.1} parent=0 // pred_check
    _
  $region31: #{_lambda_.1} parent=0 // pred_check_branch
    %35 = sbr.rel (0) target = $region33
  $region32: #{_lambda_.1} parent=0 // pred_region
    _
  $region33: #{_lambda_.1} parent=0 // pred_fallthru
    _
  // Predicated region
  $region34: #{_lambda_.1} parent=0 // pred_check
    _
  $region35: #{_lambda_.1} parent=0 // pred_check_branch
    %37 = sbr.rel (0) target = $region37
  $region36: #{_lambda_.1} parent=0 // pred_region
    _
  $region37: #{_lambda_.1} parent=0 // pred_fallthru
    _
  // Predicated region
  $region38: #{_lambda_.1} parent=0 // pred_check
    _
  $region39: #{_lambda_.1} parent=0 // pred_check_branch
    %39 = sbr.rel (0) target = $region41
  $region40: #{_lambda_.1} parent=0 // pred_region
    _
  $region41: #{_lambda_.1} parent=0 // pred_fallthru
    _
  // Predicated region
  $region42: #{_lambda_.1} parent=0 // pred_check
    _
  $region43: #{_lambda_.1} parent=0 // pred_check_branch
    %41 = sbr.rel (0) target = $region45
  $region44: #{_lambda_.1} parent=0 // pred_region
    _
  $region45: #{_lambda_.1} parent=0 // pred_fallthru
    _
  // Predicated region
  $region46: #{_lambda_.1} parent=0 // pred_check
    _
  $region47: #{_lambda_.1} parent=0 // pred_check_branch
    %43 = sbr.rel (0) target = $region49
  $region48: #{_lambda_.1} parent=0 // pred_region
    _
  $region49: #{_lambda_.1} parent=0 // pred_fallthru
    _
  // Predicated region
  $region50: #{_lambda_.1} parent=0 // pred_check
    _
  $region51: #{_lambda_.1} parent=0 // pred_check_branch
    %45 = sbr.rel (0) target = $region53
  $region52: #{_lambda_.1} parent=0 // pred_region
    _
  $region53: #{_lambda_.1} parent=0 // pred_fallthru
    _
  %p48 = scmp.lt.u32.totalorder 1568, 8
  %p49 = pneg %p48
  // Predicated region
  $region54: #{_lambda_.1} parent=0 // pred_check
    _
  $region55: #{_lambda_.1} parent=0 // pred_check_branch
    %51 = sbr.rel (%p48) target = $region57
  $region56: #{_lambda_.1} parent=0 // pred_region
    %s67 = sand.u32 1568, 7
    %p68 = scmp.eq.s32.totalorder %s67, 0
    // Predicated region
    $region69: #{_lambda_.1} parent=56 // pred_check
      %p69 = pneg %p68
    $region70: #{_lambda_.1} parent=56 // pred_check_branch
      %71 = sbr.rel (%p69) target = $region72
    $region71: #{_lambda_.1} parent=56 // pred_region
      loop: start=0, step=1, limit=1
      $region73: #{_lambda_.1} parent=71 // loop_pre_header
        _
      $region74: #{_lambda_.1} parent=71 // loop_header
        %s73 = sphi 0, %s77
        %p74 = scmp.ge.s32.totalorder %s73, 1
        %s78 = sphi %s13, %s13
        %s79 = sphi [#allocation6], [#allocation6]
      $region75: #{_lambda_.1} parent=71 // loop_header_branch
        %76 = sbr.rel (%p74) target = $region79
      $region76: #{_lambda_.1} parent=71 // loop_body
        %v80 = vld [vmem:[%s78] sm:$0xff]
        %81 = vst [vmem:[%s79] sm:$0xff] %v80
        %v82 = vld [vmem:[%s78 + $0x8] sm:$0xff]
        %83 = vst [vmem:[%s79 + $0x8] sm:$0xff] %v82
        %v84 = vld [vmem:[%s78 + $0x10] sm:$0xff]
        %85 = vst [vmem:[%s79 + $0x10] sm:$0xff] %v84
        %v86 = vld [vmem:[%s78 + $0x18] sm:$0xff]
        %87 = vst [vmem:[%s79 + $0x18] sm:$0xff] %v86
        %v88 = vld [vmem:[%s78 + $0x20] sm:$0xff]
        %89 = vst [vmem:[%s79 + $0x20] sm:$0xff] %v88
        %v90 = vld [vmem:[%s78 + $0x28] sm:$0xff]
        %91 = vst [vmem:[%s79 + $0x28] sm:$0xff] %v90
        %v92 = vld [vmem:[%s78 + $0x30] sm:$0xff]
        %93 = vst [vmem:[%s79 + $0x30] sm:$0xff] %v92
        %v94 = vld [vmem:[%s78 + $0x38] sm:$0xff]
        %95 = vst [vmem:[%s79 + $0x38] sm:$0xff] %v94
        %v96 = vld [vmem:[%s78 + $0x40] sm:$0xff]
        %97 = vst [vmem:[%s79 + $0x40] sm:$0xff] %v96
        %v98 = vld [vmem:[%s78 + $0x48] sm:$0xff]
        %99 = vst [vmem:[%s79 + $0x48] sm:$0xff] %v98
        %v100 = vld [vmem:[%s78 + $0x50] sm:$0xff]
        %101 = vst [vmem:[%s79 + $0x50] sm:$0xff] %v100
        %v102 = vld [vmem:[%s78 + $0x58] sm:$0xff]
        %103 = vst [vmem:[%s79 + $0x58] sm:$0xff] %v102
        %v104 = vld [vmem:[%s78 + $0x60] sm:$0xff]
        %105 = vst [vmem:[%s79 + $0x60] sm:$0xff] %v104
        %v106 = vld [vmem:[%s78 + $0x68] sm:$0xff]
        %107 = vst [vmem:[%s79 + $0x68] sm:$0xff] %v106
        %v108 = vld [vmem:[%s78 + $0x70] sm:$0xff]
        %109 = vst [vmem:[%s79 + $0x70] sm:$0xff] %v108
        %v110 = vld [vmem:[%s78 + $0x78] sm:$0xff]
        %111 = vst [vmem:[%s79 + $0x78] sm:$0xff] %v110
        %v112 = vld [vmem:[%s78 + $0x80] sm:$0xff]
        %113 = vst [vmem:[%s79 + $0x80] sm:$0xff] %v112
        %v114 = vld [vmem:[%s78 + $0x88] sm:$0xff]
        %115 = vst [vmem:[%s79 + $0x88] sm:$0xff] %v114
        %v116 = vld [vmem:[%s78 + $0x90] sm:$0xff]
        %117 = vst [vmem:[%s79 + $0x90] sm:$0xff] %v116
        %v118 = vld [vmem:[%s78 + $0x98] sm:$0xff]
        %119 = vst [vmem:[%s79 + $0x98] sm:$0xff] %v118
        %v120 = vld [vmem:[%s78 + $0xa0] sm:$0xff]
        %121 = vst [vmem:[%s79 + $0xa0] sm:$0xff] %v120
        %v122 = vld [vmem:[%s78 + $0xa8] sm:$0xff]
        %123 = vst [vmem:[%s79 + $0xa8] sm:$0xff] %v122
        %v124 = vld [vmem:[%s78 + $0xb0] sm:$0xff]
        %125 = vst [vmem:[%s79 + $0xb0] sm:$0xff] %v124
        %v126 = vld [vmem:[%s78 + $0xb8] sm:$0xff]
        %127 = vst [vmem:[%s79 + $0xb8] sm:$0xff] %v126
        %v128 = vld [vmem:[%s78 + $0xc0] sm:$0xff]
        %129 = vst [vmem:[%s79 + $0xc0] sm:$0xff] %v128
        %v130 = vld [vmem:[%s78 + $0xc8] sm:$0xff]
        %131 = vst [vmem:[%s79 + $0xc8] sm:$0xff] %v130
        %v132 = vld [vmem:[%s78 + $0xd0] sm:$0xff]
        %133 = vst [vmem:[%s79 + $0xd0] sm:$0xff] %v132
        %v134 = vld [vmem:[%s78 + $0xd8] sm:$0xff]
        %135 = vst [vmem:[%s79 + $0xd8] sm:$0xff] %v134
        %v136 = vld [vmem:[%s78 + $0xe0] sm:$0xff]
        %137 = vst [vmem:[%s79 + $0xe0] sm:$0xff] %v136
        %v138 = vld [vmem:[%s78 + $0xe8] sm:$0xff]
        %139 = vst [vmem:[%s79 + $0xe8] sm:$0xff] %v138
        %v140 = vld [vmem:[%s78 + $0xf0] sm:$0xff]
        %141 = vst [vmem:[%s79 + $0xf0] sm:$0xff] %v140
        %v142 = vld [vmem:[%s78 + $0xf8] sm:$0xff]
        %143 = vst [vmem:[%s79 + $0xf8] sm:$0xff] %v142
        %v144 = vld [vmem:[%s78 + $0x100] sm:$0xff]
        %145 = vst [vmem:[%s79 + $0x100] sm:$0xff] %v144
        %v146 = vld [vmem:[%s78 + $0x108] sm:$0xff]
        %147 = vst [vmem:[%s79 + $0x108] sm:$0xff] %v146
        %v148 = vld [vmem:[%s78 + $0x110] sm:$0xff]
        %149 = vst [vmem:[%s79 + $0x110] sm:$0xff] %v148
        %v150 = vld [vmem:[%s78 + $0x118] sm:$0xff]
        %151 = vst [vmem:[%s79 + $0x118] sm:$0xff] %v150
        %v152 = vld [vmem:[%s78 + $0x120] sm:$0xff]
        %153 = vst [vmem:[%s79 + $0x120] sm:$0xff] %v152
        %v154 = vld [vmem:[%s78 + $0x128] sm:$0xff]
        %155 = vst [vmem:[%s79 + $0x128] sm:$0xff] %v154
        %v156 = vld [vmem:[%s78 + $0x130] sm:$0xff]
        %157 = vst [vmem:[%s79 + $0x130] sm:$0xff] %v156
        %v158 = vld [vmem:[%s78 + $0x138] sm:$0xff]
        %159 = vst [vmem:[%s79 + $0x138] sm:$0xff] %v158
        %v160 = vld [vmem:[%s78 + $0x140] sm:$0xff]
        %161 = vst [vmem:[%s79 + $0x140] sm:$0xff] %v160
        %v162 = vld [vmem:[%s78 + $0x148] sm:$0xff]
        %163 = vst [vmem:[%s79 + $0x148] sm:$0xff] %v162
        %v164 = vld [vmem:[%s78 + $0x150] sm:$0xff]
        %165 = vst [vmem:[%s79 + $0x150] sm:$0xff] %v164
        %v166 = vld [vmem:[%s78 + $0x158] sm:$0xff]
        %167 = vst [vmem:[%s79 + $0x158] sm:$0xff] %v166
        %v168 = vld [vmem:[%s78 + $0x160] sm:$0xff]
        %169 = vst [vmem:[%s79 + $0x160] sm:$0xff] %v168
        %v170 = vld [vmem:[%s78 + $0x168] sm:$0xff]
        %171 = vst [vmem:[%s79 + $0x168] sm:$0xff] %v170
        %v172 = vld [vmem:[%s78 + $0x170] sm:$0xff]
        %173 = vst [vmem:[%s79 + $0x170] sm:$0xff] %v172
        %v174 = vld [vmem:[%s78 + $0x178] sm:$0xff]
        %175 = vst [vmem:[%s79 + $0x178] sm:$0xff] %v174
        %v176 = vld [vmem:[%s78 + $0x180] sm:$0xff]
        %177 = vst [vmem:[%s79 + $0x180] sm:$0xff] %v176
        %v178 = vld [vmem:[%s78 + $0x188] sm:$0xff]
        %179 = vst [vmem:[%s79 + $0x188] sm:$0xff] %v178
        %v180 = vld [vmem:[%s78 + $0x190] sm:$0xff]
        %181 = vst [vmem:[%s79 + $0x190] sm:$0xff] %v180
        %v182 = vld [vmem:[%s78 + $0x198] sm:$0xff]
        %183 = vst [vmem:[%s79 + $0x198] sm:$0xff] %v182
        %v184 = vld [vmem:[%s78 + $0x1a0] sm:$0xff]
        %185 = vst [vmem:[%s79 + $0x1a0] sm:$0xff] %v184
        %v186 = vld [vmem:[%s78 + $0x1a8] sm:$0xff]
        %187 = vst [vmem:[%s79 + $0x1a8] sm:$0xff] %v186
        %v188 = vld [vmem:[%s78 + $0x1b0] sm:$0xff]
        %189 = vst [vmem:[%s79 + $0x1b0] sm:$0xff] %v188
        %v190 = vld [vmem:[%s78 + $0x1b8] sm:$0xff]
        %191 = vst [vmem:[%s79 + $0x1b8] sm:$0xff] %v190
        %v192 = vld [vmem:[%s78 + $0x1c0] sm:$0xff]
        %193 = vst [vmem:[%s79 + $0x1c0] sm:$0xff] %v192
        %v194 = vld [vmem:[%s78 + $0x1c8] sm:$0xff]
        %195 = vst [vmem:[%s79 + $0x1c8] sm:$0xff] %v194
        %v196 = vld [vmem:[%s78 + $0x1d0] sm:$0xff]
        %197 = vst [vmem:[%s79 + $0x1d0] sm:$0xff] %v196
        %v198 = vld [vmem:[%s78 + $0x1d8] sm:$0xff]
        %199 = vst [vmem:[%s79 + $0x1d8] sm:$0xff] %v198
        %v200 = vld [vmem:[%s78 + $0x1e0] sm:$0xff]
        %201 = vst [vmem:[%s79 + $0x1e0] sm:$0xff] %v200
        %v202 = vld [vmem:[%s78 + $0x1e8] sm:$0xff]
        %203 = vst [vmem:[%s79 + $0x1e8] sm:$0xff] %v202
        %v204 = vld [vmem:[%s78 + $0x1f0] sm:$0xff]
        %205 = vst [vmem:[%s79 + $0x1f0] sm:$0xff] %v204
        %v206 = vld [vmem:[%s78 + $0x1f8] sm:$0xff]
        %207 = vst [vmem:[%s79 + $0x1f8] sm:$0xff] %v206
        %v208 = vld [vmem:[%s78 + $0x200] sm:$0xff]
        %209 = vst [vmem:[%s79 + $0x200] sm:$0xff] %v208
        %v210 = vld [vmem:[%s78 + $0x208] sm:$0xff]
        %211 = vst [vmem:[%s79 + $0x208] sm:$0xff] %v210
        %v212 = vld [vmem:[%s78 + $0x210] sm:$0xff]
        %213 = vst [vmem:[%s79 + $0x210] sm:$0xff] %v212
        %v214 = vld [vmem:[%s78 + $0x218] sm:$0xff]
        %215 = vst [vmem:[%s79 + $0x218] sm:$0xff] %v214
        %v216 = vld [vmem:[%s78 + $0x220] sm:$0xff]
        %217 = vst [vmem:[%s79 + $0x220] sm:$0xff] %v216
        %v218 = vld [vmem:[%s78 + $0x228] sm:$0xff]
        %219 = vst [vmem:[%s79 + $0x228] sm:$0xff] %v218
        %v220 = vld [vmem:[%s78 + $0x230] sm:$0xff]
        %221 = vst [vmem:[%s79 + $0x230] sm:$0xff] %v220
        %v222 = vld [vmem:[%s78 + $0x238] sm:$0xff]
        %223 = vst [vmem:[%s79 + $0x238] sm:$0xff] %v222
        %v224 = vld [vmem:[%s78 + $0x240] sm:$0xff]
        %225 = vst [vmem:[%s79 + $0x240] sm:$0xff] %v224
        %v226 = vld [vmem:[%s78 + $0x248] sm:$0xff]
        %227 = vst [vmem:[%s79 + $0x248] sm:$0xff] %v226
        %v228 = vld [vmem:[%s78 + $0x250] sm:$0xff]
        %229 = vst [vmem:[%s79 + $0x250] sm:$0xff] %v228
        %v230 = vld [vmem:[%s78 + $0x258] sm:$0xff]
        %231 = vst [vmem:[%s79 + $0x258] sm:$0xff] %v230
        %v232 = vld [vmem:[%s78 + $0x260] sm:$0xff]
        %233 = vst [vmem:[%s79 + $0x260] sm:$0xff] %v232
        %v234 = vld [vmem:[%s78 + $0x268] sm:$0xff]
        %235 = vst [vmem:[%s79 + $0x268] sm:$0xff] %v234
        %v236 = vld [vmem:[%s78 + $0x270] sm:$0xff]
        %237 = vst [vmem:[%s79 + $0x270] sm:$0xff] %v236
        %v238 = vld [vmem:[%s78 + $0x278] sm:$0xff]
        %239 = vst [vmem:[%s79 + $0x278] sm:$0xff] %v238
        %v240 = vld [vmem:[%s78 + $0x280] sm:$0xff]
        %241 = vst [vmem:[%s79 + $0x280] sm:$0xff] %v240
        %v242 = vld [vmem:[%s78 + $0x288] sm:$0xff]
        %243 = vst [vmem:[%s79 + $0x288] sm:$0xff] %v242
        %v244 = vld [vmem:[%s78 + $0x290] sm:$0xff]
        %245 = vst [vmem:[%s79 + $0x290] sm:$0xff] %v244
        %v246 = vld [vmem:[%s78 + $0x298] sm:$0xff]
        %247 = vst [vmem:[%s79 + $0x298] sm:$0xff] %v246
        %v248 = vld [vmem:[%s78 + $0x2a0] sm:$0xff]
        %249 = vst [vmem:[%s79 + $0x2a0] sm:$0xff] %v248
        %v250 = vld [vmem:[%s78 + $0x2a8] sm:$0xff]
        %251 = vst [vmem:[%s79 + $0x2a8] sm:$0xff] %v250
        %v252 = vld [vmem:[%s78 + $0x2b0] sm:$0xff]
        %253 = vst [vmem:[%s79 + $0x2b0] sm:$0xff] %v252
        %v254 = vld [vmem:[%s78 + $0x2b8] sm:$0xff]
        %255 = vst [vmem:[%s79 + $0x2b8] sm:$0xff] %v254
        %v256 = vld [vmem:[%s78 + $0x2c0] sm:$0xff]
        %257 = vst [vmem:[%s79 + $0x2c0] sm:$0xff] %v256
        %v258 = vld [vmem:[%s78 + $0x2c8] sm:$0xff]
        %259 = vst [vmem:[%s79 + $0x2c8] sm:$0xff] %v258
        %v260 = vld [vmem:[%s78 + $0x2d0] sm:$0xff]
        %261 = vst [vmem:[%s79 + $0x2d0] sm:$0xff] %v260
        %v262 = vld [vmem:[%s78 + $0x2d8] sm:$0xff]
        %263 = vst [vmem:[%s79 + $0x2d8] sm:$0xff] %v262
        %v264 = vld [vmem:[%s78 + $0x2e0] sm:$0xff]
        %265 = vst [vmem:[%s79 + $0x2e0] sm:$0xff] %v264
        %v266 = vld [vmem:[%s78 + $0x2e8] sm:$0xff]
        %267 = vst [vmem:[%s79 + $0x2e8] sm:$0xff] %v266
        %v268 = vld [vmem:[%s78 + $0x2f0] sm:$0xff]
        %269 = vst [vmem:[%s79 + $0x2f0] sm:$0xff] %v268
        %v270 = vld [vmem:[%s78 + $0x2f8] sm:$0xff]
        %271 = vst [vmem:[%s79 + $0x2f8] sm:$0xff] %v270
        %v272 = vld [vmem:[%s78 + $0x300] sm:$0xff]
        %273 = vst [vmem:[%s79 + $0x300] sm:$0xff] %v272
        %v274 = vld [vmem:[%s78 + $0x308] sm:$0xff]
        %275 = vst [vmem:[%s79 + $0x308] sm:$0xff] %v274
        %v276 = vld [vmem:[%s78 + $0x310] sm:$0xff]
        %277 = vst [vmem:[%s79 + $0x310] sm:$0xff] %v276
        %v278 = vld [vmem:[%s78 + $0x318] sm:$0xff]
        %279 = vst [vmem:[%s79 + $0x318] sm:$0xff] %v278
        %v280 = vld [vmem:[%s78 + $0x320] sm:$0xff]
        %281 = vst [vmem:[%s79 + $0x320] sm:$0xff] %v280
        %v282 = vld [vmem:[%s78 + $0x328] sm:$0xff]
        %283 = vst [vmem:[%s79 + $0x328] sm:$0xff] %v282
        %v284 = vld [vmem:[%s78 + $0x330] sm:$0xff]
        %285 = vst [vmem:[%s79 + $0x330] sm:$0xff] %v284
        %v286 = vld [vmem:[%s78 + $0x338] sm:$0xff]
        %287 = vst [vmem:[%s79 + $0x338] sm:$0xff] %v286
        %v288 = vld [vmem:[%s78 + $0x340] sm:$0xff]
        %289 = vst [vmem:[%s79 + $0x340] sm:$0xff] %v288
        %v290 = vld [vmem:[%s78 + $0x348] sm:$0xff]
        %291 = vst [vmem:[%s79 + $0x348] sm:$0xff] %v290
        %v292 = vld [vmem:[%s78 + $0x350] sm:$0xff]
        %293 = vst [vmem:[%s79 + $0x350] sm:$0xff] %v292
        %v294 = vld [vmem:[%s78 + $0x358] sm:$0xff]
        %295 = vst [vmem:[%s79 + $0x358] sm:$0xff] %v294
        %v296 = vld [vmem:[%s78 + $0x360] sm:$0xff]
        %297 = vst [vmem:[%s79 + $0x360] sm:$0xff] %v296
        %v298 = vld [vmem:[%s78 + $0x368] sm:$0xff]
        %299 = vst [vmem:[%s79 + $0x368] sm:$0xff] %v298
        %v300 = vld [vmem:[%s78 + $0x370] sm:$0xff]
        %301 = vst [vmem:[%s79 + $0x370] sm:$0xff] %v300
        %v302 = vld [vmem:[%s78 + $0x378] sm:$0xff]
        %303 = vst [vmem:[%s79 + $0x378] sm:$0xff] %v302
        %v304 = vld [vmem:[%s78 + $0x380] sm:$0xff]
        %305 = vst [vmem:[%s79 + $0x380] sm:$0xff] %v304
        %v306 = vld [vmem:[%s78 + $0x388] sm:$0xff]
        %307 = vst [vmem:[%s79 + $0x388] sm:$0xff] %v306
        %v308 = vld [vmem:[%s78 + $0x390] sm:$0xff]
        %309 = vst [vmem:[%s79 + $0x390] sm:$0xff] %v308
        %v310 = vld [vmem:[%s78 + $0x398] sm:$0xff]
        %311 = vst [vmem:[%s79 + $0x398] sm:$0xff] %v310
        %v312 = vld [vmem:[%s78 + $0x3a0] sm:$0xff]
        %313 = vst [vmem:[%s79 + $0x3a0] sm:$0xff] %v312
        %v314 = vld [vmem:[%s78 + $0x3a8] sm:$0xff]
        %315 = vst [vmem:[%s79 + $0x3a8] sm:$0xff] %v314
        %v316 = vld [vmem:[%s78 + $0x3b0] sm:$0xff]
        %317 = vst [vmem:[%s79 + $0x3b0] sm:$0xff] %v316
        %v318 = vld [vmem:[%s78 + $0x3b8] sm:$0xff]
        %319 = vst [vmem:[%s79 + $0x3b8] sm:$0xff] %v318
        %v320 = vld [vmem:[%s78 + $0x3c0] sm:$0xff]
        %321 = vst [vmem:[%s79 + $0x3c0] sm:$0xff] %v320
        %v322 = vld [vmem:[%s78 + $0x3c8] sm:$0xff]
        %323 = vst [vmem:[%s79 + $0x3c8] sm:$0xff] %v322
        %v324 = vld [vmem:[%s78 + $0x3d0] sm:$0xff]
        %325 = vst [vmem:[%s79 + $0x3d0] sm:$0xff] %v324
        %v326 = vld [vmem:[%s78 + $0x3d8] sm:$0xff]
        %327 = vst [vmem:[%s79 + $0x3d8] sm:$0xff] %v326
        %v328 = vld [vmem:[%s78 + $0x3e0] sm:$0xff]
        %329 = vst [vmem:[%s79 + $0x3e0] sm:$0xff] %v328
        %v330 = vld [vmem:[%s78 + $0x3e8] sm:$0xff]
        %331 = vst [vmem:[%s79 + $0x3e8] sm:$0xff] %v330
        %v332 = vld [vmem:[%s78 + $0x3f0] sm:$0xff]
        %333 = vst [vmem:[%s79 + $0x3f0] sm:$0xff] %v332
        %v334 = vld [vmem:[%s78 + $0x3f8] sm:$0xff]
        %335 = vst [vmem:[%s79 + $0x3f8] sm:$0xff] %v334
        %v336 = vld [vmem:[%s78 + $0x400] sm:$0xff]
        %337 = vst [vmem:[%s79 + $0x400] sm:$0xff] %v336
        %v338 = vld [vmem:[%s78 + $0x408] sm:$0xff]
        %339 = vst [vmem:[%s79 + $0x408] sm:$0xff] %v338
        %v340 = vld [vmem:[%s78 + $0x410] sm:$0xff]
        %341 = vst [vmem:[%s79 + $0x410] sm:$0xff] %v340
        %v342 = vld [vmem:[%s78 + $0x418] sm:$0xff]
        %343 = vst [vmem:[%s79 + $0x418] sm:$0xff] %v342
        %v344 = vld [vmem:[%s78 + $0x420] sm:$0xff]
        %345 = vst [vmem:[%s79 + $0x420] sm:$0xff] %v344
        %v346 = vld [vmem:[%s78 + $0x428] sm:$0xff]
        %347 = vst [vmem:[%s79 + $0x428] sm:$0xff] %v346
        %v348 = vld [vmem:[%s78 + $0x430] sm:$0xff]
        %349 = vst [vmem:[%s79 + $0x430] sm:$0xff] %v348
        %v350 = vld [vmem:[%s78 + $0x438] sm:$0xff]
        %351 = vst [vmem:[%s79 + $0x438] sm:$0xff] %v350
        %v352 = vld [vmem:[%s78 + $0x440] sm:$0xff]
        %353 = vst [vmem:[%s79 + $0x440] sm:$0xff] %v352
        %v354 = vld [vmem:[%s78 + $0x448] sm:$0xff]
        %355 = vst [vmem:[%s79 + $0x448] sm:$0xff] %v354
        %v356 = vld [vmem:[%s78 + $0x450] sm:$0xff]
        %357 = vst [vmem:[%s79 + $0x450] sm:$0xff] %v356
        %v358 = vld [vmem:[%s78 + $0x458] sm:$0xff]
        %359 = vst [vmem:[%s79 + $0x458] sm:$0xff] %v358
        %v360 = vld [vmem:[%s78 + $0x460] sm:$0xff]
        %361 = vst [vmem:[%s79 + $0x460] sm:$0xff] %v360
        %v362 = vld [vmem:[%s78 + $0x468] sm:$0xff]
        %363 = vst [vmem:[%s79 + $0x468] sm:$0xff] %v362
        %v364 = vld [vmem:[%s78 + $0x470] sm:$0xff]
        %365 = vst [vmem:[%s79 + $0x470] sm:$0xff] %v364
        %v366 = vld [vmem:[%s78 + $0x478] sm:$0xff]
        %367 = vst [vmem:[%s79 + $0x478] sm:$0xff] %v366
        %v368 = vld [vmem:[%s78 + $0x480] sm:$0xff]
        %369 = vst [vmem:[%s79 + $0x480] sm:$0xff] %v368
        %v370 = vld [vmem:[%s78 + $0x488] sm:$0xff]
        %371 = vst [vmem:[%s79 + $0x488] sm:$0xff] %v370
        %v372 = vld [vmem:[%s78 + $0x490] sm:$0xff]
        %373 = vst [vmem:[%s79 + $0x490] sm:$0xff] %v372
        %v374 = vld [vmem:[%s78 + $0x498] sm:$0xff]
        %375 = vst [vmem:[%s79 + $0x498] sm:$0xff] %v374
        %v376 = vld [vmem:[%s78 + $0x4a0] sm:$0xff]
        %377 = vst [vmem:[%s79 + $0x4a0] sm:$0xff] %v376
        %v378 = vld [vmem:[%s78 + $0x4a8] sm:$0xff]
        %379 = vst [vmem:[%s79 + $0x4a8] sm:$0xff] %v378
        %v380 = vld [vmem:[%s78 + $0x4b0] sm:$0xff]
        %381 = vst [vmem:[%s79 + $0x4b0] sm:$0xff] %v380
        %v382 = vld [vmem:[%s78 + $0x4b8] sm:$0xff]
        %383 = vst [vmem:[%s79 + $0x4b8] sm:$0xff] %v382
        %v384 = vld [vmem:[%s78 + $0x4c0] sm:$0xff]
        %385 = vst [vmem:[%s79 + $0x4c0] sm:$0xff] %v384
        %v386 = vld [vmem:[%s78 + $0x4c8] sm:$0xff]
        %387 = vst [vmem:[%s79 + $0x4c8] sm:$0xff] %v386
        %v388 = vld [vmem:[%s78 + $0x4d0] sm:$0xff]
        %389 = vst [vmem:[%s79 + $0x4d0] sm:$0xff] %v388
        %v390 = vld [vmem:[%s78 + $0x4d8] sm:$0xff]
        %391 = vst [vmem:[%s79 + $0x4d8] sm:$0xff] %v390
        %v392 = vld [vmem:[%s78 + $0x4e0] sm:$0xff]
        %393 = vst [vmem:[%s79 + $0x4e0] sm:$0xff] %v392
        %v394 = vld [vmem:[%s78 + $0x4e8] sm:$0xff]
        %395 = vst [vmem:[%s79 + $0x4e8] sm:$0xff] %v394
        %v396 = vld [vmem:[%s78 + $0x4f0] sm:$0xff]
        %397 = vst [vmem:[%s79 + $0x4f0] sm:$0xff] %v396
        %v398 = vld [vmem:[%s78 + $0x4f8] sm:$0xff]
        %399 = vst [vmem:[%s79 + $0x4f8] sm:$0xff] %v398
        %v400 = vld [vmem:[%s78 + $0x500] sm:$0xff]
        %401 = vst [vmem:[%s79 + $0x500] sm:$0xff] %v400
        %v402 = vld [vmem:[%s78 + $0x508] sm:$0xff]
        %403 = vst [vmem:[%s79 + $0x508] sm:$0xff] %v402
        %v404 = vld [vmem:[%s78 + $0x510] sm:$0xff]
        %405 = vst [vmem:[%s79 + $0x510] sm:$0xff] %v404
        %v406 = vld [vmem:[%s78 + $0x518] sm:$0xff]
        %407 = vst [vmem:[%s79 + $0x518] sm:$0xff] %v406
        %v408 = vld [vmem:[%s78 + $0x520] sm:$0xff]
        %409 = vst [vmem:[%s79 + $0x520] sm:$0xff] %v408
        %v410 = vld [vmem:[%s78 + $0x528] sm:$0xff]
        %411 = vst [vmem:[%s79 + $0x528] sm:$0xff] %v410
        %v412 = vld [vmem:[%s78 + $0x530] sm:$0xff]
        %413 = vst [vmem:[%s79 + $0x530] sm:$0xff] %v412
        %v414 = vld [vmem:[%s78 + $0x538] sm:$0xff]
        %415 = vst [vmem:[%s79 + $0x538] sm:$0xff] %v414
        %v416 = vld [vmem:[%s78 + $0x540] sm:$0xff]
        %417 = vst [vmem:[%s79 + $0x540] sm:$0xff] %v416
        %v418 = vld [vmem:[%s78 + $0x548] sm:$0xff]
        %419 = vst [vmem:[%s79 + $0x548] sm:$0xff] %v418
        %v420 = vld [vmem:[%s78 + $0x550] sm:$0xff]
        %421 = vst [vmem:[%s79 + $0x550] sm:$0xff] %v420
        %v422 = vld [vmem:[%s78 + $0x558] sm:$0xff]
        %423 = vst [vmem:[%s79 + $0x558] sm:$0xff] %v422
        %v424 = vld [vmem:[%s78 + $0x560] sm:$0xff]
        %425 = vst [vmem:[%s79 + $0x560] sm:$0xff] %v424
        %v426 = vld [vmem:[%s78 + $0x568] sm:$0xff]
        %427 = vst [vmem:[%s79 + $0x568] sm:$0xff] %v426
        %v428 = vld [vmem:[%s78 + $0x570] sm:$0xff]
        %429 = vst [vmem:[%s79 + $0x570] sm:$0xff] %v428
        %v430 = vld [vmem:[%s78 + $0x578] sm:$0xff]
        %431 = vst [vmem:[%s79 + $0x578] sm:$0xff] %v430
        %v432 = vld [vmem:[%s78 + $0x580] sm:$0xff]
        %433 = vst [vmem:[%s79 + $0x580] sm:$0xff] %v432
        %v434 = vld [vmem:[%s78 + $0x588] sm:$0xff]
        %435 = vst [vmem:[%s79 + $0x588] sm:$0xff] %v434
        %v436 = vld [vmem:[%s78 + $0x590] sm:$0xff]
        %437 = vst [vmem:[%s79 + $0x590] sm:$0xff] %v436
        %v438 = vld [vmem:[%s78 + $0x598] sm:$0xff]
        %439 = vst [vmem:[%s79 + $0x598] sm:$0xff] %v438
        %v440 = vld [vmem:[%s78 + $0x5a0] sm:$0xff]
        %441 = vst [vmem:[%s79 + $0x5a0] sm:$0xff] %v440
        %v442 = vld [vmem:[%s78 + $0x5a8] sm:$0xff]
        %443 = vst [vmem:[%s79 + $0x5a8] sm:$0xff] %v442
        %v444 = vld [vmem:[%s78 + $0x5b0] sm:$0xff]
        %445 = vst [vmem:[%s79 + $0x5b0] sm:$0xff] %v444
        %v446 = vld [vmem:[%s78 + $0x5b8] sm:$0xff]
        %447 = vst [vmem:[%s79 + $0x5b8] sm:$0xff] %v446
        %v448 = vld [vmem:[%s78 + $0x5c0] sm:$0xff]
        %449 = vst [vmem:[%s79 + $0x5c0] sm:$0xff] %v448
        %v450 = vld [vmem:[%s78 + $0x5c8] sm:$0xff]
        %451 = vst [vmem:[%s79 + $0x5c8] sm:$0xff] %v450
        %v452 = vld [vmem:[%s78 + $0x5d0] sm:$0xff]
        %453 = vst [vmem:[%s79 + $0x5d0] sm:$0xff] %v452
        %v454 = vld [vmem:[%s78 + $0x5d8] sm:$0xff]
        %455 = vst [vmem:[%s79 + $0x5d8] sm:$0xff] %v454
        %v456 = vld [vmem:[%s78 + $0x5e0] sm:$0xff]
        %457 = vst [vmem:[%s79 + $0x5e0] sm:$0xff] %v456
        %v458 = vld [vmem:[%s78 + $0x5e8] sm:$0xff]
        %459 = vst [vmem:[%s79 + $0x5e8] sm:$0xff] %v458
        %v460 = vld [vmem:[%s78 + $0x5f0] sm:$0xff]
        %461 = vst [vmem:[%s79 + $0x5f0] sm:$0xff] %v460
        %v462 = vld [vmem:[%s78 + $0x5f8] sm:$0xff]
        %463 = vst [vmem:[%s79 + $0x5f8] sm:$0xff] %v462
        %v464 = vld [vmem:[%s78 + $0x600] sm:$0xff]
        %465 = vst [vmem:[%s79 + $0x600] sm:$0xff] %v464
        %v466 = vld [vmem:[%s78 + $0x608] sm:$0xff]
        %467 = vst [vmem:[%s79 + $0x608] sm:$0xff] %v466
        %v468 = vld [vmem:[%s78 + $0x610] sm:$0xff]
        %469 = vst [vmem:[%s79 + $0x610] sm:$0xff] %v468
        %v470 = vld [vmem:[%s78 + $0x618] sm:$0xff]
        %471 = vst [vmem:[%s79 + $0x618] sm:$0xff] %v470
      $region77: #{_lambda_.1} parent=71 // loop_footer
        %s77 = sadd.s32 1, %s73
      $region78: #{_lambda_.1} parent=71 // loop_footer_branch
        %72 = sbr.rel target = $region74
      $region79: #{_lambda_.1} parent=71 // loop_exit
        _
    $region72: #{_lambda_.1} parent=56 // pred_fallthru
      _
    %p472 = pneg %p68
    // Predicated region
    $region80: #{_lambda_.1} parent=56 // pred_check
      _
    $region81: #{_lambda_.1} parent=56 // pred_check_branch
      %474 = sbr.rel (%p68) target = $region83
    $region82: #{_lambda_.1} parent=56 // pred_region
      %s475 = sand.u32 1568, 7
    $region83: #{_lambda_.1} parent=56 // pred_fallthru
      _
  $region57: #{_lambda_.1} parent=0 // pred_fallthru
    _
  // Predicated region
  $region58: #{_lambda_.1} parent=0 // pred_check
    %p52 = pneg %p48
  $region59: #{_lambda_.1} parent=0 // pred_check_branch
    %54 = sbr.rel (%p52) target = $region61
  $region60: #{_lambda_.1} parent=0 // pred_region
    %s55 = sshll.u32 1, 1568
    %s56 = ssub.s32 %s55, 1
    loop: start=0, step=1, limit=1
    $region62: #{_lambda_.1} parent=60 // loop_pre_header
      _
    $region63: #{_lambda_.1} parent=60 // loop_header
      %s58 = sphi 0, %s62
      %p59 = scmp.ge.s32.totalorder %s58, 1
      %s63 = sphi %s13, %s13
      %s64 = sphi [#allocation6], [#allocation6]
    $region64: #{_lambda_.1} parent=60 // loop_header_branch
      %61 = sbr.rel (%p59) target = $region68
    $region65: #{_lambda_.1} parent=60 // loop_body
      %v65 = vld [vmem:[%s63] sm:%s56]
      %66 = vst [vmem:[%s64] sm:%s56] %v65
    $region66: #{_lambda_.1} parent=60 // loop_footer
      %s62 = sadd.s32 1, %s58
    $region67: #{_lambda_.1} parent=60 // loop_footer_branch
      %57 = sbr.rel target = $region63
    $region68: #{_lambda_.1} parent=60 // loop_exit
      _
  $region61: #{_lambda_.1} parent=0 // pred_fallthru
    _
  // Predicated region
  $region84: #{_lambda_.1} parent=0 // pred_check
    _
  $region85: #{_lambda_.1} parent=0 // pred_check_branch
    %478 = sbr.rel (0) target = $region87
  $region86: #{_lambda_.1} parent=0 // pred_region
    %479 = vsyncadd [#allocation8], 25088
  $region87: #{_lambda_.1} parent=0 // pred_fallthru
    _
  %s480 = scalar_lea.sflag [#allocation8], 1
  %p482 = scmp.lt.u32.totalorder 224, 8
  %p483 = pneg %p482
  // Predicated region
  $region88: #{_lambda_.1} parent=0 // pred_check
    _
  $region89: #{_lambda_.1} parent=0 // pred_check_branch
    %485 = sbr.rel (%p482) target = $region91
  $region90: #{_lambda_.1} parent=0 // pred_region
    %s501 = sand.u32 224, 7
    %p502 = scmp.eq.s32.totalorder %s501, 0
    // Predicated region
    $region103: #{_lambda_.1} parent=90 // pred_check
      %p503 = pneg %p502
    $region104: #{_lambda_.1} parent=90 // pred_check_branch
      %505 = sbr.rel (%p503) target = $region106
    $region105: #{_lambda_.1} parent=90 // pred_region
      loop: start=0, step=1, limit=1
      $region107: #{_lambda_.1} parent=105 // loop_pre_header
        _
      $region108: #{_lambda_.1} parent=105 // loop_header
        %s507 = sphi 0, %s511
        %p508 = scmp.ge.s32.totalorder %s507, 1
        %s512 = sphi %s14, %s14
        %s513 = sphi [#allocation7], [#allocation7]
      $region109: #{_lambda_.1} parent=105 // loop_header_branch
        %510 = sbr.rel (%p508) target = $region113
      $region110: #{_lambda_.1} parent=105 // loop_body
        %v514 = vld [vmem:[%s512] sm:$0xff]
        %515 = vst [vmem:[%s513] sm:$0xff] %v514
        %v516 = vld [vmem:[%s512 + $0x8] sm:$0xff]
        %517 = vst [vmem:[%s513 + $0x8] sm:$0xff] %v516
        %v518 = vld [vmem:[%s512 + $0x10] sm:$0xff]
        %519 = vst [vmem:[%s513 + $0x10] sm:$0xff] %v518
        %v520 = vld [vmem:[%s512 + $0x18] sm:$0xff]
        %521 = vst [vmem:[%s513 + $0x18] sm:$0xff] %v520
        %v522 = vld [vmem:[%s512 + $0x20] sm:$0xff]
        %523 = vst [vmem:[%s513 + $0x20] sm:$0xff] %v522
        %v524 = vld [vmem:[%s512 + $0x28] sm:$0xff]
        %525 = vst [vmem:[%s513 + $0x28] sm:$0xff] %v524
        %v526 = vld [vmem:[%s512 + $0x30] sm:$0xff]
        %527 = vst [vmem:[%s513 + $0x30] sm:$0xff] %v526
        %v528 = vld [vmem:[%s512 + $0x38] sm:$0xff]
        %529 = vst [vmem:[%s513 + $0x38] sm:$0xff] %v528
        %v530 = vld [vmem:[%s512 + $0x40] sm:$0xff]
        %531 = vst [vmem:[%s513 + $0x40] sm:$0xff] %v530
        %v532 = vld [vmem:[%s512 + $0x48] sm:$0xff]
        %533 = vst [vmem:[%s513 + $0x48] sm:$0xff] %v532
        %v534 = vld [vmem:[%s512 + $0x50] sm:$0xff]
        %535 = vst [vmem:[%s513 + $0x50] sm:$0xff] %v534
        %v536 = vld [vmem:[%s512 + $0x58] sm:$0xff]
        %537 = vst [vmem:[%s513 + $0x58] sm:$0xff] %v536
        %v538 = vld [vmem:[%s512 + $0x60] sm:$0xff]
        %539 = vst [vmem:[%s513 + $0x60] sm:$0xff] %v538
        %v540 = vld [vmem:[%s512 + $0x68] sm:$0xff]
        %541 = vst [vmem:[%s513 + $0x68] sm:$0xff] %v540
        %v542 = vld [vmem:[%s512 + $0x70] sm:$0xff]
        %543 = vst [vmem:[%s513 + $0x70] sm:$0xff] %v542
        %v544 = vld [vmem:[%s512 + $0x78] sm:$0xff]
        %545 = vst [vmem:[%s513 + $0x78] sm:$0xff] %v544
        %v546 = vld [vmem:[%s512 + $0x80] sm:$0xff]
        %547 = vst [vmem:[%s513 + $0x80] sm:$0xff] %v546
        %v548 = vld [vmem:[%s512 + $0x88] sm:$0xff]
        %549 = vst [vmem:[%s513 + $0x88] sm:$0xff] %v548
        %v550 = vld [vmem:[%s512 + $0x90] sm:$0xff]
        %551 = vst [vmem:[%s513 + $0x90] sm:$0xff] %v550
        %v552 = vld [vmem:[%s512 + $0x98] sm:$0xff]
        %553 = vst [vmem:[%s513 + $0x98] sm:$0xff] %v552
        %v554 = vld [vmem:[%s512 + $0xa0] sm:$0xff]
        %555 = vst [vmem:[%s513 + $0xa0] sm:$0xff] %v554
        %v556 = vld [vmem:[%s512 + $0xa8] sm:$0xff]
        %557 = vst [vmem:[%s513 + $0xa8] sm:$0xff] %v556
        %v558 = vld [vmem:[%s512 + $0xb0] sm:$0xff]
        %559 = vst [vmem:[%s513 + $0xb0] sm:$0xff] %v558
        %v560 = vld [vmem:[%s512 + $0xb8] sm:$0xff]
        %561 = vst [vmem:[%s513 + $0xb8] sm:$0xff] %v560
        %v562 = vld [vmem:[%s512 + $0xc0] sm:$0xff]
        %563 = vst [vmem:[%s513 + $0xc0] sm:$0xff] %v562
        %v564 = vld [vmem:[%s512 + $0xc8] sm:$0xff]
        %565 = vst [vmem:[%s513 + $0xc8] sm:$0xff] %v564
        %v566 = vld [vmem:[%s512 + $0xd0] sm:$0xff]
        %567 = vst [vmem:[%s513 + $0xd0] sm:$0xff] %v566
        %v568 = vld [vmem:[%s512 + $0xd8] sm:$0xff]
        %569 = vst [vmem:[%s513 + $0xd8] sm:$0xff] %v568
      $region111: #{_lambda_.1} parent=105 // loop_footer
        %s511 = sadd.s32 1, %s507
      $region112: #{_lambda_.1} parent=105 // loop_footer_branch
        %506 = sbr.rel target = $region108
      $region113: #{_lambda_.1} parent=105 // loop_exit
        _
    $region106: #{_lambda_.1} parent=90 // pred_fallthru
      _
    %p570 = pneg %p502
    // Predicated region
    $region114: #{_lambda_.1} parent=90 // pred_check
      _
    $region115: #{_lambda_.1} parent=90 // pred_check_branch
      %572 = sbr.rel (%p502) target = $region117
    $region116: #{_lambda_.1} parent=90 // pred_region
      %s573 = sand.u32 224, 7
    $region117: #{_lambda_.1} parent=90 // pred_fallthru
      _
  $region91: #{_lambda_.1} parent=0 // pred_fallthru
    _
  // Predicated region
  $region92: #{_lambda_.1} parent=0 // pred_check
    %p486 = pneg %p482
  $region93: #{_lambda_.1} parent=0 // pred_check_branch
    %488 = sbr.rel (%p486) target = $region95
  $region94: #{_lambda_.1} parent=0 // pred_region
    %s489 = sshll.u32 1, 224
    %s490 = ssub.s32 %s489, 1
    loop: start=0, step=1, limit=1
    $region96: #{_lambda_.1} parent=94 // loop_pre_header
      _
    $region97: #{_lambda_.1} parent=94 // loop_header
      %s492 = sphi 0, %s496
      %p493 = scmp.ge.s32.totalorder %s492, 1
      %s497 = sphi %s14, %s14
      %s498 = sphi [#allocation7], [#allocation7]
    $region98: #{_lambda_.1} parent=94 // loop_header_branch
      %495 = sbr.rel (%p493) target = $region102
    $region99: #{_lambda_.1} parent=94 // loop_body
      %v499 = vld [vmem:[%s497] sm:%s490]
      %500 = vst [vmem:[%s498] sm:%s490] %v499
    $region100: #{_lambda_.1} parent=94 // loop_footer
      %s496 = sadd.s32 1, %s492
    $region101: #{_lambda_.1} parent=94 // loop_footer_branch
      %491 = sbr.rel target = $region97
    $region102: #{_lambda_.1} parent=94 // loop_exit
      _
  $region95: #{_lambda_.1} parent=0 // pred_fallthru
    _
  // Predicated region
  $region118: #{_lambda_.1} parent=0 // pred_check
    _
  $region119: #{_lambda_.1} parent=0 // pred_check_branch
    %576 = sbr.rel (0) target = $region121
  $region120: #{_lambda_.1} parent=0 // pred_region
    %577 = vsyncadd %s480, 3584
  $region121: #{_lambda_.1} parent=0 // pred_fallthru
    _
  %v578 = vld [vmem:[%s0] sm:$0xff]
  %v579 = vld [vmem:[%s0 + $0x8] sm:$0xff]
  %v580 = vld [vmem:[%s0 + $0x10] sm:$0xff]
  %v581 = vld [vmem:[%s0 + $0x18] sm:$0xff]
  %v582 = vld [vmem:[%s0 + $0x20] sm:$0xff]
  %v583 = vld [vmem:[%s0 + $0x28] sm:$0xff]
  %v584 = vld [vmem:[%s0 + $0x30] sm:$0xff]
  %v585 = vld [vmem:[%s0 + $0x38] sm:$0xff]
  %v586 = vld [vmem:[%s0 + $0x40] sm:$0xff]
  %v587 = vld [vmem:[%s0 + $0x48] sm:$0xff]
  %v588 = vld [vmem:[%s0 + $0x50] sm:$0xff]
  %v589 = vld [vmem:[%s0 + $0x58] sm:$0xff]
  %v590 = vld [vmem:[%s0 + $0x60] sm:$0xff]
  %v591 = vld [vmem:[%s0 + $0x68] sm:$0xff]
  %v592 = vld [vmem:[%s0 + $0x70] sm:$0xff]
  %v593 = vld [vmem:[%s0 + $0x78] sm:$0xff]
  %v594 = vld [vmem:[%s0 + $0x80] sm:$0xff]
  %v595 = vld [vmem:[%s0 + $0x88] sm:$0xff]
  %v596 = vld [vmem:[%s0 + $0x90] sm:$0xff]
  %v597 = vld [vmem:[%s0 + $0x98] sm:$0xff]
  %v598 = vld [vmem:[%s0 + $0xa0] sm:$0xff]
  %v599 = vld [vmem:[%s0 + $0xa8] sm:$0xff]
  %v600 = vld [vmem:[%s0 + $0xb0] sm:$0xff]
  %v601 = vld [vmem:[%s0 + $0xb8] sm:$0xff]
  %v602 = vld [vmem:[%s0 + $0xc0] sm:$0xff]
  %v603 = vld [vmem:[%s0 + $0xc8] sm:$0xff]
  %v604 = vld [vmem:[%s0 + $0xd0] sm:$0xff]
  %v605 = vld [vmem:[%s0 + $0xd8] sm:$0xff]
  %v606 = vld [vmem:[%s0 + $0xe0] sm:$0xff]
  %v607 = vld [vmem:[%s0 + $0xe8] sm:$0xff]
  %v608 = vld [vmem:[%s0 + $0xf0] sm:$0xff]
  %v609 = vld [vmem:[%s0 + $0xf8] sm:$0xff]
  %v610 = vld [vmem:[%s0 + $0x100] sm:$0xff]
  %v611 = vld [vmem:[%s0 + $0x108] sm:$0xff]
  %v612 = vld [vmem:[%s0 + $0x110] sm:$0xff]
  %v613 = vld [vmem:[%s0 + $0x118] sm:$0xff]
  %v614 = vld [vmem:[%s0 + $0x120] sm:$0xff]
  %v615 = vld [vmem:[%s0 + $0x128] sm:$0xff]
  %v616 = vld [vmem:[%s0 + $0x130] sm:$0xff]
  %v617 = vld [vmem:[%s0 + $0x138] sm:$0xff]
  %v618 = vld [vmem:[%s0 + $0x140] sm:$0xff]
  %v619 = vld [vmem:[%s0 + $0x148] sm:$0xff]
  %v620 = vld [vmem:[%s0 + $0x150] sm:$0xff]
  %v621 = vld [vmem:[%s0 + $0x158] sm:$0xff]
  %v622 = vld [vmem:[%s0 + $0x160] sm:$0xff]
  %v623 = vld [vmem:[%s0 + $0x168] sm:$0xff]
  %v624 = vld [vmem:[%s0 + $0x170] sm:$0xff]
  %v625 = vld [vmem:[%s0 + $0x178] sm:$0xff]
  %v626 = vld [vmem:[%s0 + $0x180] sm:$0xff]
  %v627 = vld [vmem:[%s0 + $0x188] sm:$0xff]
  %v628 = vld [vmem:[%s0 + $0x190] sm:$0xff]
  %v629 = vld [vmem:[%s0 + $0x198] sm:$0xff]
  %v630 = vld [vmem:[%s0 + $0x1a0] sm:$0xff]
  %v631 = vld [vmem:[%s0 + $0x1a8] sm:$0xff]
  %v632 = vld [vmem:[%s0 + $0x1b0] sm:$0xff]
  %v633 = vld [vmem:[%s0 + $0x1b8] sm:$0xff]
  %v634 = vld [vmem:[%s0 + $0x1c0] sm:$0xff]
  %v635 = vld [vmem:[%s0 + $0x1c8] sm:$0xff]
  %v636 = vld [vmem:[%s0 + $0x1d0] sm:$0xff]
  %v637 = vld [vmem:[%s0 + $0x1d8] sm:$0xff]
  %v638 = vld [vmem:[%s0 + $0x1e0] sm:$0xff]
  %v639 = vld [vmem:[%s0 + $0x1e8] sm:$0xff]
  %v640 = vld [vmem:[%s0 + $0x1f0] sm:$0xff]
  %v641 = vld [vmem:[%s0 + $0x1f8] sm:$0xff]
  %v642 = vld [vmem:[%s1] sm:$0xf]
  %v643 = vld [vmem:[%s1 + $0x4] sm:$0xf]
  %v644 = vld [vmem:[%s1 + $0x8] sm:$0xf]
  %v645 = vld [vmem:[%s1 + $0xc] sm:$0xf]
  %v646 = vld [vmem:[%s1 + $0x10] sm:$0xf]
  %v647 = vld [vmem:[%s1 + $0x14] sm:$0xf]
  %v648 = vld [vmem:[%s1 + $0x18] sm:$0xf]
  %v649 = vld [vmem:[%s1 + $0x1c] sm:$0xf]
  %v650 = vld [vmem:[%s1 + $0x20] sm:$0xf]
  %v651 = vld [vmem:[%s1 + $0x24] sm:$0xf]
  %v652 = vld [vmem:[%s1 + $0x28] sm:$0xf]
  %v653 = vld [vmem:[%s1 + $0x2c] sm:$0xf]
  %v654 = vld [vmem:[%s1 + $0x30] sm:$0xf]
  %v655 = vld [vmem:[%s1 + $0x34] sm:$0xf]
  %v656 = vld [vmem:[%s1 + $0x38] sm:$0xf]
  %v657 = vld [vmem:[%s1 + $0x3c] sm:$0xf]
  %v658 = vld [vmem:[%s1 + $0x40] sm:$0xf]
  %v659 = vld [vmem:[%s1 + $0x44] sm:$0xf]
  %v660 = vld [vmem:[%s1 + $0x48] sm:$0xf]
  %v661 = vld [vmem:[%s1 + $0x4c] sm:$0xf]
  %v662 = vld [vmem:[%s1 + $0x50] sm:$0xf]
  %v663 = vld [vmem:[%s1 + $0x54] sm:$0xf]
  %v664 = vld [vmem:[%s1 + $0x58] sm:$0xf]
  %v665 = vld [vmem:[%s1 + $0x5c] sm:$0xf]
  %v666 = vld [vmem:[%s1 + $0x60] sm:$0xf]
  %v667 = vld [vmem:[%s1 + $0x64] sm:$0xf]
  %v668 = vld [vmem:[%s1 + $0x68] sm:$0xf]
  %v669 = vld [vmem:[%s1 + $0x6c] sm:$0xf]
  %v670 = vld [vmem:[%s1 + $0x70] sm:$0xf]
  %v671 = vld [vmem:[%s1 + $0x74] sm:$0xf]
  %v672 = vld [vmem:[%s1 + $0x78] sm:$0xf]
  %v673 = vld [vmem:[%s1 + $0x7c] sm:$0xf]
  %v674 = vld [vmem:[%s2] sm:$0x1]
  %v676 = vlaneseq
  %v677 = vshrl.u32 %v676, 7
  %v678 = vsub.s32 0, %v677
  %v679 = vrot.slane %v674, %v678
  %v745 = vunpack.c.l.b16 %v578
  %v746 = vunpack.c.h.b16 %v578
  %v747 = vunpack.c.l.b16 %v579
  %v748 = vunpack.c.h.b16 %v579
  %v749 = vunpack.c.l.b16 %v580
  %v750 = vunpack.c.h.b16 %v580
  %v751 = vunpack.c.l.b16 %v581
  %v752 = vunpack.c.h.b16 %v581
  %v753 = vunpack.c.l.b16 %v582
  %v754 = vunpack.c.h.b16 %v582
  %v755 = vunpack.c.l.b16 %v583
  %v756 = vunpack.c.h.b16 %v583
  %v757 = vunpack.c.l.b16 %v584
  %v758 = vunpack.c.h.b16 %v584
  %v759 = vunpack.c.l.b16 %v585
  %v760 = vunpack.c.h.b16 %v585
  %v761 = vunpack.c.l.b16 %v586
  %v762 = vunpack.c.h.b16 %v586
  %v763 = vunpack.c.l.b16 %v587
  %v764 = vunpack.c.h.b16 %v587
  %v765 = vunpack.c.l.b16 %v588
  %v766 = vunpack.c.h.b16 %v588
  %v767 = vunpack.c.l.b16 %v589
  %v768 = vunpack.c.h.b16 %v589
  %v769 = vunpack.c.l.b16 %v590
  %v770 = vunpack.c.h.b16 %v590
  %v771 = vunpack.c.l.b16 %v591
  %v772 = vunpack.c.h.b16 %v591
  %v773 = vunpack.c.l.b16 %v592
  %v774 = vunpack.c.h.b16 %v592
  %v775 = vunpack.c.l.b16 %v593
  %v776 = vunpack.c.h.b16 %v593
  %v777 = vunpack.c.l.b16 %v594
  %v778 = vunpack.c.h.b16 %v594
  %v779 = vunpack.c.l.b16 %v595
  %v780 = vunpack.c.h.b16 %v595
  %v781 = vunpack.c.l.b16 %v596
  %v782 = vunpack.c.h.b16 %v596
  %v783 = vunpack.c.l.b16 %v597
  %v784 = vunpack.c.h.b16 %v597
  %v785 = vunpack.c.l.b16 %v598
  %v786 = vunpack.c.h.b16 %v598
  %v787 = vunpack.c.l.b16 %v599
  %v788 = vunpack.c.h.b16 %v599
  %v789 = vunpack.c.l.b16 %v600
  %v790 = vunpack.c.h.b16 %v600
  %v791 = vunpack.c.l.b16 %v601
  %v792 = vunpack.c.h.b16 %v601
  %v793 = vunpack.c.l.b16 %v602
  %v794 = vunpack.c.h.b16 %v602
  %v795 = vunpack.c.l.b16 %v603
  %v796 = vunpack.c.h.b16 %v603
  %v797 = vunpack.c.l.b16 %v604
  %v798 = vunpack.c.h.b16 %v604
  %v799 = vunpack.c.l.b16 %v605
  %v800 = vunpack.c.h.b16 %v605
  %v801 = vunpack.c.l.b16 %v606
  %v802 = vunpack.c.h.b16 %v606
  %v803 = vunpack.c.l.b16 %v607
  %v804 = vunpack.c.h.b16 %v607
  %v805 = vunpack.c.l.b16 %v608
  %v806 = vunpack.c.h.b16 %v608
  %v807 = vunpack.c.l.b16 %v609
  %v808 = vunpack.c.h.b16 %v609
  %v809 = vunpack.c.l.b16 %v610
  %v810 = vunpack.c.h.b16 %v610
  %v811 = vunpack.c.l.b16 %v611
  %v812 = vunpack.c.h.b16 %v611
  %v813 = vunpack.c.l.b16 %v612
  %v814 = vunpack.c.h.b16 %v612
  %v815 = vunpack.c.l.b16 %v613
  %v816 = vunpack.c.h.b16 %v613
  %v817 = vunpack.c.l.b16 %v614
  %v818 = vunpack.c.h.b16 %v614
  %v819 = vunpack.c.l.b16 %v615
  %v820 = vunpack.c.h.b16 %v615
  %v821 = vunpack.c.l.b16 %v616
  %v822 = vunpack.c.h.b16 %v616
  %v823 = vunpack.c.l.b16 %v617
  %v824 = vunpack.c.h.b16 %v617
  %v825 = vunpack.c.l.b16 %v618
  %v826 = vunpack.c.h.b16 %v618
  %v827 = vunpack.c.l.b16 %v619
  %v828 = vunpack.c.h.b16 %v619
  %v829 = vunpack.c.l.b16 %v620
  %v830 = vunpack.c.h.b16 %v620
  %v831 = vunpack.c.l.b16 %v621
  %v832 = vunpack.c.h.b16 %v621
  %v833 = vunpack.c.l.b16 %v622
  %v834 = vunpack.c.h.b16 %v622
  %v835 = vunpack.c.l.b16 %v623
  %v836 = vunpack.c.h.b16 %v623
  %v837 = vunpack.c.l.b16 %v624
  %v838 = vunpack.c.h.b16 %v624
  %v839 = vunpack.c.l.b16 %v625
  %v840 = vunpack.c.h.b16 %v625
  %v841 = vunpack.c.l.b16 %v626
  %v842 = vunpack.c.h.b16 %v626
  %v843 = vunpack.c.l.b16 %v627
  %v844 = vunpack.c.h.b16 %v627
  %v845 = vunpack.c.l.b16 %v628
  %v846 = vunpack.c.h.b16 %v628
  %v847 = vunpack.c.l.b16 %v629
  %v848 = vunpack.c.h.b16 %v629
  %v849 = vunpack.c.l.b16 %v630
  %v850 = vunpack.c.h.b16 %v630
  %v851 = vunpack.c.l.b16 %v631
  %v852 = vunpack.c.h.b16 %v631
  %v853 = vunpack.c.l.b16 %v632
  %v854 = vunpack.c.h.b16 %v632
  %v855 = vunpack.c.l.b16 %v633
  %v856 = vunpack.c.h.b16 %v633
  %v857 = vunpack.c.l.b16 %v634
  %v858 = vunpack.c.h.b16 %v634
  %v859 = vunpack.c.l.b16 %v635
  %v860 = vunpack.c.h.b16 %v635
  %v861 = vunpack.c.l.b16 %v636
  %v862 = vunpack.c.h.b16 %v636
  %v863 = vunpack.c.l.b16 %v637
  %v864 = vunpack.c.h.b16 %v637
  %v865 = vunpack.c.l.b16 %v638
  %v866 = vunpack.c.h.b16 %v638
  %v867 = vunpack.c.l.b16 %v639
  %v868 = vunpack.c.h.b16 %v639
  %v869 = vunpack.c.l.b16 %v640
  %v870 = vunpack.c.h.b16 %v640
  %v871 = vunpack.c.l.b16 %v641
  %v872 = vunpack.c.h.b16 %v641
  %v873 = vpack.c.b16 %v747, %v745
  %v874 = vpack.c.b16 %v748, %v746
  %v875 = vpack.c.b16 %v751, %v749
  %v876 = vpack.c.b16 %v752, %v750
  %v877 = vpack.c.b16 %v755, %v753
  %v878 = vpack.c.b16 %v756, %v754
  %v879 = vpack.c.b16 %v759, %v757
  %v880 = vpack.c.b16 %v760, %v758
  %v881 = vpack.c.b16 %v763, %v761
  %v882 = vpack.c.b16 %v764, %v762
  %v883 = vpack.c.b16 %v767, %v765
  %v884 = vpack.c.b16 %v768, %v766
  %v885 = vpack.c.b16 %v771, %v769
  %v886 = vpack.c.b16 %v772, %v770
  %v887 = vpack.c.b16 %v775, %v773
  %v888 = vpack.c.b16 %v776, %v774
  %v889 = vpack.c.b16 %v779, %v777
  %v890 = vpack.c.b16 %v780, %v778
  %v891 = vpack.c.b16 %v783, %v781
  %v892 = vpack.c.b16 %v784, %v782
  %v893 = vpack.c.b16 %v787, %v785
  %v894 = vpack.c.b16 %v788, %v786
  %v895 = vpack.c.b16 %v791, %v789
  %v896 = vpack.c.b16 %v792, %v790
  %v897 = vpack.c.b16 %v795, %v793
  %v898 = vpack.c.b16 %v796, %v794
  %v899 = vpack.c.b16 %v799, %v797
  %v900 = vpack.c.b16 %v800, %v798
  %v901 = vpack.c.b16 %v803, %v801
  %v902 = vpack.c.b16 %v804, %v802
  %v903 = vpack.c.b16 %v807, %v805
  %v904 = vpack.c.b16 %v808, %v806
  %v905 = vpack.c.b16 %v811, %v809
  %v906 = vpack.c.b16 %v812, %v810
  %v907 = vpack.c.b16 %v815, %v813
  %v908 = vpack.c.b16 %v816, %v814
  %v909 = vpack.c.b16 %v819, %v817
  %v910 = vpack.c.b16 %v820, %v818
  %v911 = vpack.c.b16 %v823, %v821
  %v912 = vpack.c.b16 %v824, %v822
  %v913 = vpack.c.b16 %v827, %v825
  %v914 = vpack.c.b16 %v828, %v826
  %v915 = vpack.c.b16 %v831, %v829
  %v916 = vpack.c.b16 %v832, %v830
  %v917 = vpack.c.b16 %v835, %v833
  %v918 = vpack.c.b16 %v836, %v834
  %v919 = vpack.c.b16 %v839, %v837
  %v920 = vpack.c.b16 %v840, %v838
  %v921 = vpack.c.b16 %v843, %v841
  %v922 = vpack.c.b16 %v844, %v842
  %v923 = vpack.c.b16 %v847, %v845
  %v924 = vpack.c.b16 %v848, %v846
  %v925 = vpack.c.b16 %v851, %v849
  %v926 = vpack.c.b16 %v852, %v850
  %v927 = vpack.c.b16 %v855, %v853
  %v928 = vpack.c.b16 %v856, %v854
  %v929 = vpack.c.b16 %v859, %v857
  %v930 = vpack.c.b16 %v860, %v858
  %v931 = vpack.c.b16 %v863, %v861
  %v932 = vpack.c.b16 %v864, %v862
  %v933 = vpack.c.b16 %v867, %v865
  %v934 = vpack.c.b16 %v868, %v866
  %v935 = vpack.c.b16 %v871, %v869
  %v936 = vpack.c.b16 %v872, %v870
  %v1033 = vunpack.c.l.b16 %v642
  %v1034 = vunpack.c.l.b16 %v643
  %v1035 = vunpack.c.l.b16 %v644
  %v1036 = vunpack.c.l.b16 %v645
  %v1037 = vunpack.c.l.b16 %v646
  %v1038 = vunpack.c.l.b16 %v647
  %v1039 = vunpack.c.l.b16 %v648
  %v1040 = vunpack.c.l.b16 %v649
  %v1041 = vunpack.c.l.b16 %v650
  %v1042 = vunpack.c.l.b16 %v651
  %v1043 = vunpack.c.l.b16 %v652
  %v1044 = vunpack.c.l.b16 %v653
  %v1045 = vunpack.c.l.b16 %v654
  %v1046 = vunpack.c.l.b16 %v655
  %v1047 = vunpack.c.l.b16 %v656
  %v1048 = vunpack.c.l.b16 %v657
  %v1049 = vunpack.c.l.b16 %v658
  %v1050 = vunpack.c.l.b16 %v659
  %v1051 = vunpack.c.l.b16 %v660
  %v1052 = vunpack.c.l.b16 %v661
  %v1053 = vunpack.c.l.b16 %v662
  %v1054 = vunpack.c.l.b16 %v663
  %v1055 = vunpack.c.l.b16 %v664
  %v1056 = vunpack.c.l.b16 %v665
  %v1057 = vunpack.c.l.b16 %v666
  %v1058 = vunpack.c.l.b16 %v667
  %v1059 = vunpack.c.l.b16 %v668
  %v1060 = vunpack.c.l.b16 %v669
  %v1061 = vunpack.c.l.b16 %v670
  %v1062 = vunpack.c.l.b16 %v671
  %v1063 = vunpack.c.l.b16 %v672
  %v1064 = vunpack.c.l.b16 %v673
  %v1065 = vpack.c.b16 %v1034, %v1033
  %v1066 = vpack.c.b16 %v1036, %v1035
  %v1067 = vpack.c.b16 %v1038, %v1037
  %v1068 = vpack.c.b16 %v1040, %v1039
  %v1069 = vpack.c.b16 %v1042, %v1041
  %v1070 = vpack.c.b16 %v1044, %v1043
  %v1071 = vpack.c.b16 %v1046, %v1045
  %v1072 = vpack.c.b16 %v1048, %v1047
  %v1073 = vpack.c.b16 %v1050, %v1049
  %v1074 = vpack.c.b16 %v1052, %v1051
  %v1075 = vpack.c.b16 %v1054, %v1053
  %v1076 = vpack.c.b16 %v1056, %v1055
  %v1077 = vpack.c.b16 %v1058, %v1057
  %v1078 = vpack.c.b16 %v1060, %v1059
  %v1079 = vpack.c.b16 %v1062, %v1061
  %v1080 = vpack.c.b16 %v1064, %v1063
  %1097 = vmatprep.subr.bf16.mxu0 0
  %1098 = vmatpush1.bf16.msra.mxu0 %v1072
  %1099 = vmatprep.subr.bf16.mxu0 0
  %1100 = vmatpush1.bf16.msra.mxu0 %v1071
  %1101 = vmatprep.subr.bf16.mxu0 0
  %1102 = vmatpush1.bf16.msra.mxu0 %v1070
  %1103 = vmatprep.subr.bf16.mxu0 0
  %1104 = vmatpush1.bf16.msra.mxu0 %v1069
  %1105 = vmatprep.subr.bf16.mxu0 0
  %1106 = vmatpush1.bf16.msra.mxu0 %v1068
  %1107 = vmatprep.subr.bf16.mxu0 0
  %1108 = vmatpush1.bf16.msra.mxu0 %v1067
  %1109 = vmatprep.subr.bf16.mxu0 0
  %1110 = vmatpush1.bf16.msra.mxu0 %v1066
  %1111 = vmatprep.subr.bf16.mxu0 0
  %1112 = vmatpush1.bf16.msra.mxu0 %v1065
  %1113 = vmatprep.subr.bf16.mxu0 0
  %1114 = vmatpush2.bf16.msra.mxu0 %v1080
  %1115 = vmatprep.subr.bf16.mxu0 0
  %1116 = vmatpush2.bf16.msra.mxu0 %v1079
  %1117 = vmatprep.subr.bf16.mxu0 0
  %1118 = vmatpush2.bf16.msra.mxu0 %v1078
  %1119 = vmatprep.subr.bf16.mxu0 0
  %1120 = vmatpush2.bf16.msra.mxu0 %v1077
  %1121 = vmatprep.subr.bf16.mxu0 0
  %1122 = vmatpush2.bf16.msra.mxu0 %v1076
  %1123 = vmatprep.subr.bf16.mxu0 0
  %1124 = vmatpush2.bf16.msra.mxu0 %v1075
  %1125 = vmatprep.subr.bf16.mxu0 0
  %1126 = vmatpush2.bf16.msra.mxu0 %v1074
  %1127 = vmatprep.subr.bf16.mxu0 0
  %1128 = vmatpush2.bf16.msra.mxu0 %v1073
  %1129 = vmatprep.mubr.bf16.mxu0 %v874
  %1130 = vmatmul.mubr.bf16.gmra.mxu0 %v873
  %v1131 = vpop.f32.mrf.mxu0
  %v1132 = vadd.f32 %v679, %v1131
  %v1133 = vpop.f32.mrf.mxu0
  %v1134 = vpop.f32.mrf.mxu0
  %v1135 = vadd.f32 %v679, %v1134
  %v1136 = vpop.f32.mrf.mxu0
  %1137 = vmatprep.mubr.bf16.mxu0 %v876
  %1138 = vmatmul.mubr.bf16.gmra.mxu0 %v875
  %v1139 = vpop.f32.mrf.mxu0
  %v1140 = vadd.f32 %v679, %v1139
  %v1141 = vpop.f32.mrf.mxu0
  %v1142 = vpop.f32.mrf.mxu0
  %v1143 = vadd.f32 %v679, %v1142
  %v1144 = vpop.f32.mrf.mxu0
  %1145 = vmatprep.mubr.bf16.mxu0 %v878
  %1146 = vmatmul.mubr.bf16.gmra.mxu0 %v877
  %v1147 = vpop.f32.mrf.mxu0
  %v1148 = vadd.f32 %v679, %v1147
  %v1149 = vpop.f32.mrf.mxu0
  %v1150 = vpop.f32.mrf.mxu0
  %v1151 = vadd.f32 %v679, %v1150
  %v1152 = vpop.f32.mrf.mxu0
  %1153 = vmatprep.mubr.bf16.mxu0 %v880
  %1154 = vmatmul.mubr.bf16.gmra.mxu0 %v879
  %v1155 = vpop.f32.mrf.mxu0
  %v1156 = vadd.f32 %v679, %v1155
  %v1157 = vpop.f32.mrf.mxu0
  %v1158 = vpop.f32.mrf.mxu0
  %v1159 = vadd.f32 %v679, %v1158
  %v1160 = vpop.f32.mrf.mxu0
  %1161 = vmatprep.mubr.bf16.mxu0 %v882
  %1162 = vmatmul.mubr.bf16.gmra.mxu0 %v881
  %v1163 = vpop.f32.mrf.mxu0
  %v1164 = vadd.f32 %v679, %v1163
  %v1165 = vpop.f32.mrf.mxu0
  %v1166 = vpop.f32.mrf.mxu0
  %v1167 = vadd.f32 %v679, %v1166
  %v1168 = vpop.f32.mrf.mxu0
  %1169 = vmatprep.mubr.bf16.mxu0 %v884
  %1170 = vmatmul.mubr.bf16.gmra.mxu0 %v883
  %v1171 = vpop.f32.mrf.mxu0
  %v1172 = vadd.f32 %v679, %v1171
  %v1173 = vpop.f32.mrf.mxu0
  %v1174 = vpop.f32.mrf.mxu0
  %v1175 = vadd.f32 %v679, %v1174
  %v1176 = vpop.f32.mrf.mxu0
  %1177 = vmatprep.mubr.bf16.mxu0 %v886
  %1178 = vmatmul.mubr.bf16.gmra.mxu0 %v885
  %v1179 = vpop.f32.mrf.mxu0
  %v1180 = vadd.f32 %v679, %v1179
  %v1181 = vpop.f32.mrf.mxu0
  %v1182 = vpop.f32.mrf.mxu0
  %v1183 = vadd.f32 %v679, %v1182
  %v1184 = vpop.f32.mrf.mxu0
  %1185 = vmatprep.mubr.bf16.mxu0 %v888
  %1186 = vmatmul.mubr.bf16.gmra.mxu0 %v887
  %v1187 = vpop.f32.mrf.mxu0
  %v1188 = vadd.f32 %v679, %v1187
  %v1189 = vpop.f32.mrf.mxu0
  %v1190 = vpop.f32.mrf.mxu0
  %v1191 = vadd.f32 %v679, %v1190
  %v1192 = vpop.f32.mrf.mxu0
  %1193 = vmatprep.mubr.bf16.mxu0 %v890
  %1194 = vmatmul.mubr.bf16.gmra.mxu0 %v889
  %v1195 = vpop.f32.mrf.mxu0
  %v1196 = vadd.f32 %v679, %v1195
  %v1197 = vpop.f32.mrf.mxu0
  %v1198 = vpop.f32.mrf.mxu0
  %v1199 = vadd.f32 %v679, %v1198
  %v1200 = vpop.f32.mrf.mxu0
  %1201 = vmatprep.mubr.bf16.mxu0 %v892
  %1202 = vmatmul.mubr.bf16.gmra.mxu0 %v891
  %v1203 = vpop.f32.mrf.mxu0
  %v1204 = vadd.f32 %v679, %v1203
  %v1205 = vpop.f32.mrf.mxu0
  %v1206 = vpop.f32.mrf.mxu0
  %v1207 = vadd.f32 %v679, %v1206
  %v1208 = vpop.f32.mrf.mxu0
  %1209 = vmatprep.mubr.bf16.mxu0 %v894
  %1210 = vmatmul.mubr.bf16.gmra.mxu0 %v893
  %v1211 = vpop.f32.mrf.mxu0
  %v1212 = vadd.f32 %v679, %v1211
  %v1213 = vpop.f32.mrf.mxu0
  %v1214 = vpop.f32.mrf.mxu0
  %v1215 = vadd.f32 %v679, %v1214
  %v1216 = vpop.f32.mrf.mxu0
  %1217 = vmatprep.mubr.bf16.mxu0 %v896
  %1218 = vmatmul.mubr.bf16.gmra.mxu0 %v895
  %v1219 = vpop.f32.mrf.mxu0
  %v1220 = vadd.f32 %v679, %v1219
  %v1221 = vpop.f32.mrf.mxu0
  %v1222 = vpop.f32.mrf.mxu0
  %v1223 = vadd.f32 %v679, %v1222
  %v1224 = vpop.f32.mrf.mxu0
  %1225 = vmatprep.mubr.bf16.mxu0 %v898
  %1226 = vmatmul.mubr.bf16.gmra.mxu0 %v897
  %v1227 = vpop.f32.mrf.mxu0
  %v1228 = vadd.f32 %v679, %v1227
  %v1229 = vpop.f32.mrf.mxu0
  %v1230 = vpop.f32.mrf.mxu0
  %v1231 = vadd.f32 %v679, %v1230
  %v1232 = vpop.f32.mrf.mxu0
  %1233 = vmatprep.mubr.bf16.mxu0 %v900
  %1234 = vmatmul.mubr.bf16.gmra.mxu0 %v899
  %v1235 = vpop.f32.mrf.mxu0
  %v1236 = vadd.f32 %v679, %v1235
  %v1237 = vpop.f32.mrf.mxu0
  %v1238 = vpop.f32.mrf.mxu0
  %v1239 = vadd.f32 %v679, %v1238
  %v1240 = vpop.f32.mrf.mxu0
  %1241 = vmatprep.mubr.bf16.mxu0 %v902
  %1242 = vmatmul.mubr.bf16.gmra.mxu0 %v901
  %v1243 = vpop.f32.mrf.mxu0
  %v1244 = vadd.f32 %v679, %v1243
  %v1245 = vpop.f32.mrf.mxu0
  %v1246 = vpop.f32.mrf.mxu0
  %v1247 = vadd.f32 %v679, %v1246
  %v1248 = vpop.f32.mrf.mxu0
  %1249 = vmatprep.mubr.bf16.mxu0 %v904
  %1250 = vmatmul.mubr.bf16.gmra.mxu0 %v903
  %v1251 = vpop.f32.mrf.mxu0
  %v1252 = vadd.f32 %v679, %v1251
  %v1253 = vpop.f32.mrf.mxu0
  %v1254 = vpop.f32.mrf.mxu0
  %v1255 = vadd.f32 %v679, %v1254
  %v1256 = vpop.f32.mrf.mxu0
  %1257 = vmatprep.mubr.bf16.mxu0 %v906
  %1258 = vmatmul.mubr.bf16.gmra.mxu0 %v905
  %v1259 = vpop.f32.mrf.mxu0
  %v1260 = vadd.f32 %v679, %v1259
  %v1261 = vpop.f32.mrf.mxu0
  %v1262 = vpop.f32.mrf.mxu0
  %v1263 = vadd.f32 %v679, %v1262
  %v1264 = vpop.f32.mrf.mxu0
  %1265 = vmatprep.mubr.bf16.mxu0 %v908
  %1266 = vmatmul.mubr.bf16.gmra.mxu0 %v907
  %v1267 = vpop.f32.mrf.mxu0
  %v1268 = vadd.f32 %v679, %v1267
  %v1269 = vpop.f32.mrf.mxu0
  %v1270 = vpop.f32.mrf.mxu0
  %v1271 = vadd.f32 %v679, %v1270
  %v1272 = vpop.f32.mrf.mxu0
  %1273 = vmatprep.mubr.bf16.mxu0 %v910
  %1274 = vmatmul.mubr.bf16.gmra.mxu0 %v909
  %v1275 = vpop.f32.mrf.mxu0
  %v1276 = vadd.f32 %v679, %v1275
  %v1277 = vpop.f32.mrf.mxu0
  %v1278 = vpop.f32.mrf.mxu0
  %v1279 = vadd.f32 %v679, %v1278
  %v1280 = vpop.f32.mrf.mxu0
  %1281 = vmatprep.mubr.bf16.mxu0 %v912
  %1282 = vmatmul.mubr.bf16.gmra.mxu0 %v911
  %v1283 = vpop.f32.mrf.mxu0
  %v1284 = vadd.f32 %v679, %v1283
  %v1285 = vpop.f32.mrf.mxu0
  %v1286 = vpop.f32.mrf.mxu0
  %v1287 = vadd.f32 %v679, %v1286
  %v1288 = vpop.f32.mrf.mxu0
  %1289 = vmatprep.mubr.bf16.mxu0 %v914
  %1290 = vmatmul.mubr.bf16.gmra.mxu0 %v913
  %v1291 = vpop.f32.mrf.mxu0
  %v1292 = vadd.f32 %v679, %v1291
  %v1293 = vpop.f32.mrf.mxu0
  %v1294 = vpop.f32.mrf.mxu0
  %v1295 = vadd.f32 %v679, %v1294
  %v1296 = vpop.f32.mrf.mxu0
  %1297 = vmatprep.mubr.bf16.mxu0 %v916
  %1298 = vmatmul.mubr.bf16.gmra.mxu0 %v915
  %v1299 = vpop.f32.mrf.mxu0
  %v1300 = vadd.f32 %v679, %v1299
  %v1301 = vpop.f32.mrf.mxu0
  %v1302 = vpop.f32.mrf.mxu0
  %v1303 = vadd.f32 %v679, %v1302
  %v1304 = vpop.f32.mrf.mxu0
  %1305 = vmatprep.mubr.bf16.mxu0 %v918
  %1306 = vmatmul.mubr.bf16.gmra.mxu0 %v917
  %v1307 = vpop.f32.mrf.mxu0
  %v1308 = vadd.f32 %v679, %v1307
  %v1309 = vpop.f32.mrf.mxu0
  %v1310 = vpop.f32.mrf.mxu0
  %v1311 = vadd.f32 %v679, %v1310
  %v1312 = vpop.f32.mrf.mxu0
  %1313 = vmatprep.mubr.bf16.mxu0 %v920
  %1314 = vmatmul.mubr.bf16.gmra.mxu0 %v919
  %v1315 = vpop.f32.mrf.mxu0
  %v1316 = vadd.f32 %v679, %v1315
  %v1317 = vpop.f32.mrf.mxu0
  %v1318 = vpop.f32.mrf.mxu0
  %v1319 = vadd.f32 %v679, %v1318
  %v1320 = vpop.f32.mrf.mxu0
  %1321 = vmatprep.mubr.bf16.mxu0 %v922
  %1322 = vmatmul.mubr.bf16.gmra.mxu0 %v921
  %v1323 = vpop.f32.mrf.mxu0
  %v1324 = vadd.f32 %v679, %v1323
  %v1325 = vpop.f32.mrf.mxu0
  %v1326 = vpop.f32.mrf.mxu0
  %v1327 = vadd.f32 %v679, %v1326
  %v1328 = vpop.f32.mrf.mxu0
  %1329 = vmatprep.mubr.bf16.mxu0 %v924
  %1330 = vmatmul.mubr.bf16.gmra.mxu0 %v923
  %v1331 = vpop.f32.mrf.mxu0
  %v1332 = vadd.f32 %v679, %v1331
  %v1333 = vpop.f32.mrf.mxu0
  %v1334 = vpop.f32.mrf.mxu0
  %v1335 = vadd.f32 %v679, %v1334
  %v1336 = vpop.f32.mrf.mxu0
  %1337 = vmatprep.mubr.bf16.mxu0 %v926
  %1338 = vmatmul.mubr.bf16.gmra.mxu0 %v925
  %v1339 = vpop.f32.mrf.mxu0
  %v1340 = vadd.f32 %v679, %v1339
  %v1341 = vpop.f32.mrf.mxu0
  %v1342 = vpop.f32.mrf.mxu0
  %v1343 = vadd.f32 %v679, %v1342
  %v1344 = vpop.f32.mrf.mxu0
  %1345 = vmatprep.mubr.bf16.mxu0 %v928
  %1346 = vmatmul.mubr.bf16.gmra.mxu0 %v927
  %v1347 = vpop.f32.mrf.mxu0
  %v1348 = vadd.f32 %v679, %v1347
  %v1349 = vpop.f32.mrf.mxu0
  %v1350 = vpop.f32.mrf.mxu0
  %v1351 = vadd.f32 %v679, %v1350
  %v1352 = vpop.f32.mrf.mxu0
  %1353 = vmatprep.mubr.bf16.mxu0 %v930
  %1354 = vmatmul.mubr.bf16.gmra.mxu0 %v929
  %v1355 = vpop.f32.mrf.mxu0
  %v1356 = vadd.f32 %v679, %v1355
  %v1357 = vpop.f32.mrf.mxu0
  %v1358 = vpop.f32.mrf.mxu0
  %v1359 = vadd.f32 %v679, %v1358
  %v1360 = vpop.f32.mrf.mxu0
  %1361 = vmatprep.mubr.bf16.mxu0 %v932
  %1362 = vmatmul.mubr.bf16.gmra.mxu0 %v931
  %v1363 = vpop.f32.mrf.mxu0
  %v1364 = vadd.f32 %v679, %v1363
  %v1365 = vpop.f32.mrf.mxu0
  %v1366 = vpop.f32.mrf.mxu0
  %v1367 = vadd.f32 %v679, %v1366
  %v1368 = vpop.f32.mrf.mxu0
  %1369 = vmatprep.mubr.bf16.mxu0 %v934
  %1370 = vmatmul.mubr.bf16.gmra.mxu0 %v933
  %v1371 = vpop.f32.mrf.mxu0
  %v1372 = vadd.f32 %v679, %v1371
  %v1373 = vpop.f32.mrf.mxu0
  %v1374 = vpop.f32.mrf.mxu0
  %v1375 = vadd.f32 %v679, %v1374
  %v1376 = vpop.f32.mrf.mxu0
  %1377 = vmatprep.mubr.bf16.mxu0 %v936
  %1378 = vmatmul.mubr.bf16.gmra.mxu0 %v935
  %v1379 = vpop.f32.mrf.mxu0
  %v1380 = vadd.f32 %v679, %v1379
  %v1381 = vpop.f32.mrf.mxu0
  %v1382 = vpop.f32.mrf.mxu0
  %v1383 = vadd.f32 %v679, %v1382
  %v1384 = vpop.f32.mrf.mxu0
  %1385 = vdwg.mxu0
  %v1386 = vmax.f32 %v1132, 0.0
  %v1387 = vmax.f32 %v1135, 0.0
  %v1388 = vmax.f32 %v1140, 0.0
  %v1389 = vmax.f32 %v1143, 0.0
  %v1390 = vmax.f32 %v1148, 0.0
  %v1391 = vmax.f32 %v1151, 0.0
  %v1392 = vmax.f32 %v1156, 0.0
  %v1393 = vmax.f32 %v1159, 0.0
  %v1394 = vmax.f32 %v1164, 0.0
  %v1395 = vmax.f32 %v1167, 0.0
  %v1396 = vmax.f32 %v1172, 0.0
  %v1397 = vmax.f32 %v1175, 0.0
  %v1398 = vmax.f32 %v1180, 0.0
  %v1399 = vmax.f32 %v1183, 0.0
  %v1400 = vmax.f32 %v1188, 0.0
  %v1401 = vmax.f32 %v1191, 0.0
  %v1402 = vmax.f32 %v1196, 0.0
  %v1403 = vmax.f32 %v1199, 0.0
  %v1404 = vmax.f32 %v1204, 0.0
  %v1405 = vmax.f32 %v1207, 0.0
  %v1406 = vmax.f32 %v1212, 0.0
  %v1407 = vmax.f32 %v1215, 0.0
  %v1408 = vmax.f32 %v1220, 0.0
  %v1409 = vmax.f32 %v1223, 0.0
  %v1410 = vmax.f32 %v1228, 0.0
  %v1411 = vmax.f32 %v1231, 0.0
  %v1412 = vmax.f32 %v1236, 0.0
  %v1413 = vmax.f32 %v1239, 0.0
  %v1414 = vmax.f32 %v1244, 0.0
  %v1415 = vmax.f32 %v1247, 0.0
  %v1416 = vmax.f32 %v1252, 0.0
  %v1417 = vmax.f32 %v1255, 0.0
  %v1418 = vmax.f32 %v1260, 0.0
  %v1419 = vmax.f32 %v1263, 0.0
  %v1420 = vmax.f32 %v1268, 0.0
  %v1421 = vmax.f32 %v1271, 0.0
  %v1422 = vmax.f32 %v1276, 0.0
  %v1423 = vmax.f32 %v1279, 0.0
  %v1424 = vmax.f32 %v1284, 0.0
  %v1425 = vmax.f32 %v1287, 0.0
  %v1426 = vmax.f32 %v1292, 0.0
  %v1427 = vmax.f32 %v1295, 0.0
  %v1428 = vmax.f32 %v1300, 0.0
  %v1429 = vmax.f32 %v1303, 0.0
  %v1430 = vmax.f32 %v1308, 0.0
  %v1431 = vmax.f32 %v1311, 0.0
  %v1432 = vmax.f32 %v1316, 0.0
  %v1433 = vmax.f32 %v1319, 0.0
  %v1434 = vmax.f32 %v1324, 0.0
  %v1435 = vmax.f32 %v1327, 0.0
  %v1436 = vmax.f32 %v1332, 0.0
  %v1437 = vmax.f32 %v1335, 0.0
  %v1438 = vmax.f32 %v1340, 0.0
  %v1439 = vmax.f32 %v1343, 0.0
  %v1440 = vmax.f32 %v1348, 0.0
  %v1441 = vmax.f32 %v1351, 0.0
  %v1442 = vmax.f32 %v1356, 0.0
  %v1443 = vmax.f32 %v1359, 0.0
  %v1444 = vmax.f32 %v1364, 0.0
  %v1445 = vmax.f32 %v1367, 0.0
  %v1446 = vmax.f32 %v1372, 0.0
  %v1447 = vmax.f32 %v1375, 0.0
  %v1448 = vmax.f32 %v1380, 0.0
  %v1449 = vmax.f32 %v1383, 0.0
  %v1450 = vpack.c.bf16 %v1387, %v1386
  %v1451 = vpack.c.bf16 %v1389, %v1388
  %v1452 = vpack.c.bf16 %v1391, %v1390
  %v1453 = vpack.c.bf16 %v1393, %v1392
  %v1454 = vpack.c.bf16 %v1395, %v1394
  %v1455 = vpack.c.bf16 %v1397, %v1396
  %v1456 = vpack.c.bf16 %v1399, %v1398
  %v1457 = vpack.c.bf16 %v1401, %v1400
  %v1458 = vpack.c.bf16 %v1403, %v1402
  %v1459 = vpack.c.bf16 %v1405, %v1404
  %v1460 = vpack.c.bf16 %v1407, %v1406
  %v1461 = vpack.c.bf16 %v1409, %v1408
  %v1462 = vpack.c.bf16 %v1411, %v1410
  %v1463 = vpack.c.bf16 %v1413, %v1412
  %v1464 = vpack.c.bf16 %v1415, %v1414
  %v1465 = vpack.c.bf16 %v1417, %v1416
  %v1466 = vpack.c.bf16 %v1419, %v1418
  %v1467 = vpack.c.bf16 %v1421, %v1420
  %v1468 = vpack.c.bf16 %v1423, %v1422
  %v1469 = vpack.c.bf16 %v1425, %v1424
  %v1470 = vpack.c.bf16 %v1427, %v1426
  %v1471 = vpack.c.bf16 %v1429, %v1428
  %v1472 = vpack.c.bf16 %v1431, %v1430
  %v1473 = vpack.c.bf16 %v1433, %v1432
  %v1474 = vpack.c.bf16 %v1435, %v1434
  %v1475 = vpack.c.bf16 %v1437, %v1436
  %v1476 = vpack.c.bf16 %v1439, %v1438
  %v1477 = vpack.c.bf16 %v1441, %v1440
  %v1478 = vpack.c.bf16 %v1443, %v1442
  %v1479 = vpack.c.bf16 %v1445, %v1444
  %v1480 = vpack.c.bf16 %v1447, %v1446
  %v1481 = vpack.c.bf16 %v1449, %v1448
  %v1486 = vunpack.c.l.b16 %v1450
  %v1487 = vunpack.c.h.b16 %v1450
  %v1488 = vunpack.c.l.b16 %v1451
  %v1489 = vunpack.c.h.b16 %v1451
  %v1490 = vunpack.c.l.b16 %v1452
  %v1491 = vunpack.c.h.b16 %v1452
  %v1492 = vunpack.c.l.b16 %v1453
  %v1493 = vunpack.c.h.b16 %v1453
  %v1494 = vpack.c.b16 %v1486, %v1486
  %v1495 = vpack.c.b16 %v1487, %v1487
  %v1496 = vpack.c.b16 %v1488, %v1488
  %v1497 = vpack.c.b16 %v1489, %v1489
  %v1498 = vpack.c.b16 %v1490, %v1490
  %v1499 = vpack.c.b16 %v1491, %v1491
  %v1500 = vpack.c.b16 %v1492, %v1492
  %v1501 = vpack.c.b16 %v1493, %v1493
  %vm1510 = vcmask 257024
  %1511 = vst.msk [vmem:[#allocation2] sm:$0xf] %vm1510, %v1494
  %1512 = vst.msk [vmem:[#allocation2 + $0x8] sm:$0xf] %vm1510, %v1495
  %1513 = vst.msk [vmem:[#allocation2 + $0x10] sm:$0xf] %vm1510, %v1496
  %1514 = vst.msk [vmem:[#allocation2 + $0x18] sm:$0xf] %vm1510, %v1497
  %1515 = vst.msk [vmem:[#allocation2 + $0x20] sm:$0xf] %vm1510, %v1498
  %1516 = vst.msk [vmem:[#allocation2 + $0x28] sm:$0xf] %vm1510, %v1499
  %1517 = vst.msk [vmem:[#allocation2 + $0x30] sm:$0xf] %vm1510, %v1500
  %1518 = vst.msk [vmem:[#allocation2 + $0x38] sm:$0xf] %vm1510, %v1501
  %v1523 = vunpack.c.l.b16 %v1454
  %v1524 = vunpack.c.h.b16 %v1454
  %v1525 = vunpack.c.l.b16 %v1455
  %v1526 = vunpack.c.h.b16 %v1455
  %v1527 = vunpack.c.l.b16 %v1456
  %v1528 = vunpack.c.h.b16 %v1456
  %v1529 = vunpack.c.l.b16 %v1457
  %v1530 = vunpack.c.h.b16 %v1457
  %v1531 = vpack.c.b16 %v1523, %v1523
  %v1532 = vpack.c.b16 %v1524, %v1524
  %v1533 = vpack.c.b16 %v1525, %v1525
  %v1534 = vpack.c.b16 %v1526, %v1526
  %v1535 = vpack.c.b16 %v1527, %v1527
  %v1536 = vpack.c.b16 %v1528, %v1528
  %v1537 = vpack.c.b16 %v1529, %v1529
  %v1538 = vpack.c.b16 %v1530, %v1530
  %1539 = vrot.lane.b32.xlu0 %v1531, 32
  %v1540 = vpop.permute.xlu0 %1539
  %1541 = vrot.lane.b32.xlu0 %v1532, 32
  %v1542 = vpop.permute.xlu0 %1541
  %1543 = vrot.lane.b32.xlu0 %v1533, 32
  %v1544 = vpop.permute.xlu0 %1543
  %1545 = vrot.lane.b32.xlu0 %v1534, 32
  %v1546 = vpop.permute.xlu0 %1545
  %1547 = vrot.lane.b32.xlu0 %v1535, 32
  %v1548 = vpop.permute.xlu0 %1547
  %1549 = vrot.lane.b32.xlu0 %v1536, 32
  %v1550 = vpop.permute.xlu0 %1549
  %1551 = vrot.lane.b32.xlu0 %v1537, 32
  %v1552 = vpop.permute.xlu0 %1551
  %1553 = vrot.lane.b32.xlu0 %v1538, 32
  %v1554 = vpop.permute.xlu0 %1553
  %vm1563 = vcmask 519424
  %1564 = vst.msk [vmem:[#allocation2] sm:$0xf] %vm1563, %v1540
  %1565 = vst.msk [vmem:[#allocation2 + $0x8] sm:$0xf] %vm1563, %v1542
  %1566 = vst.msk [vmem:[#allocation2 + $0x10] sm:$0xf] %vm1563, %v1544
  %1567 = vst.msk [vmem:[#allocation2 + $0x18] sm:$0xf] %vm1563, %v1546
  %1568 = vst.msk [vmem:[#allocation2 + $0x20] sm:$0xf] %vm1563, %v1548
  %1569 = vst.msk [vmem:[#allocation2 + $0x28] sm:$0xf] %vm1563, %v1550
  %1570 = vst.msk [vmem:[#allocation2 + $0x30] sm:$0xf] %vm1563, %v1552
  %1571 = vst.msk [vmem:[#allocation2 + $0x38] sm:$0xf] %vm1563, %v1554
  %v1576 = vunpack.c.l.b16 %v1458
  %v1577 = vunpack.c.h.b16 %v1458
  %v1578 = vunpack.c.l.b16 %v1459
  %v1579 = vunpack.c.h.b16 %v1459
  %v1580 = vunpack.c.l.b16 %v1460
  %v1581 = vunpack.c.h.b16 %v1460
  %v1582 = vunpack.c.l.b16 %v1461
  %v1583 = vunpack.c.h.b16 %v1461
  %v1584 = vpack.c.b16 %v1576, %v1576
  %v1585 = vpack.c.b16 %v1577, %v1577
  %v1586 = vpack.c.b16 %v1578, %v1578
  %v1587 = vpack.c.b16 %v1579, %v1579
  %v1588 = vpack.c.b16 %v1580, %v1580
  %v1589 = vpack.c.b16 %v1581, %v1581
  %v1590 = vpack.c.b16 %v1582, %v1582
  %v1591 = vpack.c.b16 %v1583, %v1583
  %1592 = vrot.lane.b32.xlu0 %v1584, 64
  %v1593 = vpop.permute.xlu0 %1592
  %1594 = vrot.lane.b32.xlu0 %v1585, 64
  %v1595 = vpop.permute.xlu0 %1594
  %1596 = vrot.lane.b32.xlu0 %v1586, 64
  %v1597 = vpop.permute.xlu0 %1596
  %1598 = vrot.lane.b32.xlu0 %v1587, 64
  %v1599 = vpop.permute.xlu0 %1598
  %1600 = vrot.lane.b32.xlu0 %v1588, 64
  %v1601 = vpop.permute.xlu0 %1600
  %1602 = vrot.lane.b32.xlu0 %v1589, 64
  %v1603 = vpop.permute.xlu0 %1602
  %1604 = vrot.lane.b32.xlu0 %v1590, 64
  %v1605 = vpop.permute.xlu0 %1604
  %1606 = vrot.lane.b32.xlu0 %v1591, 64
  %v1607 = vpop.permute.xlu0 %1606
  %vm1616 = vcmask 781824
  %1617 = vst.msk [vmem:[#allocation2] sm:$0xf] %vm1616, %v1593
  %1618 = vst.msk [vmem:[#allocation2 + $0x8] sm:$0xf] %vm1616, %v1595
  %1619 = vst.msk [vmem:[#allocation2 + $0x10] sm:$0xf] %vm1616, %v1597
  %1620 = vst.msk [vmem:[#allocation2 + $0x18] sm:$0xf] %vm1616, %v1599
  %1621 = vst.msk [vmem:[#allocation2 + $0x20] sm:$0xf] %vm1616, %v1601
  %1622 = vst.msk [vmem:[#allocation2 + $0x28] sm:$0xf] %vm1616, %v1603
  %1623 = vst.msk [vmem:[#allocation2 + $0x30] sm:$0xf] %vm1616, %v1605
  %1624 = vst.msk [vmem:[#allocation2 + $0x38] sm:$0xf] %vm1616, %v1607
  %v1629 = vunpack.c.l.b16 %v1462
  %v1630 = vunpack.c.h.b16 %v1462
  %v1631 = vunpack.c.l.b16 %v1463
  %v1632 = vunpack.c.h.b16 %v1463
  %v1633 = vunpack.c.l.b16 %v1464
  %v1634 = vunpack.c.h.b16 %v1464
  %v1635 = vunpack.c.l.b16 %v1465
  %v1636 = vunpack.c.h.b16 %v1465
  %v1637 = vpack.c.b16 %v1629, %v1629
  %v1638 = vpack.c.b16 %v1630, %v1630
  %v1639 = vpack.c.b16 %v1631, %v1631
  %v1640 = vpack.c.b16 %v1632, %v1632
  %v1641 = vpack.c.b16 %v1633, %v1633
  %v1642 = vpack.c.b16 %v1634, %v1634
  %v1643 = vpack.c.b16 %v1635, %v1635
  %v1644 = vpack.c.b16 %v1636, %v1636
  %1645 = vrot.lane.b32.xlu0 %v1637, 96
  %v1646 = vpop.permute.xlu0 %1645
  %1647 = vrot.lane.b32.xlu0 %v1638, 96
  %v1648 = vpop.permute.xlu0 %1647
  %1649 = vrot.lane.b32.xlu0 %v1639, 96
  %v1650 = vpop.permute.xlu0 %1649
  %1651 = vrot.lane.b32.xlu0 %v1640, 96
  %v1652 = vpop.permute.xlu0 %1651
  %1653 = vrot.lane.b32.xlu0 %v1641, 96
  %v1654 = vpop.permute.xlu0 %1653
  %1655 = vrot.lane.b32.xlu0 %v1642, 96
  %v1656 = vpop.permute.xlu0 %1655
  %1657 = vrot.lane.b32.xlu0 %v1643, 96
  %v1658 = vpop.permute.xlu0 %1657
  %1659 = vrot.lane.b32.xlu0 %v1644, 96
  %v1660 = vpop.permute.xlu0 %1659
  %vm1669 = vcmask 1044224
  %1670 = vst.msk [vmem:[#allocation2] sm:$0xf] %vm1669, %v1646
  %1671 = vst.msk [vmem:[#allocation2 + $0x8] sm:$0xf] %vm1669, %v1648
  %1672 = vst.msk [vmem:[#allocation2 + $0x10] sm:$0xf] %vm1669, %v1650
  %1673 = vst.msk [vmem:[#allocation2 + $0x18] sm:$0xf] %vm1669, %v1652
  %1674 = vst.msk [vmem:[#allocation2 + $0x20] sm:$0xf] %vm1669, %v1654
  %1675 = vst.msk [vmem:[#allocation2 + $0x28] sm:$0xf] %vm1669, %v1656
  %1676 = vst.msk [vmem:[#allocation2 + $0x30] sm:$0xf] %vm1669, %v1658
  %1677 = vst.msk [vmem:[#allocation2 + $0x38] sm:$0xf] %vm1669, %v1660
  %v1682 = vunpack.c.l.b16 %v1466
  %v1683 = vunpack.c.h.b16 %v1466
  %v1684 = vunpack.c.l.b16 %v1467
  %v1685 = vunpack.c.h.b16 %v1467
  %v1686 = vunpack.c.l.b16 %v1468
  %v1687 = vunpack.c.h.b16 %v1468
  %v1688 = vunpack.c.l.b16 %v1469
  %v1689 = vunpack.c.h.b16 %v1469
  %v1690 = vpack.c.b16 %v1682, %v1682
  %v1691 = vpack.c.b16 %v1683, %v1683
  %v1692 = vpack.c.b16 %v1684, %v1684
  %v1693 = vpack.c.b16 %v1685, %v1685
  %v1694 = vpack.c.b16 %v1686, %v1686
  %v1695 = vpack.c.b16 %v1687, %v1687
  %v1696 = vpack.c.b16 %v1688, %v1688
  %v1697 = vpack.c.b16 %v1689, %v1689
  %1706 = vst.msk [vmem:[#allocation2 + $0x4] sm:$0xf] %vm1510, %v1690
  %1707 = vst.msk [vmem:[#allocation2 + $0xc] sm:$0xf] %vm1510, %v1691
  %1708 = vst.msk [vmem:[#allocation2 + $0x14] sm:$0xf] %vm1510, %v1692
  %1709 = vst.msk [vmem:[#allocation2 + $0x1c] sm:$0xf] %vm1510, %v1693
  %1710 = vst.msk [vmem:[#allocation2 + $0x24] sm:$0xf] %vm1510, %v1694
  %1711 = vst.msk [vmem:[#allocation2 + $0x2c] sm:$0xf] %vm1510, %v1695
  %1712 = vst.msk [vmem:[#allocation2 + $0x34] sm:$0xf] %vm1510, %v1696
  %1713 = vst.msk [vmem:[#allocation2 + $0x3c] sm:$0xf] %vm1510, %v1697
  %v1718 = vunpack.c.l.b16 %v1470
  %v1719 = vunpack.c.h.b16 %v1470
  %v1720 = vunpack.c.l.b16 %v1471
  %v1721 = vunpack.c.h.b16 %v1471
  %v1722 = vunpack.c.l.b16 %v1472
  %v1723 = vunpack.c.h.b16 %v1472
  %v1724 = vunpack.c.l.b16 %v1473
  %v1725 = vunpack.c.h.b16 %v1473
  %v1726 = vpack.c.b16 %v1718, %v1718
  %v1727 = vpack.c.b16 %v1719, %v1719
  %v1728 = vpack.c.b16 %v1720, %v1720
  %v1729 = vpack.c.b16 %v1721, %v1721
  %v1730 = vpack.c.b16 %v1722, %v1722
  %v1731 = vpack.c.b16 %v1723, %v1723
  %v1732 = vpack.c.b16 %v1724, %v1724
  %v1733 = vpack.c.b16 %v1725, %v1725
  %1734 = vrot.lane.b32.xlu0 %v1726, 32
  %v1735 = vpop.permute.xlu0 %1734
  %1736 = vrot.lane.b32.xlu0 %v1727, 32
  %v1737 = vpop.permute.xlu0 %1736
  %1738 = vrot.lane.b32.xlu0 %v1728, 32
  %v1739 = vpop.permute.xlu0 %1738
  %1740 = vrot.lane.b32.xlu0 %v1729, 32
  %v1741 = vpop.permute.xlu0 %1740
  %1742 = vrot.lane.b32.xlu0 %v1730, 32
  %v1743 = vpop.permute.xlu0 %1742
  %1744 = vrot.lane.b32.xlu0 %v1731, 32
  %v1745 = vpop.permute.xlu0 %1744
  %1746 = vrot.lane.b32.xlu0 %v1732, 32
  %v1747 = vpop.permute.xlu0 %1746
  %1748 = vrot.lane.b32.xlu0 %v1733, 32
  %v1749 = vpop.permute.xlu0 %1748
  %1758 = vst.msk [vmem:[#allocation2 + $0x4] sm:$0xf] %vm1563, %v1735
  %1759 = vst.msk [vmem:[#allocation2 + $0xc] sm:$0xf] %vm1563, %v1737
  %1760 = vst.msk [vmem:[#allocation2 + $0x14] sm:$0xf] %vm1563, %v1739
  %1761 = vst.msk [vmem:[#allocation2 + $0x1c] sm:$0xf] %vm1563, %v1741
  %1762 = vst.msk [vmem:[#allocation2 + $0x24] sm:$0xf] %vm1563, %v1743
  %1763 = vst.msk [vmem:[#allocation2 + $0x2c] sm:$0xf] %vm1563, %v1745
  %1764 = vst.msk [vmem:[#allocation2 + $0x34] sm:$0xf] %vm1563, %v1747
  %1765 = vst.msk [vmem:[#allocation2 + $0x3c] sm:$0xf] %vm1563, %v1749
  %v1770 = vunpack.c.l.b16 %v1474
  %v1771 = vunpack.c.h.b16 %v1474
  %v1772 = vunpack.c.l.b16 %v1475
  %v1773 = vunpack.c.h.b16 %v1475
  %v1774 = vunpack.c.l.b16 %v1476
  %v1775 = vunpack.c.h.b16 %v1476
  %v1776 = vunpack.c.l.b16 %v1477
  %v1777 = vunpack.c.h.b16 %v1477
  %v1778 = vpack.c.b16 %v1770, %v1770
  %v1779 = vpack.c.b16 %v1771, %v1771
  %v1780 = vpack.c.b16 %v1772, %v1772
  %v1781 = vpack.c.b16 %v1773, %v1773
  %v1782 = vpack.c.b16 %v1774, %v1774
  %v1783 = vpack.c.b16 %v1775, %v1775
  %v1784 = vpack.c.b16 %v1776, %v1776
  %v1785 = vpack.c.b16 %v1777, %v1777
  %1786 = vrot.lane.b32.xlu0 %v1778, 64
  %v1787 = vpop.permute.xlu0 %1786
  %1788 = vrot.lane.b32.xlu0 %v1779, 64
  %v1789 = vpop.permute.xlu0 %1788
  %1790 = vrot.lane.b32.xlu0 %v1780, 64
  %v1791 = vpop.permute.xlu0 %1790
  %1792 = vrot.lane.b32.xlu0 %v1781, 64
  %v1793 = vpop.permute.xlu0 %1792
  %1794 = vrot.lane.b32.xlu0 %v1782, 64
  %v1795 = vpop.permute.xlu0 %1794
  %1796 = vrot.lane.b32.xlu0 %v1783, 64
  %v1797 = vpop.permute.xlu0 %1796
  %1798 = vrot.lane.b32.xlu0 %v1784, 64
  %v1799 = vpop.permute.xlu0 %1798
  %1800 = vrot.lane.b32.xlu0 %v1785, 64
  %v1801 = vpop.permute.xlu0 %1800
  %1810 = vst.msk [vmem:[#allocation2 + $0x4] sm:$0xf] %vm1616, %v1787
  %1811 = vst.msk [vmem:[#allocation2 + $0xc] sm:$0xf] %vm1616, %v1789
  %1812 = vst.msk [vmem:[#allocation2 + $0x14] sm:$0xf] %vm1616, %v1791
  %1813 = vst.msk [vmem:[#allocation2 + $0x1c] sm:$0xf] %vm1616, %v1793
  %1814 = vst.msk [vmem:[#allocation2 + $0x24] sm:$0xf] %vm1616, %v1795
  %1815 = vst.msk [vmem:[#allocation2 + $0x2c] sm:$0xf] %vm1616, %v1797
  %1816 = vst.msk [vmem:[#allocation2 + $0x34] sm:$0xf] %vm1616, %v1799
  %1817 = vst.msk [vmem:[#allocation2 + $0x3c] sm:$0xf] %vm1616, %v1801
  %v1822 = vunpack.c.l.b16 %v1478
  %v1823 = vunpack.c.h.b16 %v1478
  %v1824 = vunpack.c.l.b16 %v1479
  %v1825 = vunpack.c.h.b16 %v1479
  %v1826 = vunpack.c.l.b16 %v1480
  %v1827 = vunpack.c.h.b16 %v1480
  %v1828 = vunpack.c.l.b16 %v1481
  %v1829 = vunpack.c.h.b16 %v1481
  %v1830 = vpack.c.b16 %v1822, %v1822
  %v1831 = vpack.c.b16 %v1823, %v1823
  %v1832 = vpack.c.b16 %v1824, %v1824
  %v1833 = vpack.c.b16 %v1825, %v1825
  %v1834 = vpack.c.b16 %v1826, %v1826
  %v1835 = vpack.c.b16 %v1827, %v1827
  %v1836 = vpack.c.b16 %v1828, %v1828
  %v1837 = vpack.c.b16 %v1829, %v1829
  %1838 = vrot.lane.b32.xlu0 %v1830, 96
  %v1839 = vpop.permute.xlu0 %1838
  %1840 = vrot.lane.b32.xlu0 %v1831, 96
  %v1841 = vpop.permute.xlu0 %1840
  %1842 = vrot.lane.b32.xlu0 %v1832, 96
  %v1843 = vpop.permute.xlu0 %1842
  %1844 = vrot.lane.b32.xlu0 %v1833, 96
  %v1845 = vpop.permute.xlu0 %1844
  %1846 = vrot.lane.b32.xlu0 %v1834, 96
  %v1847 = vpop.permute.xlu0 %1846
  %1848 = vrot.lane.b32.xlu0 %v1835, 96
  %v1849 = vpop.permute.xlu0 %1848
  %1850 = vrot.lane.b32.xlu0 %v1836, 96
  %v1851 = vpop.permute.xlu0 %1850
  %1852 = vrot.lane.b32.xlu0 %v1837, 96
  %v1853 = vpop.permute.xlu0 %1852
  %1862 = vst.msk [vmem:[#allocation2 + $0x4] sm:$0xf] %vm1669, %v1839
  %1863 = vst.msk [vmem:[#allocation2 + $0xc] sm:$0xf] %vm1669, %v1841
  %1864 = vst.msk [vmem:[#allocation2 + $0x14] sm:$0xf] %vm1669, %v1843
  %1865 = vst.msk [vmem:[#allocation2 + $0x1c] sm:$0xf] %vm1669, %v1845
  %1866 = vst.msk [vmem:[#allocation2 + $0x24] sm:$0xf] %vm1669, %v1847
  %1867 = vst.msk [vmem:[#allocation2 + $0x2c] sm:$0xf] %vm1669, %v1849
  %1868 = vst.msk [vmem:[#allocation2 + $0x34] sm:$0xf] %vm1669, %v1851
  %1869 = vst.msk [vmem:[#allocation2 + $0x3c] sm:$0xf] %vm1669, %v1853
  %v1870 = vld [vmem:[#allocation2] sm:$0xf]
  %v1871 = vunpack.c.l.bf16 %v1870
  %1872 = vst [vmem:[#allocation3] sm:$0xff] %v1871
  %v1873 = vld [vmem:[#allocation2 + $0x8] sm:$0xf]
  %v1874 = vunpack.c.l.bf16 %v1873
  %1875 = vst [vmem:[#allocation3 + $0x8] sm:$0xff] %v1874
  %v1876 = vld [vmem:[#allocation2 + $0x10] sm:$0xf]
  %v1877 = vunpack.c.l.bf16 %v1876
  %1878 = vst [vmem:[#allocation3 + $0x10] sm:$0xff] %v1877
  %v1879 = vld [vmem:[#allocation2 + $0x18] sm:$0xf]
  %v1880 = vunpack.c.l.bf16 %v1879
  %1881 = vst [vmem:[#allocation3 + $0x18] sm:$0xff] %v1880
  %v1882 = vld [vmem:[#allocation2] sm:$0xff]
  %v1883 = vunpack.c.l.bf16 %v1882
  %v1884 = vunpack.c.h.bf16 %v1882
  %1887 = vrot.lane.b32.xlu0 %v1883, 64
  %v1888 = vpop.permute.xlu0 %1887
  %1889 = vrot.lane.b32.xlu0 %v1884, 64
  %v1890 = vpop.permute.xlu0 %1889
  %vm1891 = vcmask 523264
  %v1892 = vsel %vm1891, %v1888, %v1890
  %1894 = vst [vmem:[#allocation3 + $0x20] sm:$0xff] %v1892
  %v1895 = vld [vmem:[#allocation2 + $0x8] sm:$0xff]
  %v1896 = vunpack.c.l.bf16 %v1895
  %v1897 = vunpack.c.h.bf16 %v1895
  %1900 = vrot.lane.b32.xlu0 %v1896, 64
  %v1901 = vpop.permute.xlu0 %1900
  %1902 = vrot.lane.b32.xlu0 %v1897, 64
  %v1903 = vpop.permute.xlu0 %1902
  %v1904 = vsel %vm1891, %v1901, %v1903
  %1906 = vst [vmem:[#allocation3 + $0x28] sm:$0xff] %v1904
  %v1907 = vld [vmem:[#allocation2 + $0x10] sm:$0xff]
  %v1908 = vunpack.c.l.bf16 %v1907
  %v1909 = vunpack.c.h.bf16 %v1907
  %1912 = vrot.lane.b32.xlu0 %v1908, 64
  %v1913 = vpop.permute.xlu0 %1912
  %1914 = vrot.lane.b32.xlu0 %v1909, 64
  %v1915 = vpop.permute.xlu0 %1914
  %v1916 = vsel %vm1891, %v1913, %v1915
  %1918 = vst [vmem:[#allocation3 + $0x30] sm:$0xff] %v1916
  %v1919 = vld [vmem:[#allocation2 + $0x18] sm:$0xff]
  %v1920 = vunpack.c.l.bf16 %v1919
  %v1921 = vunpack.c.h.bf16 %v1919
  %1924 = vrot.lane.b32.xlu0 %v1920, 64
  %v1925 = vpop.permute.xlu0 %1924
  %1926 = vrot.lane.b32.xlu0 %v1921, 64
  %v1927 = vpop.permute.xlu0 %1926
  %v1928 = vsel %vm1891, %v1925, %v1927
  %1930 = vst [vmem:[#allocation3 + $0x38] sm:$0xff] %v1928
  %v1931 = vld [vmem:[#allocation2 + $0x4] sm:$0xf]
  %v1932 = vunpack.c.l.bf16 %v1931
  %1933 = vst [vmem:[#allocation3 + $0x40] sm:$0xff] %v1932
  %v1934 = vld [vmem:[#allocation2 + $0xc] sm:$0xf]
  %v1935 = vunpack.c.l.bf16 %v1934
  %1936 = vst [vmem:[#allocation3 + $0x48] sm:$0xff] %v1935
  %v1937 = vld [vmem:[#allocation2 + $0x14] sm:$0xf]
  %v1938 = vunpack.c.l.bf16 %v1937
  %1939 = vst [vmem:[#allocation3 + $0x50] sm:$0xff] %v1938
  %v1940 = vld [vmem:[#allocation2 + $0x1c] sm:$0xf]
  %v1941 = vunpack.c.l.bf16 %v1940
  %1942 = vst [vmem:[#allocation3 + $0x58] sm:$0xff] %v1941
  %v1943 = vld [vmem:[#allocation2 + $0x10] sm:$0xf]
  %v1944 = vunpack.c.l.bf16 %v1943
  %1945 = vst [vmem:[#allocation3 + $0x60] sm:$0xff] %v1944
  %v1946 = vld [vmem:[#allocation2 + $0x18] sm:$0xf]
  %v1947 = vunpack.c.l.bf16 %v1946
  %1948 = vst [vmem:[#allocation3 + $0x68] sm:$0xff] %v1947
  %v1949 = vld [vmem:[#allocation2 + $0x20] sm:$0xf]
  %v1950 = vunpack.c.l.bf16 %v1949
  %1951 = vst [vmem:[#allocation3 + $0x70] sm:$0xff] %v1950
  %v1952 = vld [vmem:[#allocation2 + $0x28] sm:$0xf]
  %v1953 = vunpack.c.l.bf16 %v1952
  %1954 = vst [vmem:[#allocation3 + $0x78] sm:$0xff] %v1953
  %v1955 = vld [vmem:[#allocation2 + $0x10] sm:$0xff]
  %v1956 = vunpack.c.l.bf16 %v1955
  %v1957 = vunpack.c.h.bf16 %v1955
  %1960 = vrot.lane.b32.xlu0 %v1956, 64
  %v1961 = vpop.permute.xlu0 %1960
  %1962 = vrot.lane.b32.xlu0 %v1957, 64
  %v1963 = vpop.permute.xlu0 %1962
  %v1964 = vsel %vm1891, %v1961, %v1963
  %1966 = vst [vmem:[#allocation3 + $0x80] sm:$0xff] %v1964
  %v1967 = vld [vmem:[#allocation2 + $0x18] sm:$0xff]
  %v1968 = vunpack.c.l.bf16 %v1967
  %v1969 = vunpack.c.h.bf16 %v1967
  %1972 = vrot.lane.b32.xlu0 %v1968, 64
  %v1973 = vpop.permute.xlu0 %1972
  %1974 = vrot.lane.b32.xlu0 %v1969, 64
  %v1975 = vpop.permute.xlu0 %1974
  %v1976 = vsel %vm1891, %v1973, %v1975
  %1978 = vst [vmem:[#allocation3 + $0x88] sm:$0xff] %v1976
  %v1979 = vld [vmem:[#allocation2 + $0x20] sm:$0xff]
  %v1980 = vunpack.c.l.bf16 %v1979
  %v1981 = vunpack.c.h.bf16 %v1979
  %1984 = vrot.lane.b32.xlu0 %v1980, 64
  %v1985 = vpop.permute.xlu0 %1984
  %1986 = vrot.lane.b32.xlu0 %v1981, 64
  %v1987 = vpop.permute.xlu0 %1986
  %v1988 = vsel %vm1891, %v1985, %v1987
  %1990 = vst [vmem:[#allocation3 + $0x90] sm:$0xff] %v1988
  %v1991 = vld [vmem:[#allocation2 + $0x28] sm:$0xff]
  %v1992 = vunpack.c.l.bf16 %v1991
  %v1993 = vunpack.c.h.bf16 %v1991
  %1996 = vrot.lane.b32.xlu0 %v1992, 64
  %v1997 = vpop.permute.xlu0 %1996
  %1998 = vrot.lane.b32.xlu0 %v1993, 64
  %v1999 = vpop.permute.xlu0 %1998
  %v2000 = vsel %vm1891, %v1997, %v1999
  %2002 = vst [vmem:[#allocation3 + $0x98] sm:$0xff] %v2000
  %v2003 = vld [vmem:[#allocation2 + $0x14] sm:$0xf]
  %v2004 = vunpack.c.l.bf16 %v2003
  %2005 = vst [vmem:[#allocation3 + $0xa0] sm:$0xff] %v2004
  %v2006 = vld [vmem:[#allocation2 + $0x1c] sm:$0xf]
  %v2007 = vunpack.c.l.bf16 %v2006
  %2008 = vst [vmem:[#allocation3 + $0xa8] sm:$0xff] %v2007
  %v2009 = vld [vmem:[#allocation2 + $0x24] sm:$0xf]
  %v2010 = vunpack.c.l.bf16 %v2009
  %2011 = vst [vmem:[#allocation3 + $0xb0] sm:$0xff] %v2010
  %v2012 = vld [vmem:[#allocation2 + $0x2c] sm:$0xf]
  %v2013 = vunpack.c.l.bf16 %v2012
  %2014 = vst [vmem:[#allocation3 + $0xb8] sm:$0xff] %v2013
  %v2015 = vld [vmem:[#allocation2 + $0x20] sm:$0xf]
  %v2016 = vunpack.c.l.bf16 %v2015
  %2017 = vst [vmem:[#allocation3 + $0xc0] sm:$0xff] %v2016
  %v2018 = vld [vmem:[#allocation2 + $0x28] sm:$0xf]
  %v2019 = vunpack.c.l.bf16 %v2018
  %2020 = vst [vmem:[#allocation3 + $0xc8] sm:$0xff] %v2019
  %v2021 = vld [vmem:[#allocation2 + $0x30] sm:$0xf]
  %v2022 = vunpack.c.l.bf16 %v2021
  %2023 = vst [vmem:[#allocation3 + $0xd0] sm:$0xff] %v2022
  %v2024 = vld [vmem:[#allocation2 + $0x38] sm:$0xf]
  %v2025 = vunpack.c.l.bf16 %v2024
  %2026 = vst [vmem:[#allocation3 + $0xd8] sm:$0xff] %v2025
  %v2027 = vld [vmem:[#allocation2 + $0x20] sm:$0xff]
  %v2028 = vunpack.c.l.bf16 %v2027
  %v2029 = vunpack.c.h.bf16 %v2027
  %2032 = vrot.lane.b32.xlu0 %v2028, 64
  %v2033 = vpop.permute.xlu0 %2032
  %2034 = vrot.lane.b32.xlu0 %v2029, 64
  %v2035 = vpop.permute.xlu0 %2034
  %v2036 = vsel %vm1891, %v2033, %v2035
  %2038 = vst [vmem:[#allocation3 + $0xe0] sm:$0xff] %v2036
  %v2039 = vld [vmem:[#allocation2 + $0x28] sm:$0xff]
  %v2040 = vunpack.c.l.bf16 %v2039
  %v2041 = vunpack.c.h.bf16 %v2039
  %2044 = vrot.lane.b32.xlu0 %v2040, 64
  %v2045 = vpop.permute.xlu0 %2044
  %2046 = vrot.lane.b32.xlu0 %v2041, 64
  %v2047 = vpop.permute.xlu0 %2046
  %v2048 = vsel %vm1891, %v2045, %v2047
  %2050 = vst [vmem:[#allocation3 + $0xe8] sm:$0xff] %v2048
  %v2051 = vld [vmem:[#allocation2 + $0x30] sm:$0xff]
  %v2052 = vunpack.c.l.bf16 %v2051
  %v2053 = vunpack.c.h.bf16 %v2051
  %2056 = vrot.lane.b32.xlu0 %v2052, 64
  %v2057 = vpop.permute.xlu0 %2056
  %2058 = vrot.lane.b32.xlu0 %v2053, 64
  %v2059 = vpop.permute.xlu0 %2058
  %v2060 = vsel %vm1891, %v2057, %v2059
  %2062 = vst [vmem:[#allocation3 + $0xf0] sm:$0xff] %v2060
  %v2063 = vld [vmem:[#allocation2 + $0x38] sm:$0xff]
  %v2064 = vunpack.c.l.bf16 %v2063
  %v2065 = vunpack.c.h.bf16 %v2063
  %2068 = vrot.lane.b32.xlu0 %v2064, 64
  %v2069 = vpop.permute.xlu0 %2068
  %2070 = vrot.lane.b32.xlu0 %v2065, 64
  %v2071 = vpop.permute.xlu0 %2070
  %v2072 = vsel %vm1891, %v2069, %v2071
  %2074 = vst [vmem:[#allocation3 + $0xf8] sm:$0xff] %v2072
  %v2075 = vld [vmem:[#allocation2 + $0x24] sm:$0xf]
  %v2076 = vunpack.c.l.bf16 %v2075
  %2077 = vst [vmem:[#allocation3 + $0x100] sm:$0xff] %v2076
  %v2078 = vld [vmem:[#allocation2 + $0x2c] sm:$0xf]
  %v2079 = vunpack.c.l.bf16 %v2078
  %2080 = vst [vmem:[#allocation3 + $0x108] sm:$0xff] %v2079
  %v2081 = vld [vmem:[#allocation2 + $0x34] sm:$0xf]
  %v2082 = vunpack.c.l.bf16 %v2081
  %2083 = vst [vmem:[#allocation3 + $0x110] sm:$0xff] %v2082
  %v2084 = vld [vmem:[#allocation2 + $0x3c] sm:$0xf]
  %v2085 = vunpack.c.l.bf16 %v2084
  %2086 = vst [vmem:[#allocation3 + $0x118] sm:$0xff] %v2085
  %v2087 = vld [vmem:[#allocation3] sm:$0xff]
  %v2088 = vld [vmem:[#allocation3 + $0x8] sm:$0xff]
  %v2089 = vld [vmem:[#allocation3 + $0x10] sm:$0xff]
  %v2090 = vld [vmem:[#allocation3 + $0x18] sm:$0xff]
  %v2091 = vld [vmem:[#allocation3 + $0x20] sm:$0xff]
  %v2092 = vld [vmem:[#allocation3 + $0x28] sm:$0xff]
  %v2093 = vld [vmem:[#allocation3 + $0x30] sm:$0xff]
  %v2094 = vld [vmem:[#allocation3 + $0x38] sm:$0xff]
  %v2095 = vld [vmem:[#allocation3 + $0x40] sm:$0xff]
  %v2096 = vld [vmem:[#allocation3 + $0x48] sm:$0xff]
  %v2097 = vld [vmem:[#allocation3 + $0x50] sm:$0xff]
  %v2098 = vld [vmem:[#allocation3 + $0x58] sm:$0xff]
  %v2099 = vld [vmem:[#allocation3 + $0x60] sm:$0xff]
  %v2100 = vld [vmem:[#allocation3 + $0x68] sm:$0xff]
  %v2101 = vld [vmem:[#allocation3 + $0x70] sm:$0xff]
  %v2102 = vld [vmem:[#allocation3 + $0x78] sm:$0xff]
  %v2103 = vld [vmem:[#allocation3 + $0x80] sm:$0xff]
  %v2104 = vld [vmem:[#allocation3 + $0x88] sm:$0xff]
  %v2105 = vld [vmem:[#allocation3 + $0x90] sm:$0xff]
  %v2106 = vld [vmem:[#allocation3 + $0x98] sm:$0xff]
  %v2107 = vld [vmem:[#allocation3 + $0xa0] sm:$0xff]
  %v2108 = vld [vmem:[#allocation3 + $0xa8] sm:$0xff]
  %v2109 = vld [vmem:[#allocation3 + $0xb0] sm:$0xff]
  %v2110 = vld [vmem:[#allocation3 + $0xb8] sm:$0xff]
  %v2111 = vld [vmem:[#allocation3 + $0xc0] sm:$0xff]
  %v2112 = vld [vmem:[#allocation3 + $0xc8] sm:$0xff]
  %v2113 = vld [vmem:[#allocation3 + $0xd0] sm:$0xff]
  %v2114 = vld [vmem:[#allocation3 + $0xd8] sm:$0xff]
  %v2115 = vld [vmem:[#allocation3 + $0xe0] sm:$0xff]
  %v2116 = vld [vmem:[#allocation3 + $0xe8] sm:$0xff]
  %v2117 = vld [vmem:[#allocation3 + $0xf0] sm:$0xff]
  %v2118 = vld [vmem:[#allocation3 + $0xf8] sm:$0xff]
  %v2119 = vld [vmem:[#allocation3 + $0x100] sm:$0xff]
  %v2120 = vld [vmem:[#allocation3 + $0x108] sm:$0xff]
  %v2121 = vld [vmem:[#allocation3 + $0x110] sm:$0xff]
  %v2122 = vld [vmem:[#allocation3 + $0x118] sm:$0xff]
  %v2123 = vpack.c.bf16 %v2091, %v2087
  %v2124 = vpack.c.bf16 %v2092, %v2088
  %v2125 = vpack.c.bf16 %v2093, %v2089
  %v2126 = vpack.c.bf16 %v2094, %v2090
  %v2127 = vpack.c.bf16 %v2099, %v2095
  %v2128 = vpack.c.bf16 %v2100, %v2096
  %v2129 = vpack.c.bf16 %v2101, %v2097
  %v2130 = vpack.c.bf16 %v2102, %v2098
  %v2131 = vpack.c.bf16 %v2107, %v2103
  %v2132 = vpack.c.bf16 %v2108, %v2104
  %v2133 = vpack.c.bf16 %v2109, %v2105
  %v2134 = vpack.c.bf16 %v2110, %v2106
  %v2135 = vpack.c.bf16 %v2115, %v2111
  %v2136 = vpack.c.bf16 %v2116, %v2112
  %v2137 = vpack.c.bf16 %v2117, %v2113
  %v2138 = vpack.c.bf16 %v2118, %v2114
  %v2139 = vpack.c.bf16 %v2119, %v2119
  %v2140 = vpack.c.bf16 %v2120, %v2120
  %v2141 = vpack.c.bf16 %v2121, %v2121
  %v2142 = vpack.c.bf16 %v2122, %v2122
  %v2143 = vld [vmem:[%s3] sm:$0xf]
  %v2144 = vld [vmem:[%s3 + $0x4] sm:$0xf]
  %v2145 = vld [vmem:[%s3 + $0x8] sm:$0xf]
  %v2146 = vld [vmem:[%s3 + $0xc] sm:$0xf]
  %v2147 = vld [vmem:[%s3 + $0x10] sm:$0xf]
  %v2148 = vld [vmem:[%s3 + $0x14] sm:$0xf]
  %v2149 = vld [vmem:[%s3 + $0x18] sm:$0xf]
  %v2150 = vld [vmem:[%s3 + $0x1c] sm:$0xf]
  %v2151 = vld [vmem:[%s3 + $0x20] sm:$0xf]
  %v2152 = vld [vmem:[%s3 + $0x24] sm:$0xf]
  %v2153 = vld [vmem:[%s3 + $0x28] sm:$0xf]
  %v2154 = vld [vmem:[%s3 + $0x2c] sm:$0xf]
  %v2155 = vld [vmem:[%s3 + $0x30] sm:$0xf]
  %v2156 = vld [vmem:[%s3 + $0x34] sm:$0xf]
  %v2157 = vld [vmem:[%s3 + $0x38] sm:$0xf]
  %v2158 = vld [vmem:[%s3 + $0x3c] sm:$0xf]
  %v2159 = vld [vmem:[%s3 + $0x40] sm:$0xf]
  %v2160 = vld [vmem:[%s3 + $0x44] sm:$0xf]
  %v2161 = vld [vmem:[%s3 + $0x48] sm:$0xf]
  %v2162 = vld [vmem:[%s3 + $0x4c] sm:$0xf]
  %v2163 = vld [vmem:[%s3 + $0x50] sm:$0xf]
  %v2164 = vld [vmem:[%s3 + $0x54] sm:$0xf]
  %v2165 = vld [vmem:[%s3 + $0x58] sm:$0xf]
  %v2166 = vld [vmem:[%s3 + $0x5c] sm:$0xf]
  %v2167 = vld [vmem:[%s3 + $0x60] sm:$0xf]
  %v2168 = vld [vmem:[%s3 + $0x64] sm:$0xf]
  %v2169 = vld [vmem:[%s3 + $0x68] sm:$0xf]
  %v2170 = vld [vmem:[%s3 + $0x6c] sm:$0xf]
  %v2171 = vld [vmem:[%s3 + $0x70] sm:$0xf]
  %v2172 = vld [vmem:[%s3 + $0x74] sm:$0xf]
  %v2173 = vld [vmem:[%s3 + $0x78] sm:$0xf]
  %v2174 = vld [vmem:[%s3 + $0x7c] sm:$0xf]
  %v2175 = vld [vmem:[%s3 + $0x80] sm:$0xf]
  %v2176 = vld [vmem:[%s3 + $0x84] sm:$0xf]
  %v2177 = vld [vmem:[%s3 + $0x88] sm:$0xf]
  %v2178 = vld [vmem:[%s3 + $0x8c] sm:$0xf]
  %v2179 = vld [vmem:[%s3 + $0x90] sm:$0xf]
  %v2180 = vld [vmem:[%s3 + $0x94] sm:$0xf]
  %v2181 = vld [vmem:[%s3 + $0x98] sm:$0xf]
  %v2182 = vld [vmem:[%s3 + $0x9c] sm:$0xf]
  %v2183 = vld [vmem:[%s3 + $0xa0] sm:$0xf]
  %v2184 = vld [vmem:[%s3 + $0xa4] sm:$0xf]
  %v2185 = vld [vmem:[%s3 + $0xa8] sm:$0xf]
  %v2186 = vld [vmem:[%s3 + $0xac] sm:$0xf]
  %v2187 = vld [vmem:[%s3 + $0xb0] sm:$0xf]
  %v2188 = vld [vmem:[%s3 + $0xb4] sm:$0xf]
  %v2189 = vld [vmem:[%s3 + $0xb8] sm:$0xf]
  %v2190 = vld [vmem:[%s3 + $0xbc] sm:$0xf]
  %v2191 = vld [vmem:[%s3 + $0xc0] sm:$0xf]
  %v2192 = vld [vmem:[%s3 + $0xc4] sm:$0xf]
  %v2193 = vld [vmem:[%s3 + $0xc8] sm:$0xf]
  %v2194 = vld [vmem:[%s3 + $0xcc] sm:$0xf]
  %v2195 = vld [vmem:[%s3 + $0xd0] sm:$0xf]
  %v2196 = vld [vmem:[%s3 + $0xd4] sm:$0xf]
  %v2197 = vld [vmem:[%s3 + $0xd8] sm:$0xf]
  %v2198 = vld [vmem:[%s3 + $0xdc] sm:$0xf]
  %v2199 = vld [vmem:[%s3 + $0xe0] sm:$0xf]
  %v2200 = vld [vmem:[%s3 + $0xe4] sm:$0xf]
  %v2201 = vld [vmem:[%s3 + $0xe8] sm:$0xf]
  %v2202 = vld [vmem:[%s3 + $0xec] sm:$0xf]
  %v2203 = vld [vmem:[%s3 + $0xf0] sm:$0xf]
  %v2204 = vld [vmem:[%s3 + $0xf4] sm:$0xf]
  %v2205 = vld [vmem:[%s3 + $0xf8] sm:$0xf]
  %v2206 = vld [vmem:[%s3 + $0xfc] sm:$0xf]
  %v2207 = vld [vmem:[%s4] sm:$0x1]
  %v2209 = vlaneseq
  %v2210 = vshrl.u32 %v2209, 7
  %v2211 = vsub.s32 0, %v2210
  %v2212 = vrot.slane %v2207, %v2211
  %v2278 = vunpack.c.l.b16 %v2143
  %v2279 = vunpack.c.l.b16 %v2144
  %v2280 = vunpack.c.l.b16 %v2145
  %v2281 = vunpack.c.l.b16 %v2146
  %v2282 = vunpack.c.l.b16 %v2147
  %v2283 = vunpack.c.l.b16 %v2148
  %v2284 = vunpack.c.l.b16 %v2149
  %v2285 = vunpack.c.l.b16 %v2150
  %v2286 = vunpack.c.l.b16 %v2151
  %v2287 = vunpack.c.l.b16 %v2152
  %v2288 = vunpack.c.l.b16 %v2153
  %v2289 = vunpack.c.l.b16 %v2154
  %v2290 = vunpack.c.l.b16 %v2155
  %v2291 = vunpack.c.l.b16 %v2156
  %v2292 = vunpack.c.l.b16 %v2157
  %v2293 = vunpack.c.l.b16 %v2158
  %v2294 = vunpack.c.l.b16 %v2159
  %v2295 = vunpack.c.l.b16 %v2160
  %v2296 = vunpack.c.l.b16 %v2161
  %v2297 = vunpack.c.l.b16 %v2162
  %v2298 = vunpack.c.l.b16 %v2163
  %v2299 = vunpack.c.l.b16 %v2164
  %v2300 = vunpack.c.l.b16 %v2165
  %v2301 = vunpack.c.l.b16 %v2166
  %v2302 = vunpack.c.l.b16 %v2167
  %v2303 = vunpack.c.l.b16 %v2168
  %v2304 = vunpack.c.l.b16 %v2169
  %v2305 = vunpack.c.l.b16 %v2170
  %v2306 = vunpack.c.l.b16 %v2171
  %v2307 = vunpack.c.l.b16 %v2172
  %v2308 = vunpack.c.l.b16 %v2173
  %v2309 = vunpack.c.l.b16 %v2174
  %v2310 = vunpack.c.l.b16 %v2175
  %v2311 = vunpack.c.l.b16 %v2176
  %v2312 = vunpack.c.l.b16 %v2177
  %v2313 = vunpack.c.l.b16 %v2178
  %v2314 = vunpack.c.l.b16 %v2179
  %v2315 = vunpack.c.l.b16 %v2180
  %v2316 = vunpack.c.l.b16 %v2181
  %v2317 = vunpack.c.l.b16 %v2182
  %v2318 = vunpack.c.l.b16 %v2183
  %v2319 = vunpack.c.l.b16 %v2184
  %v2320 = vunpack.c.l.b16 %v2185
  %v2321 = vunpack.c.l.b16 %v2186
  %v2322 = vunpack.c.l.b16 %v2187
  %v2323 = vunpack.c.l.b16 %v2188
  %v2324 = vunpack.c.l.b16 %v2189
  %v2325 = vunpack.c.l.b16 %v2190
  %v2326 = vunpack.c.l.b16 %v2191
  %v2327 = vunpack.c.l.b16 %v2192
  %v2328 = vunpack.c.l.b16 %v2193
  %v2329 = vunpack.c.l.b16 %v2194
  %v2330 = vunpack.c.l.b16 %v2195
  %v2331 = vunpack.c.l.b16 %v2196
  %v2332 = vunpack.c.l.b16 %v2197
  %v2333 = vunpack.c.l.b16 %v2198
  %v2334 = vunpack.c.l.b16 %v2199
  %v2335 = vunpack.c.l.b16 %v2200
  %v2336 = vunpack.c.l.b16 %v2201
  %v2337 = vunpack.c.l.b16 %v2202
  %v2338 = vunpack.c.l.b16 %v2203
  %v2339 = vunpack.c.l.b16 %v2204
  %v2340 = vunpack.c.l.b16 %v2205
  %v2341 = vunpack.c.l.b16 %v2206
  %v2342 = vpack.c.b16 %v2279, %v2278
  %v2343 = vpack.c.b16 %v2281, %v2280
  %v2344 = vpack.c.b16 %v2283, %v2282
  %v2345 = vpack.c.b16 %v2285, %v2284
  %v2346 = vpack.c.b16 %v2287, %v2286
  %v2347 = vpack.c.b16 %v2289, %v2288
  %v2348 = vpack.c.b16 %v2291, %v2290
  %v2349 = vpack.c.b16 %v2293, %v2292
  %v2350 = vpack.c.b16 %v2295, %v2294
  %v2351 = vpack.c.b16 %v2297, %v2296
  %v2352 = vpack.c.b16 %v2299, %v2298
  %v2353 = vpack.c.b16 %v2301, %v2300
  %v2354 = vpack.c.b16 %v2303, %v2302
  %v2355 = vpack.c.b16 %v2305, %v2304
  %v2356 = vpack.c.b16 %v2307, %v2306
  %v2357 = vpack.c.b16 %v2309, %v2308
  %v2358 = vpack.c.b16 %v2311, %v2310
  %v2359 = vpack.c.b16 %v2313, %v2312
  %v2360 = vpack.c.b16 %v2315, %v2314
  %v2361 = vpack.c.b16 %v2317, %v2316
  %v2362 = vpack.c.b16 %v2319, %v2318
  %v2363 = vpack.c.b16 %v2321, %v2320
  %v2364 = vpack.c.b16 %v2323, %v2322
  %v2365 = vpack.c.b16 %v2325, %v2324
  %v2366 = vpack.c.b16 %v2327, %v2326
  %v2367 = vpack.c.b16 %v2329, %v2328
  %v2368 = vpack.c.b16 %v2331, %v2330
  %v2369 = vpack.c.b16 %v2333, %v2332
  %v2370 = vpack.c.b16 %v2335, %v2334
  %v2371 = vpack.c.b16 %v2337, %v2336
  %v2372 = vpack.c.b16 %v2339, %v2338
  %v2373 = vpack.c.b16 %v2341, %v2340
  %2406 = vmatprep.subr.bf16.mxu0 0
  %2407 = vmatpush1.bf16.msra.mxu0 %v2349
  %2408 = vmatprep.subr.bf16.mxu0 0
  %2409 = vmatpush1.bf16.msra.mxu0 %v2348
  %2410 = vmatprep.subr.bf16.mxu0 0
  %2411 = vmatpush1.bf16.msra.mxu0 %v2347
  %2412 = vmatprep.subr.bf16.mxu0 0
  %2413 = vmatpush1.bf16.msra.mxu0 %v2346
  %2414 = vmatprep.subr.bf16.mxu0 0
  %2415 = vmatpush1.bf16.msra.mxu0 %v2345
  %2416 = vmatprep.subr.bf16.mxu0 0
  %2417 = vmatpush1.bf16.msra.mxu0 %v2344
  %2418 = vmatprep.subr.bf16.mxu0 0
  %2419 = vmatpush1.bf16.msra.mxu0 %v2343
  %2420 = vmatprep.subr.bf16.mxu0 0
  %2421 = vmatpush1.bf16.msra.mxu0 %v2342
  %2422 = vmatprep.subr.bf16.mxu0 0
  %2423 = vmatpush2.bf16.msra.mxu0 %v2357
  %2424 = vmatprep.subr.bf16.mxu0 0
  %2425 = vmatpush2.bf16.msra.mxu0 %v2356
  %2426 = vmatprep.subr.bf16.mxu0 0
  %2427 = vmatpush2.bf16.msra.mxu0 %v2355
  %2428 = vmatprep.subr.bf16.mxu0 0
  %2429 = vmatpush2.bf16.msra.mxu0 %v2354
  %2430 = vmatprep.subr.bf16.mxu0 0
  %2431 = vmatpush2.bf16.msra.mxu0 %v2353
  %2432 = vmatprep.subr.bf16.mxu0 0
  %2433 = vmatpush2.bf16.msra.mxu0 %v2352
  %2434 = vmatprep.subr.bf16.mxu0 0
  %2435 = vmatpush2.bf16.msra.mxu0 %v2351
  %2436 = vmatprep.subr.bf16.mxu0 0
  %2437 = vmatpush2.bf16.msra.mxu0 %v2350
  %2438 = vmatprep.mubr.bf16.mxu0 %v2124
  %2439 = vmatmul.mubr.bf16.gmra.mxu0 %v2123
  %v2440 = vpop.f32.mrf.mxu0
  %v2441 = vadd.f32 %v2212, %v2440
  %v2442 = vpop.f32.mrf.mxu0
  %v2443 = vpop.f32.mrf.mxu0
  %v2444 = vadd.f32 %v2212, %v2443
  %v2445 = vpop.f32.mrf.mxu0
  %2446 = vmatprep.mubr.bf16.mxu0 %v2128
  %2447 = vmatmul.mubr.bf16.gmra.mxu0 %v2127
  %v2448 = vpop.f32.mrf.mxu0
  %v2449 = vadd.f32 %v2212, %v2448
  %v2450 = vpop.f32.mrf.mxu0
  %v2451 = vpop.f32.mrf.mxu0
  %v2452 = vadd.f32 %v2212, %v2451
  %v2453 = vpop.f32.mrf.mxu0
  %2454 = vmatprep.mubr.bf16.mxu0 %v2132
  %2455 = vmatmul.mubr.bf16.gmra.mxu0 %v2131
  %v2456 = vpop.f32.mrf.mxu0
  %v2457 = vadd.f32 %v2212, %v2456
  %v2458 = vpop.f32.mrf.mxu0
  %v2459 = vpop.f32.mrf.mxu0
  %v2460 = vadd.f32 %v2212, %v2459
  %v2461 = vpop.f32.mrf.mxu0
  %2462 = vmatprep.mubr.bf16.mxu0 %v2136
  %2463 = vmatmul.mubr.bf16.gmra.mxu0 %v2135
  %v2464 = vpop.f32.mrf.mxu0
  %v2465 = vadd.f32 %v2212, %v2464
  %v2466 = vpop.f32.mrf.mxu0
  %v2467 = vpop.f32.mrf.mxu0
  %v2468 = vadd.f32 %v2212, %v2467
  %v2469 = vpop.f32.mrf.mxu0
  %2470 = vmatprep.mubr.bf16.mxu0 %v2140
  %2471 = vmatmul.mubr.bf16.gmra.mxu0 %v2139
  %v2472 = vpop.f32.mrf.mxu0
  %v2473 = vadd.f32 %v2212, %v2472
  %v2474 = vpop.f32.mrf.mxu0
  %v2475 = vpop.f32.mrf.mxu0
  %v2476 = vpop.f32.mrf.mxu0
  %2477 = vdwg.mxu0
  %2478 = vmatprep.subr.bf16.mxu0 0
  %2479 = vmatpush1.bf16.msra.mxu0 %v2365
  %2480 = vmatprep.subr.bf16.mxu0 0
  %2481 = vmatpush1.bf16.msra.mxu0 %v2364
  %2482 = vmatprep.subr.bf16.mxu0 0
  %2483 = vmatpush1.bf16.msra.mxu0 %v2363
  %2484 = vmatprep.subr.bf16.mxu0 0
  %2485 = vmatpush1.bf16.msra.mxu0 %v2362
  %2486 = vmatprep.subr.bf16.mxu0 0
  %2487 = vmatpush1.bf16.msra.mxu0 %v2361
  %2488 = vmatprep.subr.bf16.mxu0 0
  %2489 = vmatpush1.bf16.msra.mxu0 %v2360
  %2490 = vmatprep.subr.bf16.mxu0 0
  %2491 = vmatpush1.bf16.msra.mxu0 %v2359
  %2492 = vmatprep.subr.bf16.mxu0 0
  %2493 = vmatpush1.bf16.msra.mxu0 %v2358
  %2494 = vmatprep.subr.bf16.mxu0 0
  %2495 = vmatpush2.bf16.msra.mxu0 %v2373
  %2496 = vmatprep.subr.bf16.mxu0 0
  %2497 = vmatpush2.bf16.msra.mxu0 %v2372
  %2498 = vmatprep.subr.bf16.mxu0 0
  %2499 = vmatpush2.bf16.msra.mxu0 %v2371
  %2500 = vmatprep.subr.bf16.mxu0 0
  %2501 = vmatpush2.bf16.msra.mxu0 %v2370
  %2502 = vmatprep.subr.bf16.mxu0 0
  %2503 = vmatpush2.bf16.msra.mxu0 %v2369
  %2504 = vmatprep.subr.bf16.mxu0 0
  %2505 = vmatpush2.bf16.msra.mxu0 %v2368
  %2506 = vmatprep.subr.bf16.mxu0 0
  %2507 = vmatpush2.bf16.msra.mxu0 %v2367
  %2508 = vmatprep.subr.bf16.mxu0 0
  %2509 = vmatpush2.bf16.msra.mxu0 %v2366
  %2510 = vmatprep.mubr.bf16.mxu0 %v2126
  %2511 = vmatmul.mubr.bf16.gmra.mxu0 %v2125
  %v2512 = vpop.f32.mrf.mxu0
  %v2513 = vadd.f32 %v2441, %v2512
  %v2514 = vpop.f32.mrf.mxu0
  %v2515 = vpop.f32.mrf.mxu0
  %v2516 = vadd.f32 %v2444, %v2515
  %v2517 = vpop.f32.mrf.mxu0
  %2518 = vmatprep.mubr.bf16.mxu0 %v2130
  %2519 = vmatmul.mubr.bf16.gmra.mxu0 %v2129
  %v2520 = vpop.f32.mrf.mxu0
  %v2521 = vadd.f32 %v2449, %v2520
  %v2522 = vpop.f32.mrf.mxu0
  %v2523 = vpop.f32.mrf.mxu0
  %v2524 = vadd.f32 %v2452, %v2523
  %v2525 = vpop.f32.mrf.mxu0
  %2526 = vmatprep.mubr.bf16.mxu0 %v2134
  %2527 = vmatmul.mubr.bf16.gmra.mxu0 %v2133
  %v2528 = vpop.f32.mrf.mxu0
  %v2529 = vadd.f32 %v2457, %v2528
  %v2530 = vpop.f32.mrf.mxu0
  %v2531 = vpop.f32.mrf.mxu0
  %v2532 = vadd.f32 %v2460, %v2531
  %v2533 = vpop.f32.mrf.mxu0
  %2534 = vmatprep.mubr.bf16.mxu0 %v2138
  %2535 = vmatmul.mubr.bf16.gmra.mxu0 %v2137
  %v2536 = vpop.f32.mrf.mxu0
  %v2537 = vadd.f32 %v2465, %v2536
  %v2538 = vpop.f32.mrf.mxu0
  %v2539 = vpop.f32.mrf.mxu0
  %v2540 = vadd.f32 %v2468, %v2539
  %v2541 = vpop.f32.mrf.mxu0
  %2542 = vmatprep.mubr.bf16.mxu0 %v2142
  %2543 = vmatmul.mubr.bf16.gmra.mxu0 %v2141
  %v2544 = vpop.f32.mrf.mxu0
  %v2545 = vadd.f32 %v2473, %v2544
  %v2546 = vpop.f32.mrf.mxu0
  %v2547 = vpop.f32.mrf.mxu0
  %v2548 = vpop.f32.mrf.mxu0
  %2549 = vdwg.mxu0
  %v2550 = vmax.f32 %v2513, 0.0
  %v2551 = vmax.f32 %v2516, 0.0
  %v2552 = vmax.f32 %v2521, 0.0
  %v2553 = vmax.f32 %v2524, 0.0
  %v2554 = vmax.f32 %v2529, 0.0
  %v2555 = vmax.f32 %v2532, 0.0
  %v2556 = vmax.f32 %v2537, 0.0
  %v2557 = vmax.f32 %v2540, 0.0
  %v2558 = vmax.f32 %v2545, 0.0
  %v2559 = vpack.c.bf16 %v2550, %v2550
  %vm2560 = vcmask 519168
  %2561 = vst.msk [vmem:[#allocation4] sm:$0xf] %vm2560, %v2559
  %v2562 = vpack.c.bf16 %v2551, %v2551
  %v2564 = vunpack.c.l.b16 %v2562
  %v2565 = vpack.c.b16 %v2564, %v2564
  %2566 = vrot.lane.b32.xlu0 %v2565, 64
  %v2567 = vpop.permute.xlu0 %2566
  %vm2569 = vcmask 1043968
  %2570 = vst.msk [vmem:[#allocation4] sm:$0xf] %vm2569, %v2567
  %v2571 = vpack.c.bf16 %v2552, %v2552
  %2572 = vst.msk [vmem:[#allocation4 + $0x4] sm:$0xf] %vm2560, %v2571
  %v2573 = vpack.c.bf16 %v2553, %v2553
  %v2575 = vunpack.c.l.b16 %v2573
  %v2576 = vpack.c.b16 %v2575, %v2575
  %2577 = vrot.lane.b32.xlu0 %v2576, 64
  %v2578 = vpop.permute.xlu0 %2577
  %2580 = vst.msk [vmem:[#allocation4 + $0x4] sm:$0xf] %vm2569, %v2578
  %v2581 = vpack.c.bf16 %v2554, %v2554
  %2582 = vst.msk [vmem:[#allocation4 + $0x8] sm:$0xf] %vm2560, %v2581
  %v2583 = vpack.c.bf16 %v2555, %v2555
  %v2585 = vunpack.c.l.b16 %v2583
  %v2586 = vpack.c.b16 %v2585, %v2585
  %2587 = vrot.lane.b32.xlu0 %v2586, 64
  %v2588 = vpop.permute.xlu0 %2587
  %2590 = vst.msk [vmem:[#allocation4 + $0x8] sm:$0xf] %vm2569, %v2588
  %v2591 = vpack.c.bf16 %v2556, %v2556
  %2592 = vst.msk [vmem:[#allocation4 + $0xc] sm:$0xf] %vm2560, %v2591
  %v2593 = vpack.c.bf16 %v2557, %v2557
  %v2595 = vunpack.c.l.b16 %v2593
  %v2596 = vpack.c.b16 %v2595, %v2595
  %2597 = vrot.lane.b32.xlu0 %v2596, 64
  %v2598 = vpop.permute.xlu0 %2597
  %2600 = vst.msk [vmem:[#allocation4 + $0xc] sm:$0xf] %vm2569, %v2598
  %v2601 = vpack.c.bf16 %v2558, %v2558
  %2602 = vst.msk [vmem:[#allocation4 + $0x10] sm:$0xf] %vm2560, %v2601
  %v2603 = vld [vmem:[#allocation4] sm:$0xff]
  %v2604 = vld [vmem:[#allocation4 + $0x8] sm:$0xff]
  %v2605 = vld [vmem:[#allocation4 + $0x10] sm:$0xf]
  %v2606 = vld [vmem:[%s5] sm:$0xf]
  %v2607 = vld [vmem:[%s5 + $0x4] sm:$0xf]
  %v2608 = vld [vmem:[%s5 + $0x8] sm:$0xf]
  %v2609 = vld [vmem:[%s5 + $0xc] sm:$0xf]
  %v2610 = vld [vmem:[%s5 + $0x10] sm:$0xf]
  %v2611 = vld [vmem:[%s5 + $0x14] sm:$0xf]
  %v2612 = vld [vmem:[%s5 + $0x18] sm:$0xf]
  %v2613 = vld [vmem:[%s5 + $0x1c] sm:$0xf]
  %v2614 = vld [vmem:[%s5 + $0x20] sm:$0xf]
  %v2615 = vld [vmem:[%s5 + $0x24] sm:$0xf]
  %v2616 = vld [vmem:[%s5 + $0x28] sm:$0xf]
  %v2617 = vld [vmem:[%s5 + $0x2c] sm:$0xf]
  %v2618 = vld [vmem:[%s5 + $0x30] sm:$0xf]
  %v2619 = vld [vmem:[%s5 + $0x34] sm:$0xf]
  %v2620 = vld [vmem:[%s5 + $0x38] sm:$0xf]
  %v2621 = vld [vmem:[%s5 + $0x3c] sm:$0xf]
  %v2622 = vld [vmem:[%s5 + $0x40] sm:$0xf]
  %v2623 = vld [vmem:[%s5 + $0x44] sm:$0xf]
  %v2624 = vld [vmem:[%s5 + $0x48] sm:$0xf]
  %v2625 = vld [vmem:[%s5 + $0x4c] sm:$0xf]
  %v2626 = vld [vmem:[%s5 + $0x50] sm:$0xf]
  %v2627 = vld [vmem:[%s5 + $0x54] sm:$0xf]
  %v2628 = vld [vmem:[%s5 + $0x58] sm:$0xf]
  %v2629 = vld [vmem:[%s5 + $0x5c] sm:$0xf]
  %v2630 = vld [vmem:[%s5 + $0x60] sm:$0xf]
  %v2631 = vld [vmem:[%s5 + $0x64] sm:$0xf]
  %v2632 = vld [vmem:[%s5 + $0x68] sm:$0xf]
  %v2633 = vld [vmem:[%s5 + $0x6c] sm:$0xf]
  %v2634 = vld [vmem:[%s5 + $0x70] sm:$0xf]
  %v2635 = vld [vmem:[%s5 + $0x74] sm:$0xf]
  %v2636 = vld [vmem:[%s5 + $0x78] sm:$0xf]
  %v2637 = vld [vmem:[%s5 + $0x7c] sm:$0xf]
  %v2638 = vld [vmem:[%s5 + $0x80] sm:$0xf]
  %v2639 = vld [vmem:[%s5 + $0x84] sm:$0xf]
  %v2640 = vld [vmem:[%s5 + $0x88] sm:$0xf]
  %v2641 = vld [vmem:[%s5 + $0x8c] sm:$0xf]
  %v2642 = vld [vmem:[%s5 + $0x90] sm:$0xf]
  %v2643 = vld [vmem:[%s5 + $0x94] sm:$0xf]
  %v2644 = vld [vmem:[%s5 + $0x98] sm:$0xf]
  %v2645 = vld [vmem:[%s5 + $0x9c] sm:$0xf]
  %v2646 = vld [vmem:[%s5 + $0xa0] sm:$0xf]
  %v2647 = vld [vmem:[%s5 + $0xa4] sm:$0xf]
  %v2648 = vld [vmem:[%s5 + $0xa8] sm:$0xf]
  %v2649 = vld [vmem:[%s5 + $0xac] sm:$0xf]
  %v2650 = vld [vmem:[%s5 + $0xb0] sm:$0xf]
  %v2651 = vld [vmem:[%s5 + $0xb4] sm:$0xf]
  %v2652 = vld [vmem:[%s5 + $0xb8] sm:$0xf]
  %v2653 = vld [vmem:[%s5 + $0xbc] sm:$0xf]
  %v2654 = vld [vmem:[%s5 + $0xc0] sm:$0xf]
  %v2655 = vld [vmem:[%s5 + $0xc4] sm:$0xf]
  %v2656 = vld [vmem:[%s5 + $0xc8] sm:$0xf]
  %v2657 = vld [vmem:[%s5 + $0xcc] sm:$0xf]
  %v2658 = vld [vmem:[%s5 + $0xd0] sm:$0xf]
  %v2659 = vld [vmem:[%s5 + $0xd4] sm:$0xf]
  %v2660 = vld [vmem:[%s5 + $0xd8] sm:$0xf]
  %v2661 = vld [vmem:[%s5 + $0xdc] sm:$0xf]
  %v2662 = vld [vmem:[%s5 + $0xe0] sm:$0xf]
  %v2663 = vld [vmem:[%s5 + $0xe4] sm:$0xf]
  %v2664 = vld [vmem:[%s5 + $0xe8] sm:$0xf]
  %v2665 = vld [vmem:[%s5 + $0xec] sm:$0xf]
  %v2666 = vld [vmem:[%s5 + $0xf0] sm:$0xf]
  %v2667 = vld [vmem:[%s5 + $0xf4] sm:$0xf]
  %v2668 = vld [vmem:[%s5 + $0xf8] sm:$0xf]
  %v2669 = vld [vmem:[%s5 + $0xfc] sm:$0xf]
  %v2670 = vld [vmem:[%s5 + $0x100] sm:$0xf]
  %v2671 = vld [vmem:[%s5 + $0x104] sm:$0xf]
  %v2672 = vld [vmem:[%s5 + $0x108] sm:$0xf]
  %v2673 = vld [vmem:[%s5 + $0x10c] sm:$0xf]
  %v2674 = vld [vmem:[%s5 + $0x110] sm:$0xf]
  %v2675 = vld [vmem:[%s5 + $0x114] sm:$0xf]
  %v2676 = vld [vmem:[%s5 + $0x118] sm:$0xf]
  %v2677 = vld [vmem:[%s5 + $0x11c] sm:$0xf]
  %v2678 = vld [vmem:[%s6] sm:$0x1]
  %v2680 = vlaneseq
  %v2681 = vshrl.u32 %v2680, 7
  %v2682 = vsub.s32 0, %v2681
  %v2683 = vrot.slane %v2678, %v2682
  %v2688 = vunpack.c.l.b16 %v2603
  %v2689 = vunpack.c.h.b16 %v2603
  %v2690 = vunpack.c.l.b16 %v2604
  %v2691 = vunpack.c.h.b16 %v2604
  %v2692 = vunpack.c.l.b16 %v2605
  %v2693 = vpack.c.b16 %v2688, %v2688
  %v2694 = vpack.c.b16 %v2689, %v2689
  %v2695 = vpack.c.b16 %v2690, %v2690
  %v2696 = vpack.c.b16 %v2691, %v2691
  %v2697 = vpack.c.b16 %v2692, %v2692
  %v2774 = vunpack.c.l.b16 %v2606
  %v2775 = vunpack.c.l.b16 %v2607
  %v2776 = vunpack.c.l.b16 %v2608
  %v2777 = vunpack.c.l.b16 %v2609
  %v2778 = vunpack.c.l.b16 %v2610
  %v2779 = vunpack.c.l.b16 %v2611
  %v2780 = vunpack.c.l.b16 %v2612
  %v2781 = vunpack.c.l.b16 %v2613
  %v2782 = vunpack.c.l.b16 %v2614
  %v2783 = vunpack.c.l.b16 %v2615
  %v2784 = vunpack.c.l.b16 %v2616
  %v2785 = vunpack.c.l.b16 %v2617
  %v2786 = vunpack.c.l.b16 %v2618
  %v2787 = vunpack.c.l.b16 %v2619
  %v2788 = vunpack.c.l.b16 %v2620
  %v2789 = vunpack.c.l.b16 %v2621
  %v2790 = vunpack.c.l.b16 %v2622
  %v2791 = vunpack.c.l.b16 %v2623
  %v2792 = vunpack.c.l.b16 %v2624
  %v2793 = vunpack.c.l.b16 %v2625
  %v2794 = vunpack.c.l.b16 %v2626
  %v2795 = vunpack.c.l.b16 %v2627
  %v2796 = vunpack.c.l.b16 %v2628
  %v2797 = vunpack.c.l.b16 %v2629
  %v2798 = vunpack.c.l.b16 %v2630
  %v2799 = vunpack.c.l.b16 %v2631
  %v2800 = vunpack.c.l.b16 %v2632
  %v2801 = vunpack.c.l.b16 %v2633
  %v2802 = vunpack.c.l.b16 %v2634
  %v2803 = vunpack.c.l.b16 %v2635
  %v2804 = vunpack.c.l.b16 %v2636
  %v2805 = vunpack.c.l.b16 %v2637
  %v2806 = vunpack.c.l.b16 %v2638
  %v2807 = vunpack.c.l.b16 %v2639
  %v2808 = vunpack.c.l.b16 %v2640
  %v2809 = vunpack.c.l.b16 %v2641
  %v2810 = vunpack.c.l.b16 %v2642
  %v2811 = vunpack.c.l.b16 %v2643
  %v2812 = vunpack.c.l.b16 %v2644
  %v2813 = vunpack.c.l.b16 %v2645
  %v2814 = vunpack.c.l.b16 %v2646
  %v2815 = vunpack.c.l.b16 %v2647
  %v2816 = vunpack.c.l.b16 %v2648
  %v2817 = vunpack.c.l.b16 %v2649
  %v2818 = vunpack.c.l.b16 %v2650
  %v2819 = vunpack.c.l.b16 %v2651
  %v2820 = vunpack.c.l.b16 %v2652
  %v2821 = vunpack.c.l.b16 %v2653
  %v2822 = vunpack.c.l.b16 %v2654
  %v2823 = vunpack.c.l.b16 %v2655
  %v2824 = vunpack.c.l.b16 %v2656
  %v2825 = vunpack.c.l.b16 %v2657
  %v2826 = vunpack.c.l.b16 %v2658
  %v2827 = vunpack.c.l.b16 %v2659
  %v2828 = vunpack.c.l.b16 %v2660
  %v2829 = vunpack.c.l.b16 %v2661
  %v2830 = vunpack.c.l.b16 %v2662
  %v2831 = vunpack.c.l.b16 %v2663
  %v2832 = vunpack.c.l.b16 %v2664
  %v2833 = vunpack.c.l.b16 %v2665
  %v2834 = vunpack.c.l.b16 %v2666
  %v2835 = vunpack.c.l.b16 %v2667
  %v2836 = vunpack.c.l.b16 %v2668
  %v2837 = vunpack.c.l.b16 %v2669
  %v2838 = vunpack.c.l.b16 %v2670
  %v2839 = vunpack.c.l.b16 %v2671
  %v2840 = vunpack.c.l.b16 %v2672
  %v2841 = vunpack.c.l.b16 %v2673
  %v2842 = vunpack.c.l.b16 %v2674
  %v2843 = vunpack.c.l.b16 %v2675
  %v2844 = vunpack.c.l.b16 %v2676
  %v2845 = vunpack.c.l.b16 %v2677
  %v2846 = vpack.c.b16 %v2775, %v2774
  %v2847 = vpack.c.b16 %v2777, %v2776
  %v2848 = vpack.c.b16 %v2779, %v2778
  %v2849 = vpack.c.b16 %v2781, %v2780
  %v2850 = vpack.c.b16 %v2783, %v2782
  %v2851 = vpack.c.b16 %v2785, %v2784
  %v2852 = vpack.c.b16 %v2787, %v2786
  %v2853 = vpack.c.b16 %v2789, %v2788
  %v2854 = vpack.c.b16 %v2791, %v2790
  %v2855 = vpack.c.b16 %v2793, %v2792
  %v2856 = vpack.c.b16 %v2795, %v2794
  %v2857 = vpack.c.b16 %v2797, %v2796
  %v2858 = vpack.c.b16 %v2799, %v2798
  %v2859 = vpack.c.b16 %v2801, %v2800
  %v2860 = vpack.c.b16 %v2803, %v2802
  %v2861 = vpack.c.b16 %v2805, %v2804
  %v2862 = vpack.c.b16 %v2807, %v2806
  %v2863 = vpack.c.b16 %v2809, %v2808
  %v2864 = vpack.c.b16 %v2811, %v2810
  %v2865 = vpack.c.b16 %v2813, %v2812
  %v2866 = vpack.c.b16 %v2815, %v2814
  %v2867 = vpack.c.b16 %v2817, %v2816
  %v2868 = vpack.c.b16 %v2819, %v2818
  %v2869 = vpack.c.b16 %v2821, %v2820
  %v2870 = vpack.c.b16 %v2823, %v2822
  %v2871 = vpack.c.b16 %v2825, %v2824
  %v2872 = vpack.c.b16 %v2827, %v2826
  %v2873 = vpack.c.b16 %v2829, %v2828
  %v2874 = vpack.c.b16 %v2831, %v2830
  %v2875 = vpack.c.b16 %v2833, %v2832
  %v2876 = vpack.c.b16 %v2835, %v2834
  %v2877 = vpack.c.b16 %v2837, %v2836
  %v2878 = vpack.c.b16 %v2839, %v2838
  %v2879 = vpack.c.b16 %v2841, %v2840
  %v2880 = vpack.c.b16 %v2843, %v2842
  %v2881 = vpack.c.b16 %v2845, %v2844
  %v2919 = vsel %vm1891, %v2697, 0
  %2921 = vmatprep.subr.bf16.mxu0 0
  %2922 = vmatpush1.bf16.msra.mxu0 %v2853
  %2923 = vmatprep.subr.bf16.mxu0 0
  %2924 = vmatpush1.bf16.msra.mxu0 %v2852
  %2925 = vmatprep.subr.bf16.mxu0 0
  %2926 = vmatpush1.bf16.msra.mxu0 %v2851
  %2927 = vmatprep.subr.bf16.mxu0 0
  %2928 = vmatpush1.bf16.msra.mxu0 %v2850
  %2929 = vmatprep.subr.bf16.mxu0 0
  %2930 = vmatpush1.bf16.msra.mxu0 %v2849
  %2931 = vmatprep.subr.bf16.mxu0 0
  %2932 = vmatpush1.bf16.msra.mxu0 %v2848
  %2933 = vmatprep.subr.bf16.mxu0 0
  %2934 = vmatpush1.bf16.msra.mxu0 %v2847
  %2935 = vmatprep.subr.bf16.mxu0 0
  %2936 = vmatpush1.bf16.msra.mxu0 %v2846
  %2937 = vmatprep.subr.bf16.mxu0 0
  %2938 = vmatpush2.bf16.msra.mxu0 %v2861
  %2939 = vmatprep.subr.bf16.mxu0 0
  %2940 = vmatpush2.bf16.msra.mxu0 %v2860
  %2941 = vmatprep.subr.bf16.mxu0 0
  %2942 = vmatpush2.bf16.msra.mxu0 %v2859
  %2943 = vmatprep.subr.bf16.mxu0 0
  %2944 = vmatpush2.bf16.msra.mxu0 %v2858
  %2945 = vmatprep.subr.bf16.mxu0 0
  %2946 = vmatpush2.bf16.msra.mxu0 %v2857
  %2947 = vmatprep.subr.bf16.mxu0 0
  %2948 = vmatpush2.bf16.msra.mxu0 %v2856
  %2949 = vmatprep.subr.bf16.mxu0 0
  %2950 = vmatpush2.bf16.msra.mxu0 %v2855
  %2951 = vmatprep.subr.bf16.mxu0 0
  %2952 = vmatpush2.bf16.msra.mxu0 %v2854
  %2953 = vmatprep.mubr.bf16.mxu0 %v2694
  %2954 = vmatmul.mubr.bf16.gmra.mxu0 %v2693
  %v2955 = vpop.f32.mrf.mxu0
  %v2956 = vadd.f32 %v2683, %v2955
  %v2957 = vpop.f32.mrf.mxu0
  %v2958 = vpop.f32.mrf.mxu0
  %v2959 = vpop.f32.mrf.mxu0
  %2960 = vdwg.mxu0
  %2961 = vmatprep.subr.bf16.mxu0 0
  %2962 = vmatpush1.bf16.msra.mxu0 %v2869
  %2963 = vmatprep.subr.bf16.mxu0 0
  %2964 = vmatpush1.bf16.msra.mxu0 %v2868
  %2965 = vmatprep.subr.bf16.mxu0 0
  %2966 = vmatpush1.bf16.msra.mxu0 %v2867
  %2967 = vmatprep.subr.bf16.mxu0 0
  %2968 = vmatpush1.bf16.msra.mxu0 %v2866
  %2969 = vmatprep.subr.bf16.mxu0 0
  %2970 = vmatpush1.bf16.msra.mxu0 %v2865
  %2971 = vmatprep.subr.bf16.mxu0 0
  %2972 = vmatpush1.bf16.msra.mxu0 %v2864
  %2973 = vmatprep.subr.bf16.mxu0 0
  %2974 = vmatpush1.bf16.msra.mxu0 %v2863
  %2975 = vmatprep.subr.bf16.mxu0 0
  %2976 = vmatpush1.bf16.msra.mxu0 %v2862
  %2977 = vmatprep.subr.bf16.mxu0 0
  %2978 = vmatpush2.bf16.msra.mxu0 %v2877
  %2979 = vmatprep.subr.bf16.mxu0 0
  %2980 = vmatpush2.bf16.msra.mxu0 %v2876
  %2981 = vmatprep.subr.bf16.mxu0 0
  %2982 = vmatpush2.bf16.msra.mxu0 %v2875
  %2983 = vmatprep.subr.bf16.mxu0 0
  %2984 = vmatpush2.bf16.msra.mxu0 %v2874
  %2985 = vmatprep.subr.bf16.mxu0 0
  %2986 = vmatpush2.bf16.msra.mxu0 %v2873
  %2987 = vmatprep.subr.bf16.mxu0 0
  %2988 = vmatpush2.bf16.msra.mxu0 %v2872
  %2989 = vmatprep.subr.bf16.mxu0 0
  %2990 = vmatpush2.bf16.msra.mxu0 %v2871
  %2991 = vmatprep.subr.bf16.mxu0 0
  %2992 = vmatpush2.bf16.msra.mxu0 %v2870
  %2993 = vmatprep.mubr.bf16.mxu0 %v2696
  %2994 = vmatmul.mubr.bf16.gmra.mxu0 %v2695
  %v2995 = vpop.f32.mrf.mxu0
  %v2996 = vadd.f32 %v2956, %v2995
  %v2997 = vpop.f32.mrf.mxu0
  %v2998 = vpop.f32.mrf.mxu0
  %v2999 = vpop.f32.mrf.mxu0
  %3000 = vdwg.mxu0
  %3001 = vmatprep.subr.bf16.mxu0 0
  %3002 = vmatpush1.bf16.msra.mxu0 0
  %3003 = vmatprep.subr.bf16.mxu0 0
  %3004 = vmatpush1.bf16.msra.mxu0 0
  %3005 = vmatprep.subr.bf16.mxu0 0
  %3006 = vmatpush1.bf16.msra.mxu0 0
  %3007 = vmatprep.subr.bf16.mxu0 0
  %3008 = vmatpush1.bf16.msra.mxu0 0
  %3009 = vmatprep.subr.bf16.mxu0 0
  %3010 = vmatpush1.bf16.msra.mxu0 %v2881
  %3011 = vmatprep.subr.bf16.mxu0 0
  %3012 = vmatpush1.bf16.msra.mxu0 %v2880
  %3013 = vmatprep.subr.bf16.mxu0 0
  %3014 = vmatpush1.bf16.msra.mxu0 %v2879
  %3015 = vmatprep.subr.bf16.mxu0 0
  %3016 = vmatpush1.bf16.msra.mxu0 %v2878
  %3017 = vmatprep.subr.bf16.mxu0 0
  %3018 = vmatpush2.bf16.msra.mxu0 0
  %3019 = vmatprep.subr.bf16.mxu0 0
  %3020 = vmatpush2.bf16.msra.mxu0 0
  %3021 = vmatprep.subr.bf16.mxu0 0
  %3022 = vmatpush2.bf16.msra.mxu0 0
  %3023 = vmatprep.subr.bf16.mxu0 0
  %3024 = vmatpush2.bf16.msra.mxu0 0
  %3025 = vmatprep.subr.bf16.mxu0 0
  %3026 = vmatpush2.bf16.msra.mxu0 0
  %3027 = vmatprep.subr.bf16.mxu0 0
  %3028 = vmatpush2.bf16.msra.mxu0 0
  %3029 = vmatprep.subr.bf16.mxu0 0
  %3030 = vmatpush2.bf16.msra.mxu0 0
  %3031 = vmatprep.subr.bf16.mxu0 0
  %3032 = vmatpush2.bf16.msra.mxu0 0
  %3033 = vmatprep.mubr.bf16.mxu0 0
  %3034 = vmatmul.mubr.bf16.gmra.mxu0 %v2919
  %v3035 = vpop.f32.mrf.mxu0
  %v3036 = vadd.f32 %v2996, %v3035
  %v3037 = vpop.f32.mrf.mxu0
  %v3038 = vpop.f32.mrf.mxu0
  %v3039 = vpop.f32.mrf.mxu0
  %3040 = vdwg.mxu0
  %v3041 = vmax.f32 %v3036, 0.0
  %v3042 = vpack.c.bf16 %v3041, %v3041
  %v3043 = vld [vmem:[%s7] sm:$0xff]
  %v3044 = vld [vmem:[%s7 + $0x8] sm:$0xff]
  %v3045 = vld [vmem:[%s7 + $0x10] sm:$0xff]
  %v3046 = vld [vmem:[%s7 + $0x18] sm:$0xff]
  %v3047 = vld [vmem:[%s7 + $0x20] sm:$0xff]
  %v3048 = vld [vmem:[%s7 + $0x28] sm:$0xff]
  %v3049 = vld [vmem:[%s7 + $0x30] sm:$0xff]
  %v3050 = vld [vmem:[%s7 + $0x38] sm:$0xff]
  %v3051 = vld [vmem:[%s8] sm:$0x3]
  %v3053 = vlaneseq
  %v3054 = vshrl.u32 %v3053, 7
  %v3055 = vsub.s32 0, %v3054
  %v3056 = vrot.slane %v3051, %v3055
  %v3057 = vlaneseq
  %v3058 = vshrl.u32 %v3057, 7
  %v3059 = vsub.s32 1, %v3058
  %v3060 = vrot.slane %v3051, %v3059
  %v3071 = vunpack.c.l.b16 %v3043
  %v3072 = vunpack.c.h.b16 %v3043
  %v3073 = vunpack.c.l.b16 %v3044
  %v3074 = vunpack.c.h.b16 %v3044
  %v3075 = vunpack.c.l.b16 %v3045
  %v3076 = vunpack.c.h.b16 %v3045
  %v3077 = vunpack.c.l.b16 %v3046
  %v3078 = vunpack.c.h.b16 %v3046
  %v3079 = vunpack.c.l.b16 %v3047
  %v3080 = vunpack.c.h.b16 %v3047
  %v3081 = vunpack.c.l.b16 %v3048
  %v3082 = vunpack.c.h.b16 %v3048
  %v3083 = vunpack.c.l.b16 %v3049
  %v3084 = vunpack.c.h.b16 %v3049
  %v3085 = vunpack.c.l.b16 %v3050
  %v3086 = vunpack.c.h.b16 %v3050
  %v3087 = vpack.c.b16 %v3073, %v3071
  %v3088 = vpack.c.b16 %v3074, %v3072
  %v3089 = vpack.c.b16 %v3077, %v3075
  %v3090 = vpack.c.b16 %v3078, %v3076
  %v3091 = vpack.c.b16 %v3081, %v3079
  %v3092 = vpack.c.b16 %v3082, %v3080
  %v3093 = vpack.c.b16 %v3085, %v3083
  %v3094 = vpack.c.b16 %v3086, %v3084
  %v3104 = vsel %vm1891, %v3042, 0
  %3106 = vmatprep.subr.bf16.mxu0 0
  %3107 = vmatpush1.bf16.msra.mxu0 0
  %3108 = vmatprep.subr.bf16.mxu0 0
  %3109 = vmatpush1.bf16.msra.mxu0 0
  %3110 = vmatprep.subr.bf16.mxu0 0
  %3111 = vmatpush1.bf16.msra.mxu0 0
  %3112 = vmatprep.subr.bf16.mxu0 0
  %3113 = vmatpush1.bf16.msra.mxu0 0
  %3114 = vmatprep.subr.bf16.mxu0 %v3094
  %3115 = vmatpush1.bf16.msra.mxu0 %v3093
  %3116 = vmatprep.subr.bf16.mxu0 %v3092
  %3117 = vmatpush1.bf16.msra.mxu0 %v3091
  %3118 = vmatprep.subr.bf16.mxu0 %v3090
  %3119 = vmatpush1.bf16.msra.mxu0 %v3089
  %3120 = vmatprep.subr.bf16.mxu0 %v3088
  %3121 = vmatpush1.bf16.msra.mxu0 %v3087
  %3122 = vmatprep.subr.bf16.mxu0 0
  %3123 = vmatpush2.bf16.msra.mxu0 0
  %3124 = vmatprep.subr.bf16.mxu0 0
  %3125 = vmatpush2.bf16.msra.mxu0 0
  %3126 = vmatprep.subr.bf16.mxu0 0
  %3127 = vmatpush2.bf16.msra.mxu0 0
  %3128 = vmatprep.subr.bf16.mxu0 0
  %3129 = vmatpush2.bf16.msra.mxu0 0
  %3130 = vmatprep.subr.bf16.mxu0 0
  %3131 = vmatpush2.bf16.msra.mxu0 0
  %3132 = vmatprep.subr.bf16.mxu0 0
  %3133 = vmatpush2.bf16.msra.mxu0 0
  %3134 = vmatprep.subr.bf16.mxu0 0
  %3135 = vmatpush2.bf16.msra.mxu0 0
  %3136 = vmatprep.subr.bf16.mxu0 0
  %3137 = vmatpush2.bf16.msra.mxu0 0
  %3138 = vmatprep.mubr.bf16.mxu0 0
  %3139 = vmatmul.mubr.bf16.gmra.mxu0 %v3104
  %v3140 = vpop.f32.mrf.mxu0
  %v3141 = vadd.f32 %v3056, %v3140
  %v3142 = vpop.f32.mrf.mxu0
  %v3143 = vadd.f32 %v3060, %v3142
  %v3144 = vpop.f32.mrf.mxu0
  %v3145 = vpop.f32.mrf.mxu0
  %3146 = vdwg.mxu0
  %v3147 = vmax.f32 %v3141, 0.0
  %v3148 = vmax.f32 %v3143, 0.0
  %v3149 = vpack.c.bf16 %v3147, %v3147
  %v3150 = vpack.c.bf16 %v3148, %v3148
  %v3151 = vld [vmem:[%s9] sm:$0xff]
  %v3152 = vld [vmem:[%s9 + $0x8] sm:$0xff]
  %v3153 = vld [vmem:[%s9 + $0x10] sm:$0xff]
  %v3154 = vld [vmem:[%s9 + $0x18] sm:$0xff]
  %v3155 = vld [vmem:[%s9 + $0x20] sm:$0xff]
  %v3156 = vld [vmem:[%s9 + $0x28] sm:$0xff]
  %v3157 = vld [vmem:[%s9 + $0x30] sm:$0xff]
  %v3158 = vld [vmem:[%s9 + $0x38] sm:$0xff]
  %v3159 = vld [vmem:[%s9 + $0x40] sm:$0xff]
  %v3160 = vld [vmem:[%s9 + $0x48] sm:$0xff]
  %v3161 = vld [vmem:[%s9 + $0x50] sm:$0xff]
  %v3162 = vld [vmem:[%s9 + $0x58] sm:$0xff]
  %v3163 = vld [vmem:[%s9 + $0x60] sm:$0xff]
  %v3164 = vld [vmem:[%s9 + $0x68] sm:$0xff]
  %v3165 = vld [vmem:[%s9 + $0x70] sm:$0xff]
  %v3166 = vld [vmem:[%s9 + $0x78] sm:$0xff]
  %v3167 = vld [vmem:[%s9 + $0x80] sm:$0xff]
  %v3168 = vld [vmem:[%s9 + $0x88] sm:$0xff]
  %v3169 = vld [vmem:[%s9 + $0x90] sm:$0xff]
  %v3170 = vld [vmem:[%s9 + $0x98] sm:$0xff]
  %v3171 = vld [vmem:[%s9 + $0xa0] sm:$0xff]
  %v3172 = vld [vmem:[%s9 + $0xa8] sm:$0xff]
  %v3173 = vld [vmem:[%s9 + $0xb0] sm:$0xff]
  %v3174 = vld [vmem:[%s9 + $0xb8] sm:$0xff]
  %v3175 = vld [vmem:[%s9 + $0xc0] sm:$0xff]
  %v3176 = vld [vmem:[%s9 + $0xc8] sm:$0xff]
  %v3177 = vld [vmem:[%s9 + $0xd0] sm:$0xff]
  %v3178 = vld [vmem:[%s9 + $0xd8] sm:$0xff]
  %v3179 = vld [vmem:[%s9 + $0xe0] sm:$0xff]
  %v3180 = vld [vmem:[%s9 + $0xe8] sm:$0xff]
  %v3181 = vld [vmem:[%s9 + $0xf0] sm:$0xff]
  %v3182 = vld [vmem:[%s9 + $0xf8] sm:$0xff]
  %v3183 = vld [vmem:[%s9 + $0x100] sm:$0xff]
  %v3184 = vld [vmem:[%s9 + $0x108] sm:$0xff]
  %v3185 = vld [vmem:[%s9 + $0x110] sm:$0xff]
  %v3186 = vld [vmem:[%s9 + $0x118] sm:$0xff]
  %v3187 = vld [vmem:[%s9 + $0x120] sm:$0xff]
  %v3188 = vld [vmem:[%s9 + $0x128] sm:$0xff]
  %v3189 = vld [vmem:[%s9 + $0x130] sm:$0xff]
  %v3190 = vld [vmem:[%s9 + $0x138] sm:$0xff]
  %v3191 = vld [vmem:[%s9 + $0x140] sm:$0xff]
  %v3192 = vld [vmem:[%s9 + $0x148] sm:$0xff]
  %v3193 = vld [vmem:[%s9 + $0x150] sm:$0xff]
  %v3194 = vld [vmem:[%s9 + $0x158] sm:$0xff]
  %v3195 = vld [vmem:[%s9 + $0x160] sm:$0xff]
  %v3196 = vld [vmem:[%s9 + $0x168] sm:$0xff]
  %v3197 = vld [vmem:[%s9 + $0x170] sm:$0xff]
  %v3198 = vld [vmem:[%s9 + $0x178] sm:$0xff]
  %v3199 = vld [vmem:[%s9 + $0x180] sm:$0xff]
  %v3200 = vld [vmem:[%s9 + $0x188] sm:$0xff]
  %v3201 = vld [vmem:[%s9 + $0x190] sm:$0xff]
  %v3202 = vld [vmem:[%s9 + $0x198] sm:$0xff]
  %v3203 = vld [vmem:[%s9 + $0x1a0] sm:$0xff]
  %v3204 = vld [vmem:[%s9 + $0x1a8] sm:$0xff]
  %v3205 = vld [vmem:[%s9 + $0x1b0] sm:$0xff]
  %v3206 = vld [vmem:[%s9 + $0x1b8] sm:$0xff]
  %v3207 = vld [vmem:[%s9 + $0x1c0] sm:$0xff]
  %v3208 = vld [vmem:[%s9 + $0x1c8] sm:$0xff]
  %v3209 = vld [vmem:[%s9 + $0x1d0] sm:$0xff]
  %v3210 = vld [vmem:[%s9 + $0x1d8] sm:$0xff]
  %v3211 = vld [vmem:[%s9 + $0x1e0] sm:$0xff]
  %v3212 = vld [vmem:[%s9 + $0x1e8] sm:$0xff]
  %v3213 = vld [vmem:[%s9 + $0x1f0] sm:$0xff]
  %v3214 = vld [vmem:[%s9 + $0x1f8] sm:$0xff]
  %v3215 = vld [vmem:[%s10] sm:$0xf]
  %v3217 = vlaneseq
  %v3218 = vshrl.u32 %v3217, 7
  %v3219 = vsub.s32 0, %v3218
  %v3220 = vrot.slane %v3215, %v3219
  %v3221 = vlaneseq
  %v3222 = vshrl.u32 %v3221, 7
  %v3223 = vsub.s32 1, %v3222
  %v3224 = vrot.slane %v3215, %v3223
  %v3225 = vlaneseq
  %v3226 = vshrl.u32 %v3225, 7
  %v3227 = vsub.s32 2, %v3226
  %v3228 = vrot.slane %v3215, %v3227
  %v3229 = vlaneseq
  %v3230 = vshrl.u32 %v3229, 7
  %v3231 = vsub.s32 3, %v3230
  %v3232 = vrot.slane %v3215, %v3231
  %v3301 = vunpack.c.l.b16 %v3151
  %v3302 = vunpack.c.h.b16 %v3151
  %v3303 = vunpack.c.l.b16 %v3152
  %v3304 = vunpack.c.h.b16 %v3152
  %v3305 = vunpack.c.l.b16 %v3153
  %v3306 = vunpack.c.h.b16 %v3153
  %v3307 = vunpack.c.l.b16 %v3154
  %v3308 = vunpack.c.h.b16 %v3154
  %v3309 = vunpack.c.l.b16 %v3155
  %v3310 = vunpack.c.h.b16 %v3155
  %v3311 = vunpack.c.l.b16 %v3156
  %v3312 = vunpack.c.h.b16 %v3156
  %v3313 = vunpack.c.l.b16 %v3157
  %v3314 = vunpack.c.h.b16 %v3157
  %v3315 = vunpack.c.l.b16 %v3158
  %v3316 = vunpack.c.h.b16 %v3158
  %v3317 = vunpack.c.l.b16 %v3159
  %v3318 = vunpack.c.h.b16 %v3159
  %v3319 = vunpack.c.l.b16 %v3160
  %v3320 = vunpack.c.h.b16 %v3160
  %v3321 = vunpack.c.l.b16 %v3161
  %v3322 = vunpack.c.h.b16 %v3161
  %v3323 = vunpack.c.l.b16 %v3162
  %v3324 = vunpack.c.h.b16 %v3162
  %v3325 = vunpack.c.l.b16 %v3163
  %v3326 = vunpack.c.h.b16 %v3163
  %v3327 = vunpack.c.l.b16 %v3164
  %v3328 = vunpack.c.h.b16 %v3164
  %v3329 = vunpack.c.l.b16 %v3165
  %v3330 = vunpack.c.h.b16 %v3165
  %v3331 = vunpack.c.l.b16 %v3166
  %v3332 = vunpack.c.h.b16 %v3166
  %v3333 = vunpack.c.l.b16 %v3167
  %v3334 = vunpack.c.h.b16 %v3167
  %v3335 = vunpack.c.l.b16 %v3168
  %v3336 = vunpack.c.h.b16 %v3168
  %v3337 = vunpack.c.l.b16 %v3169
  %v3338 = vunpack.c.h.b16 %v3169
  %v3339 = vunpack.c.l.b16 %v3170
  %v3340 = vunpack.c.h.b16 %v3170
  %v3341 = vunpack.c.l.b16 %v3171
  %v3342 = vunpack.c.h.b16 %v3171
  %v3343 = vunpack.c.l.b16 %v3172
  %v3344 = vunpack.c.h.b16 %v3172
  %v3345 = vunpack.c.l.b16 %v3173
  %v3346 = vunpack.c.h.b16 %v3173
  %v3347 = vunpack.c.l.b16 %v3174
  %v3348 = vunpack.c.h.b16 %v3174
  %v3349 = vunpack.c.l.b16 %v3175
  %v3350 = vunpack.c.h.b16 %v3175
  %v3351 = vunpack.c.l.b16 %v3176
  %v3352 = vunpack.c.h.b16 %v3176
  %v3353 = vunpack.c.l.b16 %v3177
  %v3354 = vunpack.c.h.b16 %v3177
  %v3355 = vunpack.c.l.b16 %v3178
  %v3356 = vunpack.c.h.b16 %v3178
  %v3357 = vunpack.c.l.b16 %v3179
  %v3358 = vunpack.c.h.b16 %v3179
  %v3359 = vunpack.c.l.b16 %v3180
  %v3360 = vunpack.c.h.b16 %v3180
  %v3361 = vunpack.c.l.b16 %v3181
  %v3362 = vunpack.c.h.b16 %v3181
  %v3363 = vunpack.c.l.b16 %v3182
  %v3364 = vunpack.c.h.b16 %v3182
  %v3365 = vunpack.c.l.b16 %v3183
  %v3366 = vunpack.c.h.b16 %v3183
  %v3367 = vunpack.c.l.b16 %v3184
  %v3368 = vunpack.c.h.b16 %v3184
  %v3369 = vunpack.c.l.b16 %v3185
  %v3370 = vunpack.c.h.b16 %v3185
  %v3371 = vunpack.c.l.b16 %v3186
  %v3372 = vunpack.c.h.b16 %v3186
  %v3373 = vunpack.c.l.b16 %v3187
  %v3374 = vunpack.c.h.b16 %v3187
  %v3375 = vunpack.c.l.b16 %v3188
  %v3376 = vunpack.c.h.b16 %v3188
  %v3377 = vunpack.c.l.b16 %v3189
  %v3378 = vunpack.c.h.b16 %v3189
  %v3379 = vunpack.c.l.b16 %v3190
  %v3380 = vunpack.c.h.b16 %v3190
  %v3381 = vunpack.c.l.b16 %v3191
  %v3382 = vunpack.c.h.b16 %v3191
  %v3383 = vunpack.c.l.b16 %v3192
  %v3384 = vunpack.c.h.b16 %v3192
  %v3385 = vunpack.c.l.b16 %v3193
  %v3386 = vunpack.c.h.b16 %v3193
  %v3387 = vunpack.c.l.b16 %v3194
  %v3388 = vunpack.c.h.b16 %v3194
  %v3389 = vunpack.c.l.b16 %v3195
  %v3390 = vunpack.c.h.b16 %v3195
  %v3391 = vunpack.c.l.b16 %v3196
  %v3392 = vunpack.c.h.b16 %v3196
  %v3393 = vunpack.c.l.b16 %v3197
  %v3394 = vunpack.c.h.b16 %v3197
  %v3395 = vunpack.c.l.b16 %v3198
  %v3396 = vunpack.c.h.b16 %v3198
  %v3397 = vunpack.c.l.b16 %v3199
  %v3398 = vunpack.c.h.b16 %v3199
  %v3399 = vunpack.c.l.b16 %v3200
  %v3400 = vunpack.c.h.b16 %v3200
  %v3401 = vunpack.c.l.b16 %v3201
  %v3402 = vunpack.c.h.b16 %v3201
  %v3403 = vunpack.c.l.b16 %v3202
  %v3404 = vunpack.c.h.b16 %v3202
  %v3405 = vunpack.c.l.b16 %v3203
  %v3406 = vunpack.c.h.b16 %v3203
  %v3407 = vunpack.c.l.b16 %v3204
  %v3408 = vunpack.c.h.b16 %v3204
  %v3409 = vunpack.c.l.b16 %v3205
  %v3410 = vunpack.c.h.b16 %v3205
  %v3411 = vunpack.c.l.b16 %v3206
  %v3412 = vunpack.c.h.b16 %v3206
  %v3413 = vunpack.c.l.b16 %v3207
  %v3414 = vunpack.c.h.b16 %v3207
  %v3415 = vunpack.c.l.b16 %v3208
  %v3416 = vunpack.c.h.b16 %v3208
  %v3417 = vunpack.c.l.b16 %v3209
  %v3418 = vunpack.c.h.b16 %v3209
  %v3419 = vunpack.c.l.b16 %v3210
  %v3420 = vunpack.c.h.b16 %v3210
  %v3421 = vunpack.c.l.b16 %v3211
  %v3422 = vunpack.c.h.b16 %v3211
  %v3423 = vunpack.c.l.b16 %v3212
  %v3424 = vunpack.c.h.b16 %v3212
  %v3425 = vunpack.c.l.b16 %v3213
  %v3426 = vunpack.c.h.b16 %v3213
  %v3427 = vunpack.c.l.b16 %v3214
  %v3428 = vunpack.c.h.b16 %v3214
  %v3429 = vpack.c.b16 %v3305, %v3301
  %v3430 = vpack.c.b16 %v3306, %v3302
  %v3431 = vpack.c.b16 %v3307, %v3303
  %v3432 = vpack.c.b16 %v3308, %v3304
  %v3433 = vpack.c.b16 %v3313, %v3309
  %v3434 = vpack.c.b16 %v3314, %v3310
  %v3435 = vpack.c.b16 %v3315, %v3311
  %v3436 = vpack.c.b16 %v3316, %v3312
  %v3437 = vpack.c.b16 %v3321, %v3317
  %v3438 = vpack.c.b16 %v3322, %v3318
  %v3439 = vpack.c.b16 %v3323, %v3319
  %v3440 = vpack.c.b16 %v3324, %v3320
  %v3441 = vpack.c.b16 %v3329, %v3325
  %v3442 = vpack.c.b16 %v3330, %v3326
  %v3443 = vpack.c.b16 %v3331, %v3327
  %v3444 = vpack.c.b16 %v3332, %v3328
  %v3445 = vpack.c.b16 %v3337, %v3333
  %v3446 = vpack.c.b16 %v3338, %v3334
  %v3447 = vpack.c.b16 %v3339, %v3335
  %v3448 = vpack.c.b16 %v3340, %v3336
  %v3449 = vpack.c.b16 %v3345, %v3341
  %v3450 = vpack.c.b16 %v3346, %v3342
  %v3451 = vpack.c.b16 %v3347, %v3343
  %v3452 = vpack.c.b16 %v3348, %v3344
  %v3453 = vpack.c.b16 %v3353, %v3349
  %v3454 = vpack.c.b16 %v3354, %v3350
  %v3455 = vpack.c.b16 %v3355, %v3351
  %v3456 = vpack.c.b16 %v3356, %v3352
  %v3457 = vpack.c.b16 %v3361, %v3357
  %v3458 = vpack.c.b16 %v3362, %v3358
  %v3459 = vpack.c.b16 %v3363, %v3359
  %v3460 = vpack.c.b16 %v3364, %v3360
  %v3461 = vpack.c.b16 %v3369, %v3365
  %v3462 = vpack.c.b16 %v3370, %v3366
  %v3463 = vpack.c.b16 %v3371, %v3367
  %v3464 = vpack.c.b16 %v3372, %v3368
  %v3465 = vpack.c.b16 %v3377, %v3373
  %v3466 = vpack.c.b16 %v3378, %v3374
  %v3467 = vpack.c.b16 %v3379, %v3375
  %v3468 = vpack.c.b16 %v3380, %v3376
  %v3469 = vpack.c.b16 %v3385, %v3381
  %v3470 = vpack.c.b16 %v3386, %v3382
  %v3471 = vpack.c.b16 %v3387, %v3383
  %v3472 = vpack.c.b16 %v3388, %v3384
  %v3473 = vpack.c.b16 %v3393, %v3389
  %v3474 = vpack.c.b16 %v3394, %v3390
  %v3475 = vpack.c.b16 %v3395, %v3391
  %v3476 = vpack.c.b16 %v3396, %v3392
  %v3477 = vpack.c.b16 %v3401, %v3397
  %v3478 = vpack.c.b16 %v3402, %v3398
  %v3479 = vpack.c.b16 %v3403, %v3399
  %v3480 = vpack.c.b16 %v3404, %v3400
  %v3481 = vpack.c.b16 %v3409, %v3405
  %v3482 = vpack.c.b16 %v3410, %v3406
  %v3483 = vpack.c.b16 %v3411, %v3407
  %v3484 = vpack.c.b16 %v3412, %v3408
  %v3485 = vpack.c.b16 %v3417, %v3413
  %v3486 = vpack.c.b16 %v3418, %v3414
  %v3487 = vpack.c.b16 %v3419, %v3415
  %v3488 = vpack.c.b16 %v3420, %v3416
  %v3489 = vpack.c.b16 %v3425, %v3421
  %v3490 = vpack.c.b16 %v3426, %v3422
  %v3491 = vpack.c.b16 %v3427, %v3423
  %v3492 = vpack.c.b16 %v3428, %v3424
  %3557 = vmatprep.subr.bf16.mxu0 %v3458
  %3558 = vmatpush1.bf16.msra.mxu0 %v3457
  %3559 = vmatprep.subr.bf16.mxu0 %v3454
  %3560 = vmatpush1.bf16.msra.mxu0 %v3453
  %3561 = vmatprep.subr.bf16.mxu0 %v3450
  %3562 = vmatpush1.bf16.msra.mxu0 %v3449
  %3563 = vmatprep.subr.bf16.mxu0 %v3446
  %3564 = vmatpush1.bf16.msra.mxu0 %v3445
  %3565 = vmatprep.subr.bf16.mxu0 %v3442
  %3566 = vmatpush1.bf16.msra.mxu0 %v3441
  %3567 = vmatprep.subr.bf16.mxu0 %v3438
  %3568 = vmatpush1.bf16.msra.mxu0 %v3437
  %3569 = vmatprep.subr.bf16.mxu0 %v3434
  %3570 = vmatpush1.bf16.msra.mxu0 %v3433
  %3571 = vmatprep.subr.bf16.mxu0 %v3430
  %3572 = vmatpush1.bf16.msra.mxu0 %v3429
  %3573 = vmatprep.subr.bf16.mxu0 %v3490
  %3574 = vmatpush2.bf16.msra.mxu0 %v3489
  %3575 = vmatprep.subr.bf16.mxu0 %v3486
  %3576 = vmatpush2.bf16.msra.mxu0 %v3485
  %3577 = vmatprep.subr.bf16.mxu0 %v3482
  %3578 = vmatpush2.bf16.msra.mxu0 %v3481
  %3579 = vmatprep.subr.bf16.mxu0 %v3478
  %3580 = vmatpush2.bf16.msra.mxu0 %v3477
  %3581 = vmatprep.subr.bf16.mxu0 %v3474
  %3582 = vmatpush2.bf16.msra.mxu0 %v3473
  %3583 = vmatprep.subr.bf16.mxu0 %v3470
  %3584 = vmatpush2.bf16.msra.mxu0 %v3469
  %3585 = vmatprep.subr.bf16.mxu0 %v3466
  %3586 = vmatpush2.bf16.msra.mxu0 %v3465
  %3587 = vmatprep.subr.bf16.mxu0 %v3462
  %3588 = vmatpush2.bf16.msra.mxu0 %v3461
  %3589 = vmatprep.mubr.bf16.mxu0 %v3150
  %3590 = vmatmul.mubr.bf16.gmra.mxu0 %v3149
  %v3591 = vpop.f32.mrf.mxu0
  %v3592 = vadd.f32 %v3220, %v3591
  %v3593 = vpop.f32.mrf.mxu0
  %v3594 = vadd.f32 %v3224, %v3593
  %v3595 = vpop.f32.mrf.mxu0
  %v3596 = vpop.f32.mrf.mxu0
  %3597 = vdwg.mxu0
  %3598 = vmatprep.subr.bf16.mxu0 %v3460
  %3599 = vmatpush1.bf16.msra.mxu0 %v3459
  %3600 = vmatprep.subr.bf16.mxu0 %v3456
  %3601 = vmatpush1.bf16.msra.mxu0 %v3455
  %3602 = vmatprep.subr.bf16.mxu0 %v3452
  %3603 = vmatpush1.bf16.msra.mxu0 %v3451
  %3604 = vmatprep.subr.bf16.mxu0 %v3448
  %3605 = vmatpush1.bf16.msra.mxu0 %v3447
  %3606 = vmatprep.subr.bf16.mxu0 %v3444
  %3607 = vmatpush1.bf16.msra.mxu0 %v3443
  %3608 = vmatprep.subr.bf16.mxu0 %v3440
  %3609 = vmatpush1.bf16.msra.mxu0 %v3439
  %3610 = vmatprep.subr.bf16.mxu0 %v3436
  %3611 = vmatpush1.bf16.msra.mxu0 %v3435
  %3612 = vmatprep.subr.bf16.mxu0 %v3432
  %3613 = vmatpush1.bf16.msra.mxu0 %v3431
  %3614 = vmatprep.subr.bf16.mxu0 %v3492
  %3615 = vmatpush2.bf16.msra.mxu0 %v3491
  %3616 = vmatprep.subr.bf16.mxu0 %v3488
  %3617 = vmatpush2.bf16.msra.mxu0 %v3487
  %3618 = vmatprep.subr.bf16.mxu0 %v3484
  %3619 = vmatpush2.bf16.msra.mxu0 %v3483
  %3620 = vmatprep.subr.bf16.mxu0 %v3480
  %3621 = vmatpush2.bf16.msra.mxu0 %v3479
  %3622 = vmatprep.subr.bf16.mxu0 %v3476
  %3623 = vmatpush2.bf16.msra.mxu0 %v3475
  %3624 = vmatprep.subr.bf16.mxu0 %v3472
  %3625 = vmatpush2.bf16.msra.mxu0 %v3471
  %3626 = vmatprep.subr.bf16.mxu0 %v3468
  %3627 = vmatpush2.bf16.msra.mxu0 %v3467
  %3628 = vmatprep.subr.bf16.mxu0 %v3464
  %3629 = vmatpush2.bf16.msra.mxu0 %v3463
  %3630 = vmatprep.mubr.bf16.mxu0 %v3150
  %3631 = vmatmul.mubr.bf16.gmra.mxu0 %v3149
  %v3632 = vpop.f32.mrf.mxu0
  %v3633 = vadd.f32 %v3228, %v3632
  %v3634 = vpop.f32.mrf.mxu0
  %v3635 = vadd.f32 %v3232, %v3634
  %v3636 = vpop.f32.mrf.mxu0
  %v3637 = vpop.f32.mrf.mxu0
  %3638 = vdwg.mxu0
  %v3639 = vmax.f32 %v3592, 0.0
  %v3640 = vmax.f32 %v3594, 0.0
  %v3641 = vmax.f32 %v3633, 0.0
  %v3642 = vmax.f32 %v3635, 0.0
  %v3643 = vpack.c.bf16 %v3639, %v3639
  %v3644 = vpack.c.bf16 %v3640, %v3640
  %v3645 = vpack.c.bf16 %v3641, %v3641
  %v3646 = vpack.c.bf16 %v3642, %v3642
  %s3647 = smul.u32 4, 56
  %s3648 = smul.u32 %s3647, 7
  %s3649 = sshll.u32 %s3648, 4
  %3650 = dma.done [#allocation8], %s3649
  %v3651 = vld [vmem:[#allocation6] sm:$0xff]
  %v3652 = vld [vmem:[#allocation6 + $0x8] sm:$0xff]
  %v3653 = vld [vmem:[#allocation6 + $0x10] sm:$0xff]
  %v3654 = vld [vmem:[#allocation6 + $0x18] sm:$0xf]
  %v3655 = vld [vmem:[#allocation6 + $0x1c] sm:$0xff]
  %v3656 = vld [vmem:[#allocation6 + $0x24] sm:$0xff]
  %v3657 = vld [vmem:[#allocation6 + $0x2c] sm:$0xff]
  %v3658 = vld [vmem:[#allocation6 + $0x34] sm:$0xf]
  %v3659 = vld [vmem:[#allocation6 + $0x38] sm:$0xff]
  %v3660 = vld [vmem:[#allocation6 + $0x40] sm:$0xff]
  %v3661 = vld [vmem:[#allocation6 + $0x48] sm:$0xff]
  %v3662 = vld [vmem:[#allocation6 + $0x50] sm:$0xf]
  %v3663 = vld [vmem:[#allocation6 + $0x54] sm:$0xff]
  %v3664 = vld [vmem:[#allocation6 + $0x5c] sm:$0xff]
  %v3665 = vld [vmem:[#allocation6 + $0x64] sm:$0xff]
  %v3666 = vld [vmem:[#allocation6 + $0x6c] sm:$0xf]
  %v3667 = vld [vmem:[#allocation6 + $0x70] sm:$0xff]
  %v3668 = vld [vmem:[#allocation6 + $0x78] sm:$0xff]
  %v3669 = vld [vmem:[#allocation6 + $0x80] sm:$0xff]
  %v3670 = vld [vmem:[#allocation6 + $0x88] sm:$0xf]
  %v3671 = vld [vmem:[#allocation6 + $0x8c] sm:$0xff]
  %v3672 = vld [vmem:[#allocation6 + $0x94] sm:$0xff]
  %v3673 = vld [vmem:[#allocation6 + $0x9c] sm:$0xff]
  %v3674 = vld [vmem:[#allocation6 + $0xa4] sm:$0xf]
  %v3675 = vld [vmem:[#allocation6 + $0xa8] sm:$0xff]
  %v3676 = vld [vmem:[#allocation6 + $0xb0] sm:$0xff]
  %v3677 = vld [vmem:[#allocation6 + $0xb8] sm:$0xff]
  %v3678 = vld [vmem:[#allocation6 + $0xc0] sm:$0xf]
  %v3679 = vld [vmem:[#allocation6 + $0xc4] sm:$0xff]
  %v3680 = vld [vmem:[#allocation6 + $0xcc] sm:$0xff]
  %v3681 = vld [vmem:[#allocation6 + $0xd4] sm:$0xff]
  %v3682 = vld [vmem:[#allocation6 + $0xdc] sm:$0xf]
  %v3683 = vld [vmem:[#allocation6 + $0xe0] sm:$0xff]
  %v3684 = vld [vmem:[#allocation6 + $0xe8] sm:$0xff]
  %v3685 = vld [vmem:[#allocation6 + $0xf0] sm:$0xff]
  %v3686 = vld [vmem:[#allocation6 + $0xf8] sm:$0xf]
  %v3687 = vld [vmem:[#allocation6 + $0xfc] sm:$0xff]
  %v3688 = vld [vmem:[#allocation6 + $0x104] sm:$0xff]
  %v3689 = vld [vmem:[#allocation6 + $0x10c] sm:$0xff]
  %v3690 = vld [vmem:[#allocation6 + $0x114] sm:$0xf]
  %v3691 = vld [vmem:[#allocation6 + $0x118] sm:$0xff]
  %v3692 = vld [vmem:[#allocation6 + $0x120] sm:$0xff]
  %v3693 = vld [vmem:[#allocation6 + $0x128] sm:$0xff]
  %v3694 = vld [vmem:[#allocation6 + $0x130] sm:$0xf]
  %v3695 = vld [vmem:[#allocation6 + $0x134] sm:$0xff]
  %v3696 = vld [vmem:[#allocation6 + $0x13c] sm:$0xff]
  %v3697 = vld [vmem:[#allocation6 + $0x144] sm:$0xff]
  %v3698 = vld [vmem:[#allocation6 + $0x14c] sm:$0xf]
  %v3699 = vld [vmem:[#allocation6 + $0x150] sm:$0xff]
  %v3700 = vld [vmem:[#allocation6 + $0x158] sm:$0xff]
  %v3701 = vld [vmem:[#allocation6 + $0x160] sm:$0xff]
  %v3702 = vld [vmem:[#allocation6 + $0x168] sm:$0xf]
  %v3703 = vld [vmem:[#allocation6 + $0x16c] sm:$0xff]
  %v3704 = vld [vmem:[#allocation6 + $0x174] sm:$0xff]
  %v3705 = vld [vmem:[#allocation6 + $0x17c] sm:$0xff]
  %v3706 = vld [vmem:[#allocation6 + $0x184] sm:$0xf]
  %v3707 = vld [vmem:[#allocation6 + $0x188] sm:$0xff]
  %v3708 = vld [vmem:[#allocation6 + $0x190] sm:$0xff]
  %v3709 = vld [vmem:[#allocation6 + $0x198] sm:$0xff]
  %v3710 = vld [vmem:[#allocation6 + $0x1a0] sm:$0xf]
  %v3711 = vld [vmem:[#allocation6 + $0x1a4] sm:$0xff]
  %v3712 = vld [vmem:[#allocation6 + $0x1ac] sm:$0xff]
  %v3713 = vld [vmem:[#allocation6 + $0x1b4] sm:$0xff]
  %v3714 = vld [vmem:[#allocation6 + $0x1bc] sm:$0xf]
  %v3715 = vld [vmem:[#allocation6 + $0x1c0] sm:$0xff]
  %v3716 = vld [vmem:[#allocation6 + $0x1c8] sm:$0xff]
  %v3717 = vld [vmem:[#allocation6 + $0x1d0] sm:$0xff]
  %v3718 = vld [vmem:[#allocation6 + $0x1d8] sm:$0xf]
  %v3719 = vld [vmem:[#allocation6 + $0x1dc] sm:$0xff]
  %v3720 = vld [vmem:[#allocation6 + $0x1e4] sm:$0xff]
  %v3721 = vld [vmem:[#allocation6 + $0x1ec] sm:$0xff]
  %v3722 = vld [vmem:[#allocation6 + $0x1f4] sm:$0xf]
  %v3723 = vld [vmem:[#allocation6 + $0x1f8] sm:$0xff]
  %v3724 = vld [vmem:[#allocation6 + $0x200] sm:$0xff]
  %v3725 = vld [vmem:[#allocation6 + $0x208] sm:$0xff]
  %v3726 = vld [vmem:[#allocation6 + $0x210] sm:$0xf]
  %v3727 = vld [vmem:[#allocation6 + $0x214] sm:$0xff]
  %v3728 = vld [vmem:[#allocation6 + $0x21c] sm:$0xff]
  %v3729 = vld [vmem:[#allocation6 + $0x224] sm:$0xff]
  %v3730 = vld [vmem:[#allocation6 + $0x22c] sm:$0xf]
  %v3731 = vld [vmem:[#allocation6 + $0x230] sm:$0xff]
  %v3732 = vld [vmem:[#allocation6 + $0x238] sm:$0xff]
  %v3733 = vld [vmem:[#allocation6 + $0x240] sm:$0xff]
  %v3734 = vld [vmem:[#allocation6 + $0x248] sm:$0xf]
  %v3735 = vld [vmem:[#allocation6 + $0x24c] sm:$0xff]
  %v3736 = vld [vmem:[#allocation6 + $0x254] sm:$0xff]
  %v3737 = vld [vmem:[#allocation6 + $0x25c] sm:$0xff]
  %v3738 = vld [vmem:[#allocation6 + $0x264] sm:$0xf]
  %v3739 = vld [vmem:[#allocation6 + $0x268] sm:$0xff]
  %v3740 = vld [vmem:[#allocation6 + $0x270] sm:$0xff]
  %v3741 = vld [vmem:[#allocation6 + $0x278] sm:$0xff]
  %v3742 = vld [vmem:[#allocation6 + $0x280] sm:$0xf]
  %v3743 = vld [vmem:[#allocation6 + $0x284] sm:$0xff]
  %v3744 = vld [vmem:[#allocation6 + $0x28c] sm:$0xff]
  %v3745 = vld [vmem:[#allocation6 + $0x294] sm:$0xff]
  %v3746 = vld [vmem:[#allocation6 + $0x29c] sm:$0xf]
  %v3747 = vld [vmem:[#allocation6 + $0x2a0] sm:$0xff]
  %v3748 = vld [vmem:[#allocation6 + $0x2a8] sm:$0xff]
  %v3749 = vld [vmem:[#allocation6 + $0x2b0] sm:$0xff]
  %v3750 = vld [vmem:[#allocation6 + $0x2b8] sm:$0xf]
  %v3751 = vld [vmem:[#allocation6 + $0x2bc] sm:$0xff]
  %v3752 = vld [vmem:[#allocation6 + $0x2c4] sm:$0xff]
  %v3753 = vld [vmem:[#allocation6 + $0x2cc] sm:$0xff]
  %v3754 = vld [vmem:[#allocation6 + $0x2d4] sm:$0xf]
  %v3755 = vld [vmem:[#allocation6 + $0x2d8] sm:$0xff]
  %v3756 = vld [vmem:[#allocation6 + $0x2e0] sm:$0xff]
  %v3757 = vld [vmem:[#allocation6 + $0x2e8] sm:$0xff]
  %v3758 = vld [vmem:[#allocation6 + $0x2f0] sm:$0xf]
  %v3759 = vld [vmem:[#allocation6 + $0x2f4] sm:$0xff]
  %v3760 = vld [vmem:[#allocation6 + $0x2fc] sm:$0xff]
  %v3761 = vld [vmem:[#allocation6 + $0x304] sm:$0xff]
  %v3762 = vld [vmem:[#allocation6 + $0x30c] sm:$0xf]
  %v3763 = vld [vmem:[#allocation6 + $0x310] sm:$0xff]
  %v3764 = vld [vmem:[#allocation6 + $0x318] sm:$0xff]
  %v3765 = vld [vmem:[#allocation6 + $0x320] sm:$0xff]
  %v3766 = vld [vmem:[#allocation6 + $0x328] sm:$0xf]
  %v3767 = vld [vmem:[#allocation6 + $0x32c] sm:$0xff]
  %v3768 = vld [vmem:[#allocation6 + $0x334] sm:$0xff]
  %v3769 = vld [vmem:[#allocation6 + $0x33c] sm:$0xff]
  %v3770 = vld [vmem:[#allocation6 + $0x344] sm:$0xf]
  %v3771 = vld [vmem:[#allocation6 + $0x348] sm:$0xff]
  %v3772 = vld [vmem:[#allocation6 + $0x350] sm:$0xff]
  %v3773 = vld [vmem:[#allocation6 + $0x358] sm:$0xff]
  %v3774 = vld [vmem:[#allocation6 + $0x360] sm:$0xf]
  %v3775 = vld [vmem:[#allocation6 + $0x364] sm:$0xff]
  %v3776 = vld [vmem:[#allocation6 + $0x36c] sm:$0xff]
  %v3777 = vld [vmem:[#allocation6 + $0x374] sm:$0xff]
  %v3778 = vld [vmem:[#allocation6 + $0x37c] sm:$0xf]
  %v3779 = vld [vmem:[#allocation6 + $0x380] sm:$0xff]
  %v3780 = vld [vmem:[#allocation6 + $0x388] sm:$0xff]
  %v3781 = vld [vmem:[#allocation6 + $0x390] sm:$0xff]
  %v3782 = vld [vmem:[#allocation6 + $0x398] sm:$0xf]
  %v3783 = vld [vmem:[#allocation6 + $0x39c] sm:$0xff]
  %v3784 = vld [vmem:[#allocation6 + $0x3a4] sm:$0xff]
  %v3785 = vld [vmem:[#allocation6 + $0x3ac] sm:$0xff]
  %v3786 = vld [vmem:[#allocation6 + $0x3b4] sm:$0xf]
  %v3787 = vld [vmem:[#allocation6 + $0x3b8] sm:$0xff]
  %v3788 = vld [vmem:[#allocation6 + $0x3c0] sm:$0xff]
  %v3789 = vld [vmem:[#allocation6 + $0x3c8] sm:$0xff]
  %v3790 = vld [vmem:[#allocation6 + $0x3d0] sm:$0xf]
  %v3791 = vld [vmem:[#allocation6 + $0x3d4] sm:$0xff]
  %v3792 = vld [vmem:[#allocation6 + $0x3dc] sm:$0xff]
  %v3793 = vld [vmem:[#allocation6 + $0x3e4] sm:$0xff]
  %v3794 = vld [vmem:[#allocation6 + $0x3ec] sm:$0xf]
  %v3795 = vld [vmem:[#allocation6 + $0x3f0] sm:$0xff]
  %v3796 = vld [vmem:[#allocation6 + $0x3f8] sm:$0xff]
  %v3797 = vld [vmem:[#allocation6 + $0x400] sm:$0xff]
  %v3798 = vld [vmem:[#allocation6 + $0x408] sm:$0xf]
  %v3799 = vld [vmem:[#allocation6 + $0x40c] sm:$0xff]
  %v3800 = vld [vmem:[#allocation6 + $0x414] sm:$0xff]
  %v3801 = vld [vmem:[#allocation6 + $0x41c] sm:$0xff]
  %v3802 = vld [vmem:[#allocation6 + $0x424] sm:$0xf]
  %v3803 = vld [vmem:[#allocation6 + $0x428] sm:$0xff]
  %v3804 = vld [vmem:[#allocation6 + $0x430] sm:$0xff]
  %v3805 = vld [vmem:[#allocation6 + $0x438] sm:$0xff]
  %v3806 = vld [vmem:[#allocation6 + $0x440] sm:$0xf]
  %v3807 = vld [vmem:[#allocation6 + $0x444] sm:$0xff]
  %v3808 = vld [vmem:[#allocation6 + $0x44c] sm:$0xff]
  %v3809 = vld [vmem:[#allocation6 + $0x454] sm:$0xff]
  %v3810 = vld [vmem:[#allocation6 + $0x45c] sm:$0xf]
  %v3811 = vld [vmem:[#allocation6 + $0x460] sm:$0xff]
  %v3812 = vld [vmem:[#allocation6 + $0x468] sm:$0xff]
  %v3813 = vld [vmem:[#allocation6 + $0x470] sm:$0xff]
  %v3814 = vld [vmem:[#allocation6 + $0x478] sm:$0xf]
  %v3815 = vld [vmem:[#allocation6 + $0x47c] sm:$0xff]
  %v3816 = vld [vmem:[#allocation6 + $0x484] sm:$0xff]
  %v3817 = vld [vmem:[#allocation6 + $0x48c] sm:$0xff]
  %v3818 = vld [vmem:[#allocation6 + $0x494] sm:$0xf]
  %v3819 = vld [vmem:[#allocation6 + $0x498] sm:$0xff]
  %v3820 = vld [vmem:[#allocation6 + $0x4a0] sm:$0xff]
  %v3821 = vld [vmem:[#allocation6 + $0x4a8] sm:$0xff]
  %v3822 = vld [vmem:[#allocation6 + $0x4b0] sm:$0xf]
  %v3823 = vld [vmem:[#allocation6 + $0x4b4] sm:$0xff]
  %v3824 = vld [vmem:[#allocation6 + $0x4bc] sm:$0xff]
  %v3825 = vld [vmem:[#allocation6 + $0x4c4] sm:$0xff]
  %v3826 = vld [vmem:[#allocation6 + $0x4cc] sm:$0xf]
  %v3827 = vld [vmem:[#allocation6 + $0x4d0] sm:$0xff]
  %v3828 = vld [vmem:[#allocation6 + $0x4d8] sm:$0xff]
  %v3829 = vld [vmem:[#allocation6 + $0x4e0] sm:$0xff]
  %v3830 = vld [vmem:[#allocation6 + $0x4e8] sm:$0xf]
  %v3831 = vld [vmem:[#allocation6 + $0x4ec] sm:$0xff]
  %v3832 = vld [vmem:[#allocation6 + $0x4f4] sm:$0xff]
  %v3833 = vld [vmem:[#allocation6 + $0x4fc] sm:$0xff]
  %v3834 = vld [vmem:[#allocation6 + $0x504] sm:$0xf]
  %v3835 = vld [vmem:[#allocation6 + $0x508] sm:$0xff]
  %v3836 = vld [vmem:[#allocation6 + $0x510] sm:$0xff]
  %v3837 = vld [vmem:[#allocation6 + $0x518] sm:$0xff]
  %v3838 = vld [vmem:[#allocation6 + $0x520] sm:$0xf]
  %v3839 = vld [vmem:[#allocation6 + $0x524] sm:$0xff]
  %v3840 = vld [vmem:[#allocation6 + $0x52c] sm:$0xff]
  %v3841 = vld [vmem:[#allocation6 + $0x534] sm:$0xff]
  %v3842 = vld [vmem:[#allocation6 + $0x53c] sm:$0xf]
  %v3843 = vld [vmem:[#allocation6 + $0x540] sm:$0xff]
  %v3844 = vld [vmem:[#allocation6 + $0x548] sm:$0xff]
  %v3845 = vld [vmem:[#allocation6 + $0x550] sm:$0xff]
  %v3846 = vld [vmem:[#allocation6 + $0x558] sm:$0xf]
  %v3847 = vld [vmem:[#allocation6 + $0x55c] sm:$0xff]
  %v3848 = vld [vmem:[#allocation6 + $0x564] sm:$0xff]
  %v3849 = vld [vmem:[#allocation6 + $0x56c] sm:$0xff]
  %v3850 = vld [vmem:[#allocation6 + $0x574] sm:$0xf]
  %v3851 = vld [vmem:[#allocation6 + $0x578] sm:$0xff]
  %v3852 = vld [vmem:[#allocation6 + $0x580] sm:$0xff]
  %v3853 = vld [vmem:[#allocation6 + $0x588] sm:$0xff]
  %v3854 = vld [vmem:[#allocation6 + $0x590] sm:$0xf]
  %v3855 = vld [vmem:[#allocation6 + $0x594] sm:$0xff]
  %v3856 = vld [vmem:[#allocation6 + $0x59c] sm:$0xff]
  %v3857 = vld [vmem:[#allocation6 + $0x5a4] sm:$0xff]
  %v3858 = vld [vmem:[#allocation6 + $0x5ac] sm:$0xf]
  %v3859 = vld [vmem:[#allocation6 + $0x5b0] sm:$0xff]
  %v3860 = vld [vmem:[#allocation6 + $0x5b8] sm:$0xff]
  %v3861 = vld [vmem:[#allocation6 + $0x5c0] sm:$0xff]
  %v3862 = vld [vmem:[#allocation6 + $0x5c8] sm:$0xf]
  %v3863 = vld [vmem:[#allocation6 + $0x5cc] sm:$0xff]
  %v3864 = vld [vmem:[#allocation6 + $0x5d4] sm:$0xff]
  %v3865 = vld [vmem:[#allocation6 + $0x5dc] sm:$0xff]
  %v3866 = vld [vmem:[#allocation6 + $0x5e4] sm:$0xf]
  %v3867 = vld [vmem:[#allocation6 + $0x5e8] sm:$0xff]
  %v3868 = vld [vmem:[#allocation6 + $0x5f0] sm:$0xff]
  %v3869 = vld [vmem:[#allocation6 + $0x5f8] sm:$0xff]
  %v3870 = vld [vmem:[#allocation6 + $0x600] sm:$0xf]
  %v3871 = vld [vmem:[#allocation6 + $0x604] sm:$0xff]
  %v3872 = vld [vmem:[#allocation6 + $0x60c] sm:$0xff]
  %v3873 = vld [vmem:[#allocation6 + $0x614] sm:$0xff]
  %v3874 = vld [vmem:[#allocation6 + $0x61c] sm:$0xf]
  %v3875 = vld [vmem:[%s11] sm:$0xff]
  %v3877 = vlaneseq
  %v3878 = vshrl.u32 %v3877, 7
  %v3879 = vsub.s32 0, %v3878
  %v3880 = vrot.slane %v3875, %v3879
  %v3881 = vlaneseq
  %v3882 = vshrl.u32 %v3881, 7
  %v3883 = vsub.s32 1, %v3882
  %v3884 = vrot.slane %v3875, %v3883
  %v3885 = vlaneseq
  %v3886 = vshrl.u32 %v3885, 7
  %v3887 = vsub.s32 2, %v3886
  %v3888 = vrot.slane %v3875, %v3887
  %v3889 = vlaneseq
  %v3890 = vshrl.u32 %v3889, 7
  %v3891 = vsub.s32 3, %v3890
  %v3892 = vrot.slane %v3875, %v3891
  %v3893 = vlaneseq
  %v3894 = vshrl.u32 %v3893, 7
  %v3895 = vsub.s32 4, %v3894
  %v3896 = vrot.slane %v3875, %v3895
  %v3897 = vlaneseq
  %v3898 = vshrl.u32 %v3897, 7
  %v3899 = vsub.s32 5, %v3898
  %v3900 = vrot.slane %v3875, %v3899
  %v3901 = vlaneseq
  %v3902 = vshrl.u32 %v3901, 7
  %v3903 = vsub.s32 6, %v3902
  %v3904 = vrot.slane %v3875, %v3903
  %v4136 = vunpack.c.l.b16 %v3651
  %v4137 = vunpack.c.h.b16 %v3651
  %v4138 = vunpack.c.l.b16 %v3652
  %v4139 = vunpack.c.h.b16 %v3652
  %v4140 = vunpack.c.l.b16 %v3653
  %v4141 = vunpack.c.h.b16 %v3653
  %v4142 = vunpack.c.l.b16 %v3654
  %v4143 = vunpack.c.l.b16 %v3655
  %v4144 = vunpack.c.h.b16 %v3655
  %v4145 = vunpack.c.l.b16 %v3656
  %v4146 = vunpack.c.h.b16 %v3656
  %v4147 = vunpack.c.l.b16 %v3657
  %v4148 = vunpack.c.h.b16 %v3657
  %v4149 = vunpack.c.l.b16 %v3658
  %v4150 = vunpack.c.l.b16 %v3659
  %v4151 = vunpack.c.h.b16 %v3659
  %v4152 = vunpack.c.l.b16 %v3660
  %v4153 = vunpack.c.h.b16 %v3660
  %v4154 = vunpack.c.l.b16 %v3661
  %v4155 = vunpack.c.h.b16 %v3661
  %v4156 = vunpack.c.l.b16 %v3662
  %v4157 = vunpack.c.l.b16 %v3663
  %v4158 = vunpack.c.h.b16 %v3663
  %v4159 = vunpack.c.l.b16 %v3664
  %v4160 = vunpack.c.h.b16 %v3664
  %v4161 = vunpack.c.l.b16 %v3665
  %v4162 = vunpack.c.h.b16 %v3665
  %v4163 = vunpack.c.l.b16 %v3666
  %v4164 = vunpack.c.l.b16 %v3667
  %v4165 = vunpack.c.h.b16 %v3667
  %v4166 = vunpack.c.l.b16 %v3668
  %v4167 = vunpack.c.h.b16 %v3668
  %v4168 = vunpack.c.l.b16 %v3669
  %v4169 = vunpack.c.h.b16 %v3669
  %v4170 = vunpack.c.l.b16 %v3670
  %v4171 = vunpack.c.l.b16 %v3671
  %v4172 = vunpack.c.h.b16 %v3671
  %v4173 = vunpack.c.l.b16 %v3672
  %v4174 = vunpack.c.h.b16 %v3672
  %v4175 = vunpack.c.l.b16 %v3673
  %v4176 = vunpack.c.h.b16 %v3673
  %v4177 = vunpack.c.l.b16 %v3674
  %v4178 = vunpack.c.l.b16 %v3675
  %v4179 = vunpack.c.h.b16 %v3675
  %v4180 = vunpack.c.l.b16 %v3676
  %v4181 = vunpack.c.h.b16 %v3676
  %v4182 = vunpack.c.l.b16 %v3677
  %v4183 = vunpack.c.h.b16 %v3677
  %v4184 = vunpack.c.l.b16 %v3678
  %v4185 = vunpack.c.l.b16 %v3679
  %v4186 = vunpack.c.h.b16 %v3679
  %v4187 = vunpack.c.l.b16 %v3680
  %v4188 = vunpack.c.h.b16 %v3680
  %v4189 = vunpack.c.l.b16 %v3681
  %v4190 = vunpack.c.h.b16 %v3681
  %v4191 = vunpack.c.l.b16 %v3682
  %v4192 = vunpack.c.l.b16 %v3683
  %v4193 = vunpack.c.h.b16 %v3683
  %v4194 = vunpack.c.l.b16 %v3684
  %v4195 = vunpack.c.h.b16 %v3684
  %v4196 = vunpack.c.l.b16 %v3685
  %v4197 = vunpack.c.h.b16 %v3685
  %v4198 = vunpack.c.l.b16 %v3686
  %v4199 = vunpack.c.l.b16 %v3687
  %v4200 = vunpack.c.h.b16 %v3687
  %v4201 = vunpack.c.l.b16 %v3688
  %v4202 = vunpack.c.h.b16 %v3688
  %v4203 = vunpack.c.l.b16 %v3689
  %v4204 = vunpack.c.h.b16 %v3689
  %v4205 = vunpack.c.l.b16 %v3690
  %v4206 = vunpack.c.l.b16 %v3691
  %v4207 = vunpack.c.h.b16 %v3691
  %v4208 = vunpack.c.l.b16 %v3692
  %v4209 = vunpack.c.h.b16 %v3692
  %v4210 = vunpack.c.l.b16 %v3693
  %v4211 = vunpack.c.h.b16 %v3693
  %v4212 = vunpack.c.l.b16 %v3694
  %v4213 = vunpack.c.l.b16 %v3695
  %v4214 = vunpack.c.h.b16 %v3695
  %v4215 = vunpack.c.l.b16 %v3696
  %v4216 = vunpack.c.h.b16 %v3696
  %v4217 = vunpack.c.l.b16 %v3697
  %v4218 = vunpack.c.h.b16 %v3697
  %v4219 = vunpack.c.l.b16 %v3698
  %v4220 = vunpack.c.l.b16 %v3699
  %v4221 = vunpack.c.h.b16 %v3699
  %v4222 = vunpack.c.l.b16 %v3700
  %v4223 = vunpack.c.h.b16 %v3700
  %v4224 = vunpack.c.l.b16 %v3701
  %v4225 = vunpack.c.h.b16 %v3701
  %v4226 = vunpack.c.l.b16 %v3702
  %v4227 = vunpack.c.l.b16 %v3703
  %v4228 = vunpack.c.h.b16 %v3703
  %v4229 = vunpack.c.l.b16 %v3704
  %v4230 = vunpack.c.h.b16 %v3704
  %v4231 = vunpack.c.l.b16 %v3705
  %v4232 = vunpack.c.h.b16 %v3705
  %v4233 = vunpack.c.l.b16 %v3706
  %v4234 = vunpack.c.l.b16 %v3707
  %v4235 = vunpack.c.h.b16 %v3707
  %v4236 = vunpack.c.l.b16 %v3708
  %v4237 = vunpack.c.h.b16 %v3708
  %v4238 = vunpack.c.l.b16 %v3709
  %v4239 = vunpack.c.h.b16 %v3709
  %v4240 = vunpack.c.l.b16 %v3710
  %v4241 = vunpack.c.l.b16 %v3711
  %v4242 = vunpack.c.h.b16 %v3711
  %v4243 = vunpack.c.l.b16 %v3712
  %v4244 = vunpack.c.h.b16 %v3712
  %v4245 = vunpack.c.l.b16 %v3713
  %v4246 = vunpack.c.h.b16 %v3713
  %v4247 = vunpack.c.l.b16 %v3714
  %v4248 = vunpack.c.l.b16 %v3715
  %v4249 = vunpack.c.h.b16 %v3715
  %v4250 = vunpack.c.l.b16 %v3716
  %v4251 = vunpack.c.h.b16 %v3716
  %v4252 = vunpack.c.l.b16 %v3717
  %v4253 = vunpack.c.h.b16 %v3717
  %v4254 = vunpack.c.l.b16 %v3718
  %v4255 = vunpack.c.l.b16 %v3719
  %v4256 = vunpack.c.h.b16 %v3719
  %v4257 = vunpack.c.l.b16 %v3720
  %v4258 = vunpack.c.h.b16 %v3720
  %v4259 = vunpack.c.l.b16 %v3721
  %v4260 = vunpack.c.h.b16 %v3721
  %v4261 = vunpack.c.l.b16 %v3722
  %v4262 = vunpack.c.l.b16 %v3723
  %v4263 = vunpack.c.h.b16 %v3723
  %v4264 = vunpack.c.l.b16 %v3724
  %v4265 = vunpack.c.h.b16 %v3724
  %v4266 = vunpack.c.l.b16 %v3725
  %v4267 = vunpack.c.h.b16 %v3725
  %v4268 = vunpack.c.l.b16 %v3726
  %v4269 = vunpack.c.l.b16 %v3727
  %v4270 = vunpack.c.h.b16 %v3727
  %v4271 = vunpack.c.l.b16 %v3728
  %v4272 = vunpack.c.h.b16 %v3728
  %v4273 = vunpack.c.l.b16 %v3729
  %v4274 = vunpack.c.h.b16 %v3729
  %v4275 = vunpack.c.l.b16 %v3730
  %v4276 = vunpack.c.l.b16 %v3731
  %v4277 = vunpack.c.h.b16 %v3731
  %v4278 = vunpack.c.l.b16 %v3732
  %v4279 = vunpack.c.h.b16 %v3732
  %v4280 = vunpack.c.l.b16 %v3733
  %v4281 = vunpack.c.h.b16 %v3733
  %v4282 = vunpack.c.l.b16 %v3734
  %v4283 = vunpack.c.l.b16 %v3735
  %v4284 = vunpack.c.h.b16 %v3735
  %v4285 = vunpack.c.l.b16 %v3736
  %v4286 = vunpack.c.h.b16 %v3736
  %v4287 = vunpack.c.l.b16 %v3737
  %v4288 = vunpack.c.h.b16 %v3737
  %v4289 = vunpack.c.l.b16 %v3738
  %v4290 = vunpack.c.l.b16 %v3739
  %v4291 = vunpack.c.h.b16 %v3739
  %v4292 = vunpack.c.l.b16 %v3740
  %v4293 = vunpack.c.h.b16 %v3740
  %v4294 = vunpack.c.l.b16 %v3741
  %v4295 = vunpack.c.h.b16 %v3741
  %v4296 = vunpack.c.l.b16 %v3742
  %v4297 = vunpack.c.l.b16 %v3743
  %v4298 = vunpack.c.h.b16 %v3743
  %v4299 = vunpack.c.l.b16 %v3744
  %v4300 = vunpack.c.h.b16 %v3744
  %v4301 = vunpack.c.l.b16 %v3745
  %v4302 = vunpack.c.h.b16 %v3745
  %v4303 = vunpack.c.l.b16 %v3746
  %v4304 = vunpack.c.l.b16 %v3747
  %v4305 = vunpack.c.h.b16 %v3747
  %v4306 = vunpack.c.l.b16 %v3748
  %v4307 = vunpack.c.h.b16 %v3748
  %v4308 = vunpack.c.l.b16 %v3749
  %v4309 = vunpack.c.h.b16 %v3749
  %v4310 = vunpack.c.l.b16 %v3750
  %v4311 = vunpack.c.l.b16 %v3751
  %v4312 = vunpack.c.h.b16 %v3751
  %v4313 = vunpack.c.l.b16 %v3752
  %v4314 = vunpack.c.h.b16 %v3752
  %v4315 = vunpack.c.l.b16 %v3753
  %v4316 = vunpack.c.h.b16 %v3753
  %v4317 = vunpack.c.l.b16 %v3754
  %v4318 = vunpack.c.l.b16 %v3755
  %v4319 = vunpack.c.h.b16 %v3755
  %v4320 = vunpack.c.l.b16 %v3756
  %v4321 = vunpack.c.h.b16 %v3756
  %v4322 = vunpack.c.l.b16 %v3757
  %v4323 = vunpack.c.h.b16 %v3757
  %v4324 = vunpack.c.l.b16 %v3758
  %v4325 = vunpack.c.l.b16 %v3759
  %v4326 = vunpack.c.h.b16 %v3759
  %v4327 = vunpack.c.l.b16 %v3760
  %v4328 = vunpack.c.h.b16 %v3760
  %v4329 = vunpack.c.l.b16 %v3761
  %v4330 = vunpack.c.h.b16 %v3761
  %v4331 = vunpack.c.l.b16 %v3762
  %v4332 = vunpack.c.l.b16 %v3763
  %v4333 = vunpack.c.h.b16 %v3763
  %v4334 = vunpack.c.l.b16 %v3764
  %v4335 = vunpack.c.h.b16 %v3764
  %v4336 = vunpack.c.l.b16 %v3765
  %v4337 = vunpack.c.h.b16 %v3765
  %v4338 = vunpack.c.l.b16 %v3766
  %v4339 = vunpack.c.l.b16 %v3767
  %v4340 = vunpack.c.h.b16 %v3767
  %v4341 = vunpack.c.l.b16 %v3768
  %v4342 = vunpack.c.h.b16 %v3768
  %v4343 = vunpack.c.l.b16 %v3769
  %v4344 = vunpack.c.h.b16 %v3769
  %v4345 = vunpack.c.l.b16 %v3770
  %v4346 = vunpack.c.l.b16 %v3771
  %v4347 = vunpack.c.h.b16 %v3771
  %v4348 = vunpack.c.l.b16 %v3772
  %v4349 = vunpack.c.h.b16 %v3772
  %v4350 = vunpack.c.l.b16 %v3773
  %v4351 = vunpack.c.h.b16 %v3773
  %v4352 = vunpack.c.l.b16 %v3774
  %v4353 = vunpack.c.l.b16 %v3775
  %v4354 = vunpack.c.h.b16 %v3775
  %v4355 = vunpack.c.l.b16 %v3776
  %v4356 = vunpack.c.h.b16 %v3776
  %v4357 = vunpack.c.l.b16 %v3777
  %v4358 = vunpack.c.h.b16 %v3777
  %v4359 = vunpack.c.l.b16 %v3778
  %v4360 = vunpack.c.l.b16 %v3779
  %v4361 = vunpack.c.h.b16 %v3779
  %v4362 = vunpack.c.l.b16 %v3780
  %v4363 = vunpack.c.h.b16 %v3780
  %v4364 = vunpack.c.l.b16 %v3781
  %v4365 = vunpack.c.h.b16 %v3781
  %v4366 = vunpack.c.l.b16 %v3782
  %v4367 = vunpack.c.l.b16 %v3783
  %v4368 = vunpack.c.h.b16 %v3783
  %v4369 = vunpack.c.l.b16 %v3784
  %v4370 = vunpack.c.h.b16 %v3784
  %v4371 = vunpack.c.l.b16 %v3785
  %v4372 = vunpack.c.h.b16 %v3785
  %v4373 = vunpack.c.l.b16 %v3786
  %v4374 = vunpack.c.l.b16 %v3787
  %v4375 = vunpack.c.h.b16 %v3787
  %v4376 = vunpack.c.l.b16 %v3788
  %v4377 = vunpack.c.h.b16 %v3788
  %v4378 = vunpack.c.l.b16 %v3789
  %v4379 = vunpack.c.h.b16 %v3789
  %v4380 = vunpack.c.l.b16 %v3790
  %v4381 = vunpack.c.l.b16 %v3791
  %v4382 = vunpack.c.h.b16 %v3791
  %v4383 = vunpack.c.l.b16 %v3792
  %v4384 = vunpack.c.h.b16 %v3792
  %v4385 = vunpack.c.l.b16 %v3793
  %v4386 = vunpack.c.h.b16 %v3793
  %v4387 = vunpack.c.l.b16 %v3794
  %v4388 = vunpack.c.l.b16 %v3795
  %v4389 = vunpack.c.h.b16 %v3795
  %v4390 = vunpack.c.l.b16 %v3796
  %v4391 = vunpack.c.h.b16 %v3796
  %v4392 = vunpack.c.l.b16 %v3797
  %v4393 = vunpack.c.h.b16 %v3797
  %v4394 = vunpack.c.l.b16 %v3798
  %v4395 = vunpack.c.l.b16 %v3799
  %v4396 = vunpack.c.h.b16 %v3799
  %v4397 = vunpack.c.l.b16 %v3800
  %v4398 = vunpack.c.h.b16 %v3800
  %v4399 = vunpack.c.l.b16 %v3801
  %v4400 = vunpack.c.h.b16 %v3801
  %v4401 = vunpack.c.l.b16 %v3802
  %v4402 = vunpack.c.l.b16 %v3803
  %v4403 = vunpack.c.h.b16 %v3803
  %v4404 = vunpack.c.l.b16 %v3804
  %v4405 = vunpack.c.h.b16 %v3804
  %v4406 = vunpack.c.l.b16 %v3805
  %v4407 = vunpack.c.h.b16 %v3805
  %v4408 = vunpack.c.l.b16 %v3806
  %v4409 = vunpack.c.l.b16 %v3807
  %v4410 = vunpack.c.h.b16 %v3807
  %v4411 = vunpack.c.l.b16 %v3808
  %v4412 = vunpack.c.h.b16 %v3808
  %v4413 = vunpack.c.l.b16 %v3809
  %v4414 = vunpack.c.h.b16 %v3809
  %v4415 = vunpack.c.l.b16 %v3810
  %v4416 = vunpack.c.l.b16 %v3811
  %v4417 = vunpack.c.h.b16 %v3811
  %v4418 = vunpack.c.l.b16 %v3812
  %v4419 = vunpack.c.h.b16 %v3812
  %v4420 = vunpack.c.l.b16 %v3813
  %v4421 = vunpack.c.h.b16 %v3813
  %v4422 = vunpack.c.l.b16 %v3814
  %v4423 = vunpack.c.l.b16 %v3815
  %v4424 = vunpack.c.h.b16 %v3815
  %v4425 = vunpack.c.l.b16 %v3816
  %v4426 = vunpack.c.h.b16 %v3816
  %v4427 = vunpack.c.l.b16 %v3817
  %v4428 = vunpack.c.h.b16 %v3817
  %v4429 = vunpack.c.l.b16 %v3818
  %v4430 = vunpack.c.l.b16 %v3819
  %v4431 = vunpack.c.h.b16 %v3819
  %v4432 = vunpack.c.l.b16 %v3820
  %v4433 = vunpack.c.h.b16 %v3820
  %v4434 = vunpack.c.l.b16 %v3821
  %v4435 = vunpack.c.h.b16 %v3821
  %v4436 = vunpack.c.l.b16 %v3822
  %v4437 = vunpack.c.l.b16 %v3823
  %v4438 = vunpack.c.h.b16 %v3823
  %v4439 = vunpack.c.l.b16 %v3824
  %v4440 = vunpack.c.h.b16 %v3824
  %v4441 = vunpack.c.l.b16 %v3825
  %v4442 = vunpack.c.h.b16 %v3825
  %v4443 = vunpack.c.l.b16 %v3826
  %v4444 = vunpack.c.l.b16 %v3827
  %v4445 = vunpack.c.h.b16 %v3827
  %v4446 = vunpack.c.l.b16 %v3828
  %v4447 = vunpack.c.h.b16 %v3828
  %v4448 = vunpack.c.l.b16 %v3829
  %v4449 = vunpack.c.h.b16 %v3829
  %v4450 = vunpack.c.l.b16 %v3830
  %v4451 = vunpack.c.l.b16 %v3831
  %v4452 = vunpack.c.h.b16 %v3831
  %v4453 = vunpack.c.l.b16 %v3832
  %v4454 = vunpack.c.h.b16 %v3832
  %v4455 = vunpack.c.l.b16 %v3833
  %v4456 = vunpack.c.h.b16 %v3833
  %v4457 = vunpack.c.l.b16 %v3834
  %v4458 = vunpack.c.l.b16 %v3835
  %v4459 = vunpack.c.h.b16 %v3835
  %v4460 = vunpack.c.l.b16 %v3836
  %v4461 = vunpack.c.h.b16 %v3836
  %v4462 = vunpack.c.l.b16 %v3837
  %v4463 = vunpack.c.h.b16 %v3837
  %v4464 = vunpack.c.l.b16 %v3838
  %v4465 = vunpack.c.l.b16 %v3839
  %v4466 = vunpack.c.h.b16 %v3839
  %v4467 = vunpack.c.l.b16 %v3840
  %v4468 = vunpack.c.h.b16 %v3840
  %v4469 = vunpack.c.l.b16 %v3841
  %v4470 = vunpack.c.h.b16 %v3841
  %v4471 = vunpack.c.l.b16 %v3842
  %v4472 = vunpack.c.l.b16 %v3843
  %v4473 = vunpack.c.h.b16 %v3843
  %v4474 = vunpack.c.l.b16 %v3844
  %v4475 = vunpack.c.h.b16 %v3844
  %v4476 = vunpack.c.l.b16 %v3845
  %v4477 = vunpack.c.h.b16 %v3845
  %v4478 = vunpack.c.l.b16 %v3846
  %v4479 = vunpack.c.l.b16 %v3847
  %v4480 = vunpack.c.h.b16 %v3847
  %v4481 = vunpack.c.l.b16 %v3848
  %v4482 = vunpack.c.h.b16 %v3848
  %v4483 = vunpack.c.l.b16 %v3849
  %v4484 = vunpack.c.h.b16 %v3849
  %v4485 = vunpack.c.l.b16 %v3850
  %v4486 = vunpack.c.l.b16 %v3851
  %v4487 = vunpack.c.h.b16 %v3851
  %v4488 = vunpack.c.l.b16 %v3852
  %v4489 = vunpack.c.h.b16 %v3852
  %v4490 = vunpack.c.l.b16 %v3853
  %v4491 = vunpack.c.h.b16 %v3853
  %v4492 = vunpack.c.l.b16 %v3854
  %v4493 = vunpack.c.l.b16 %v3855
  %v4494 = vunpack.c.h.b16 %v3855
  %v4495 = vunpack.c.l.b16 %v3856
  %v4496 = vunpack.c.h.b16 %v3856
  %v4497 = vunpack.c.l.b16 %v3857
  %v4498 = vunpack.c.h.b16 %v3857
  %v4499 = vunpack.c.l.b16 %v3858
  %v4500 = vunpack.c.l.b16 %v3859
  %v4501 = vunpack.c.h.b16 %v3859
  %v4502 = vunpack.c.l.b16 %v3860
  %v4503 = vunpack.c.h.b16 %v3860
  %v4504 = vunpack.c.l.b16 %v3861
  %v4505 = vunpack.c.h.b16 %v3861
  %v4506 = vunpack.c.l.b16 %v3862
  %v4507 = vunpack.c.l.b16 %v3863
  %v4508 = vunpack.c.h.b16 %v3863
  %v4509 = vunpack.c.l.b16 %v3864
  %v4510 = vunpack.c.h.b16 %v3864
  %v4511 = vunpack.c.l.b16 %v3865
  %v4512 = vunpack.c.h.b16 %v3865
  %v4513 = vunpack.c.l.b16 %v3866
  %v4514 = vunpack.c.l.b16 %v3867
  %v4515 = vunpack.c.h.b16 %v3867
  %v4516 = vunpack.c.l.b16 %v3868
  %v4517 = vunpack.c.h.b16 %v3868
  %v4518 = vunpack.c.l.b16 %v3869
  %v4519 = vunpack.c.h.b16 %v3869
  %v4520 = vunpack.c.l.b16 %v3870
  %v4521 = vunpack.c.l.b16 %v3871
  %v4522 = vunpack.c.h.b16 %v3871
  %v4523 = vunpack.c.l.b16 %v3872
  %v4524 = vunpack.c.h.b16 %v3872
  %v4525 = vunpack.c.l.b16 %v3873
  %v4526 = vunpack.c.h.b16 %v3873
  %v4527 = vunpack.c.l.b16 %v3874
  %v4528 = vpack.c.b16 %v4143, %v4136
  %v4529 = vpack.c.b16 %v4144, %v4137
  %v4530 = vpack.c.b16 %v4145, %v4138
  %v4531 = vpack.c.b16 %v4146, %v4139
  %v4532 = vpack.c.b16 %v4147, %v4140
  %v4533 = vpack.c.b16 %v4148, %v4141
  %v4534 = vpack.c.b16 %v4149, %v4142
  %v4535 = vpack.c.b16 %v4157, %v4150
  %v4536 = vpack.c.b16 %v4158, %v4151
  %v4537 = vpack.c.b16 %v4159, %v4152
  %v4538 = vpack.c.b16 %v4160, %v4153
  %v4539 = vpack.c.b16 %v4161, %v4154
  %v4540 = vpack.c.b16 %v4162, %v4155
  %v4541 = vpack.c.b16 %v4163, %v4156
  %v4542 = vpack.c.b16 %v4171, %v4164
  %v4543 = vpack.c.b16 %v4172, %v4165
  %v4544 = vpack.c.b16 %v4173, %v4166
  %v4545 = vpack.c.b16 %v4174, %v4167
  %v4546 = vpack.c.b16 %v4175, %v4168
  %v4547 = vpack.c.b16 %v4176, %v4169
  %v4548 = vpack.c.b16 %v4177, %v4170
  %v4549 = vpack.c.b16 %v4185, %v4178
  %v4550 = vpack.c.b16 %v4186, %v4179
  %v4551 = vpack.c.b16 %v4187, %v4180
  %v4552 = vpack.c.b16 %v4188, %v4181
  %v4553 = vpack.c.b16 %v4189, %v4182
  %v4554 = vpack.c.b16 %v4190, %v4183
  %v4555 = vpack.c.b16 %v4191, %v4184
  %v4556 = vpack.c.b16 %v4199, %v4192
  %v4557 = vpack.c.b16 %v4200, %v4193
  %v4558 = vpack.c.b16 %v4201, %v4194
  %v4559 = vpack.c.b16 %v4202, %v4195
  %v4560 = vpack.c.b16 %v4203, %v4196
  %v4561 = vpack.c.b16 %v4204, %v4197
  %v4562 = vpack.c.b16 %v4205, %v4198
  %v4563 = vpack.c.b16 %v4213, %v4206
  %v4564 = vpack.c.b16 %v4214, %v4207
  %v4565 = vpack.c.b16 %v4215, %v4208
  %v4566 = vpack.c.b16 %v4216, %v4209
  %v4567 = vpack.c.b16 %v4217, %v4210
  %v4568 = vpack.c.b16 %v4218, %v4211
  %v4569 = vpack.c.b16 %v4219, %v4212
  %v4570 = vpack.c.b16 %v4227, %v4220
  %v4571 = vpack.c.b16 %v4228, %v4221
  %v4572 = vpack.c.b16 %v4229, %v4222
  %v4573 = vpack.c.b16 %v4230, %v4223
  %v4574 = vpack.c.b16 %v4231, %v4224
  %v4575 = vpack.c.b16 %v4232, %v4225
  %v4576 = vpack.c.b16 %v4233, %v4226
  %v4577 = vpack.c.b16 %v4241, %v4234
  %v4578 = vpack.c.b16 %v4242, %v4235
  %v4579 = vpack.c.b16 %v4243, %v4236
  %v4580 = vpack.c.b16 %v4244, %v4237
  %v4581 = vpack.c.b16 %v4245, %v4238
  %v4582 = vpack.c.b16 %v4246, %v4239
  %v4583 = vpack.c.b16 %v4247, %v4240
  %v4584 = vpack.c.b16 %v4255, %v4248
  %v4585 = vpack.c.b16 %v4256, %v4249
  %v4586 = vpack.c.b16 %v4257, %v4250
  %v4587 = vpack.c.b16 %v4258, %v4251
  %v4588 = vpack.c.b16 %v4259, %v4252
  %v4589 = vpack.c.b16 %v4260, %v4253
  %v4590 = vpack.c.b16 %v4261, %v4254
  %v4591 = vpack.c.b16 %v4269, %v4262
  %v4592 = vpack.c.b16 %v4270, %v4263
  %v4593 = vpack.c.b16 %v4271, %v4264
  %v4594 = vpack.c.b16 %v4272, %v4265
  %v4595 = vpack.c.b16 %v4273, %v4266
  %v4596 = vpack.c.b16 %v4274, %v4267
  %v4597 = vpack.c.b16 %v4275, %v4268
  %v4598 = vpack.c.b16 %v4283, %v4276
  %v4599 = vpack.c.b16 %v4284, %v4277
  %v4600 = vpack.c.b16 %v4285, %v4278
  %v4601 = vpack.c.b16 %v4286, %v4279
  %v4602 = vpack.c.b16 %v4287, %v4280
  %v4603 = vpack.c.b16 %v4288, %v4281
  %v4604 = vpack.c.b16 %v4289, %v4282
  %v4605 = vpack.c.b16 %v4297, %v4290
  %v4606 = vpack.c.b16 %v4298, %v4291
  %v4607 = vpack.c.b16 %v4299, %v4292
  %v4608 = vpack.c.b16 %v4300, %v4293
  %v4609 = vpack.c.b16 %v4301, %v4294
  %v4610 = vpack.c.b16 %v4302, %v4295
  %v4611 = vpack.c.b16 %v4303, %v4296
  %v4612 = vpack.c.b16 %v4311, %v4304
  %v4613 = vpack.c.b16 %v4312, %v4305
  %v4614 = vpack.c.b16 %v4313, %v4306
  %v4615 = vpack.c.b16 %v4314, %v4307
  %v4616 = vpack.c.b16 %v4315, %v4308
  %v4617 = vpack.c.b16 %v4316, %v4309
  %v4618 = vpack.c.b16 %v4317, %v4310
  %v4619 = vpack.c.b16 %v4325, %v4318
  %v4620 = vpack.c.b16 %v4326, %v4319
  %v4621 = vpack.c.b16 %v4327, %v4320
  %v4622 = vpack.c.b16 %v4328, %v4321
  %v4623 = vpack.c.b16 %v4329, %v4322
  %v4624 = vpack.c.b16 %v4330, %v4323
  %v4625 = vpack.c.b16 %v4331, %v4324
  %v4626 = vpack.c.b16 %v4339, %v4332
  %v4627 = vpack.c.b16 %v4340, %v4333
  %v4628 = vpack.c.b16 %v4341, %v4334
  %v4629 = vpack.c.b16 %v4342, %v4335
  %v4630 = vpack.c.b16 %v4343, %v4336
  %v4631 = vpack.c.b16 %v4344, %v4337
  %v4632 = vpack.c.b16 %v4345, %v4338
  %v4633 = vpack.c.b16 %v4353, %v4346
  %v4634 = vpack.c.b16 %v4354, %v4347
  %v4635 = vpack.c.b16 %v4355, %v4348
  %v4636 = vpack.c.b16 %v4356, %v4349
  %v4637 = vpack.c.b16 %v4357, %v4350
  %v4638 = vpack.c.b16 %v4358, %v4351
  %v4639 = vpack.c.b16 %v4359, %v4352
  %v4640 = vpack.c.b16 %v4367, %v4360
  %v4641 = vpack.c.b16 %v4368, %v4361
  %v4642 = vpack.c.b16 %v4369, %v4362
  %v4643 = vpack.c.b16 %v4370, %v4363
  %v4644 = vpack.c.b16 %v4371, %v4364
  %v4645 = vpack.c.b16 %v4372, %v4365
  %v4646 = vpack.c.b16 %v4373, %v4366
  %v4647 = vpack.c.b16 %v4381, %v4374
  %v4648 = vpack.c.b16 %v4382, %v4375
  %v4649 = vpack.c.b16 %v4383, %v4376
  %v4650 = vpack.c.b16 %v4384, %v4377
  %v4651 = vpack.c.b16 %v4385, %v4378
  %v4652 = vpack.c.b16 %v4386, %v4379
  %v4653 = vpack.c.b16 %v4387, %v4380
  %v4654 = vpack.c.b16 %v4395, %v4388
  %v4655 = vpack.c.b16 %v4396, %v4389
  %v4656 = vpack.c.b16 %v4397, %v4390
  %v4657 = vpack.c.b16 %v4398, %v4391
  %v4658 = vpack.c.b16 %v4399, %v4392
  %v4659 = vpack.c.b16 %v4400, %v4393
  %v4660 = vpack.c.b16 %v4401, %v4394
  %v4661 = vpack.c.b16 %v4409, %v4402
  %v4662 = vpack.c.b16 %v4410, %v4403
  %v4663 = vpack.c.b16 %v4411, %v4404
  %v4664 = vpack.c.b16 %v4412, %v4405
  %v4665 = vpack.c.b16 %v4413, %v4406
  %v4666 = vpack.c.b16 %v4414, %v4407
  %v4667 = vpack.c.b16 %v4415, %v4408
  %v4668 = vpack.c.b16 %v4423, %v4416
  %v4669 = vpack.c.b16 %v4424, %v4417
  %v4670 = vpack.c.b16 %v4425, %v4418
  %v4671 = vpack.c.b16 %v4426, %v4419
  %v4672 = vpack.c.b16 %v4427, %v4420
  %v4673 = vpack.c.b16 %v4428, %v4421
  %v4674 = vpack.c.b16 %v4429, %v4422
  %v4675 = vpack.c.b16 %v4437, %v4430
  %v4676 = vpack.c.b16 %v4438, %v4431
  %v4677 = vpack.c.b16 %v4439, %v4432
  %v4678 = vpack.c.b16 %v4440, %v4433
  %v4679 = vpack.c.b16 %v4441, %v4434
  %v4680 = vpack.c.b16 %v4442, %v4435
  %v4681 = vpack.c.b16 %v4443, %v4436
  %v4682 = vpack.c.b16 %v4451, %v4444
  %v4683 = vpack.c.b16 %v4452, %v4445
  %v4684 = vpack.c.b16 %v4453, %v4446
  %v4685 = vpack.c.b16 %v4454, %v4447
  %v4686 = vpack.c.b16 %v4455, %v4448
  %v4687 = vpack.c.b16 %v4456, %v4449
  %v4688 = vpack.c.b16 %v4457, %v4450
  %v4689 = vpack.c.b16 %v4465, %v4458
  %v4690 = vpack.c.b16 %v4466, %v4459
  %v4691 = vpack.c.b16 %v4467, %v4460
  %v4692 = vpack.c.b16 %v4468, %v4461
  %v4693 = vpack.c.b16 %v4469, %v4462
  %v4694 = vpack.c.b16 %v4470, %v4463
  %v4695 = vpack.c.b16 %v4471, %v4464
  %v4696 = vpack.c.b16 %v4479, %v4472
  %v4697 = vpack.c.b16 %v4480, %v4473
  %v4698 = vpack.c.b16 %v4481, %v4474
  %v4699 = vpack.c.b16 %v4482, %v4475
  %v4700 = vpack.c.b16 %v4483, %v4476
  %v4701 = vpack.c.b16 %v4484, %v4477
  %v4702 = vpack.c.b16 %v4485, %v4478
  %v4703 = vpack.c.b16 %v4493, %v4486
  %v4704 = vpack.c.b16 %v4494, %v4487
  %v4705 = vpack.c.b16 %v4495, %v4488
  %v4706 = vpack.c.b16 %v4496, %v4489
  %v4707 = vpack.c.b16 %v4497, %v4490
  %v4708 = vpack.c.b16 %v4498, %v4491
  %v4709 = vpack.c.b16 %v4499, %v4492
  %v4710 = vpack.c.b16 %v4507, %v4500
  %v4711 = vpack.c.b16 %v4508, %v4501
  %v4712 = vpack.c.b16 %v4509, %v4502
  %v4713 = vpack.c.b16 %v4510, %v4503
  %v4714 = vpack.c.b16 %v4511, %v4504
  %v4715 = vpack.c.b16 %v4512, %v4505
  %v4716 = vpack.c.b16 %v4513, %v4506
  %v4717 = vpack.c.b16 %v4521, %v4514
  %v4718 = vpack.c.b16 %v4522, %v4515
  %v4719 = vpack.c.b16 %v4523, %v4516
  %v4720 = vpack.c.b16 %v4524, %v4517
  %v4721 = vpack.c.b16 %v4525, %v4518
  %v4722 = vpack.c.b16 %v4526, %v4519
  %v4723 = vpack.c.b16 %v4527, %v4520
  %v4921 = vsel %vm1891, %v3646, 0
  %4923 = vmatprep.subr.bf16.mxu0 %v4578
  %4924 = vmatpush1.bf16.msra.mxu0 %v4577
  %4925 = vmatprep.subr.bf16.mxu0 %v4571
  %4926 = vmatpush1.bf16.msra.mxu0 %v4570
  %4927 = vmatprep.subr.bf16.mxu0 %v4564
  %4928 = vmatpush1.bf16.msra.mxu0 %v4563
  %4929 = vmatprep.subr.bf16.mxu0 %v4557
  %4930 = vmatpush1.bf16.msra.mxu0 %v4556
  %4931 = vmatprep.subr.bf16.mxu0 %v4550
  %4932 = vmatpush1.bf16.msra.mxu0 %v4549
  %4933 = vmatprep.subr.bf16.mxu0 %v4543
  %4934 = vmatpush1.bf16.msra.mxu0 %v4542
  %4935 = vmatprep.subr.bf16.mxu0 %v4536
  %4936 = vmatpush1.bf16.msra.mxu0 %v4535
  %4937 = vmatprep.subr.bf16.mxu0 %v4529
  %4938 = vmatpush1.bf16.msra.mxu0 %v4528
  %4939 = vmatprep.subr.bf16.mxu0 %v4634
  %4940 = vmatpush2.bf16.msra.mxu0 %v4633
  %4941 = vmatprep.subr.bf16.mxu0 %v4627
  %4942 = vmatpush2.bf16.msra.mxu0 %v4626
  %4943 = vmatprep.subr.bf16.mxu0 %v4620
  %4944 = vmatpush2.bf16.msra.mxu0 %v4619
  %4945 = vmatprep.subr.bf16.mxu0 %v4613
  %4946 = vmatpush2.bf16.msra.mxu0 %v4612
  %4947 = vmatprep.subr.bf16.mxu0 %v4606
  %4948 = vmatpush2.bf16.msra.mxu0 %v4605
  %4949 = vmatprep.subr.bf16.mxu0 %v4599
  %4950 = vmatpush2.bf16.msra.mxu0 %v4598
  %4951 = vmatprep.subr.bf16.mxu0 %v4592
  %4952 = vmatpush2.bf16.msra.mxu0 %v4591
  %4953 = vmatprep.subr.bf16.mxu0 %v4585
  %4954 = vmatpush2.bf16.msra.mxu0 %v4584
  %4955 = vmatprep.mubr.bf16.mxu0 %v3644
  %4956 = vmatmul.mubr.bf16.gmra.mxu0 %v3643
  %v4957 = vpop.f32.mrf.mxu0
  %v4958 = vadd.f32 %v3880, %v4957
  %v4959 = vpop.f32.mrf.mxu0
  %v4960 = vadd.f32 %v3884, %v4959
  %v4961 = vpop.f32.mrf.mxu0
  %v4962 = vpop.f32.mrf.mxu0
  %4963 = vdwg.mxu0
  %4964 = vmatprep.subr.bf16.mxu0 %v4690
  %4965 = vmatpush1.bf16.msra.mxu0 %v4689
  %4966 = vmatprep.subr.bf16.mxu0 %v4683
  %4967 = vmatpush1.bf16.msra.mxu0 %v4682
  %4968 = vmatprep.subr.bf16.mxu0 %v4676
  %4969 = vmatpush1.bf16.msra.mxu0 %v4675
  %4970 = vmatprep.subr.bf16.mxu0 %v4669
  %4971 = vmatpush1.bf16.msra.mxu0 %v4668
  %4972 = vmatprep.subr.bf16.mxu0 %v4662
  %4973 = vmatpush1.bf16.msra.mxu0 %v4661
  %4974 = vmatprep.subr.bf16.mxu0 %v4655
  %4975 = vmatpush1.bf16.msra.mxu0 %v4654
  %4976 = vmatprep.subr.bf16.mxu0 %v4648
  %4977 = vmatpush1.bf16.msra.mxu0 %v4647
  %4978 = vmatprep.subr.bf16.mxu0 %v4641
  %4979 = vmatpush1.bf16.msra.mxu0 %v4640
  %4980 = vmatprep.subr.bf16.mxu0 0
  %4981 = vmatpush2.bf16.msra.mxu0 0
  %4982 = vmatprep.subr.bf16.mxu0 0
  %4983 = vmatpush2.bf16.msra.mxu0 0
  %4984 = vmatprep.subr.bf16.mxu0 0
  %4985 = vmatpush2.bf16.msra.mxu0 0
  %4986 = vmatprep.subr.bf16.mxu0 0
  %4987 = vmatpush2.bf16.msra.mxu0 0
  %4988 = vmatprep.subr.bf16.mxu0 %v4718
  %4989 = vmatpush2.bf16.msra.mxu0 %v4717
  %4990 = vmatprep.subr.bf16.mxu0 %v4711
  %4991 = vmatpush2.bf16.msra.mxu0 %v4710
  %4992 = vmatprep.subr.bf16.mxu0 %v4704
  %4993 = vmatpush2.bf16.msra.mxu0 %v4703
  %4994 = vmatprep.subr.bf16.mxu0 %v4697
  %4995 = vmatpush2.bf16.msra.mxu0 %v4696
  %4996 = vmatprep.mubr.bf16.mxu0 %v4921
  %4997 = vmatmul.mubr.bf16.gmra.mxu0 %v3645
  %v4998 = vpop.f32.mrf.mxu0
  %v4999 = vadd.f32 %v4958, %v4998
  %v5000 = vpop.f32.mrf.mxu0
  %v5001 = vadd.f32 %v4960, %v5000
  %v5002 = vpop.f32.mrf.mxu0
  %v5003 = vpop.f32.mrf.mxu0
  %5004 = vdwg.mxu0
  %5005 = vmatprep.subr.bf16.mxu0 %v4580
  %5006 = vmatpush1.bf16.msra.mxu0 %v4579
  %5007 = vmatprep.subr.bf16.mxu0 %v4573
  %5008 = vmatpush1.bf16.msra.mxu0 %v4572
  %5009 = vmatprep.subr.bf16.mxu0 %v4566
  %5010 = vmatpush1.bf16.msra.mxu0 %v4565
  %5011 = vmatprep.subr.bf16.mxu0 %v4559
  %5012 = vmatpush1.bf16.msra.mxu0 %v4558
  %5013 = vmatprep.subr.bf16.mxu0 %v4552
  %5014 = vmatpush1.bf16.msra.mxu0 %v4551
  %5015 = vmatprep.subr.bf16.mxu0 %v4545
  %5016 = vmatpush1.bf16.msra.mxu0 %v4544
  %5017 = vmatprep.subr.bf16.mxu0 %v4538
  %5018 = vmatpush1.bf16.msra.mxu0 %v4537
  %5019 = vmatprep.subr.bf16.mxu0 %v4531
  %5020 = vmatpush1.bf16.msra.mxu0 %v4530
  %5021 = vmatprep.subr.bf16.mxu0 %v4636
  %5022 = vmatpush2.bf16.msra.mxu0 %v4635
  %5023 = vmatprep.subr.bf16.mxu0 %v4629
  %5024 = vmatpush2.bf16.msra.mxu0 %v4628
  %5025 = vmatprep.subr.bf16.mxu0 %v4622
  %5026 = vmatpush2.bf16.msra.mxu0 %v4621
  %5027 = vmatprep.subr.bf16.mxu0 %v4615
  %5028 = vmatpush2.bf16.msra.mxu0 %v4614
  %5029 = vmatprep.subr.bf16.mxu0 %v4608
  %5030 = vmatpush2.bf16.msra.mxu0 %v4607
  %5031 = vmatprep.subr.bf16.mxu0 %v4601
  %5032 = vmatpush2.bf16.msra.mxu0 %v4600
  %5033 = vmatprep.subr.bf16.mxu0 %v4594
  %5034 = vmatpush2.bf16.msra.mxu0 %v4593
  %5035 = vmatprep.subr.bf16.mxu0 %v4587
  %5036 = vmatpush2.bf16.msra.mxu0 %v4586
  %5037 = vmatprep.mubr.bf16.mxu0 %v3644
  %5038 = vmatmul.mubr.bf16.gmra.mxu0 %v3643
  %v5039 = vpop.f32.mrf.mxu0
  %v5040 = vadd.f32 %v3888, %v5039
  %v5041 = vpop.f32.mrf.mxu0
  %v5042 = vadd.f32 %v3892, %v5041
  %v5043 = vpop.f32.mrf.mxu0
  %v5044 = vpop.f32.mrf.mxu0
  %5045 = vdwg.mxu0
  %5046 = vmatprep.subr.bf16.mxu0 %v4692
  %5047 = vmatpush1.bf16.msra.mxu0 %v4691
  %5048 = vmatprep.subr.bf16.mxu0 %v4685
  %5049 = vmatpush1.bf16.msra.mxu0 %v4684
  %5050 = vmatprep.subr.bf16.mxu0 %v4678
  %5051 = vmatpush1.bf16.msra.mxu0 %v4677
  %5052 = vmatprep.subr.bf16.mxu0 %v4671
  %5053 = vmatpush1.bf16.msra.mxu0 %v4670
  %5054 = vmatprep.subr.bf16.mxu0 %v4664
  %5055 = vmatpush1.bf16.msra.mxu0 %v4663
  %5056 = vmatprep.subr.bf16.mxu0 %v4657
  %5057 = vmatpush1.bf16.msra.mxu0 %v4656
  %5058 = vmatprep.subr.bf16.mxu0 %v4650
  %5059 = vmatpush1.bf16.msra.mxu0 %v4649
  %5060 = vmatprep.subr.bf16.mxu0 %v4643
  %5061 = vmatpush1.bf16.msra.mxu0 %v4642
  %5062 = vmatprep.subr.bf16.mxu0 0
  %5063 = vmatpush2.bf16.msra.mxu0 0
  %5064 = vmatprep.subr.bf16.mxu0 0
  %5065 = vmatpush2.bf16.msra.mxu0 0
  %5066 = vmatprep.subr.bf16.mxu0 0
  %5067 = vmatpush2.bf16.msra.mxu0 0
  %5068 = vmatprep.subr.bf16.mxu0 0
  %5069 = vmatpush2.bf16.msra.mxu0 0
  %5070 = vmatprep.subr.bf16.mxu0 %v4720
  %5071 = vmatpush2.bf16.msra.mxu0 %v4719
  %5072 = vmatprep.subr.bf16.mxu0 %v4713
  %5073 = vmatpush2.bf16.msra.mxu0 %v4712
  %5074 = vmatprep.subr.bf16.mxu0 %v4706
  %5075 = vmatpush2.bf16.msra.mxu0 %v4705
  %5076 = vmatprep.subr.bf16.mxu0 %v4699
  %5077 = vmatpush2.bf16.msra.mxu0 %v4698
  %5078 = vmatprep.mubr.bf16.mxu0 %v4921
  %5079 = vmatmul.mubr.bf16.gmra.mxu0 %v3645
  %v5080 = vpop.f32.mrf.mxu0
  %v5081 = vadd.f32 %v5040, %v5080
  %v5082 = vpop.f32.mrf.mxu0
  %v5083 = vadd.f32 %v5042, %v5082
  %v5084 = vpop.f32.mrf.mxu0
  %v5085 = vpop.f32.mrf.mxu0
  %5086 = vdwg.mxu0
  %5087 = vmatprep.subr.bf16.mxu0 %v4582
  %5088 = vmatpush1.bf16.msra.mxu0 %v4581
  %5089 = vmatprep.subr.bf16.mxu0 %v4575
  %5090 = vmatpush1.bf16.msra.mxu0 %v4574
  %5091 = vmatprep.subr.bf16.mxu0 %v4568
  %5092 = vmatpush1.bf16.msra.mxu0 %v4567
  %5093 = vmatprep.subr.bf16.mxu0 %v4561
  %5094 = vmatpush1.bf16.msra.mxu0 %v4560
  %5095 = vmatprep.subr.bf16.mxu0 %v4554
  %5096 = vmatpush1.bf16.msra.mxu0 %v4553
  %5097 = vmatprep.subr.bf16.mxu0 %v4547
  %5098 = vmatpush1.bf16.msra.mxu0 %v4546
  %5099 = vmatprep.subr.bf16.mxu0 %v4540
  %5100 = vmatpush1.bf16.msra.mxu0 %v4539
  %5101 = vmatprep.subr.bf16.mxu0 %v4533
  %5102 = vmatpush1.bf16.msra.mxu0 %v4532
  %5103 = vmatprep.subr.bf16.mxu0 %v4638
  %5104 = vmatpush2.bf16.msra.mxu0 %v4637
  %5105 = vmatprep.subr.bf16.mxu0 %v4631
  %5106 = vmatpush2.bf16.msra.mxu0 %v4630
  %5107 = vmatprep.subr.bf16.mxu0 %v4624
  %5108 = vmatpush2.bf16.msra.mxu0 %v4623
  %5109 = vmatprep.subr.bf16.mxu0 %v4617
  %5110 = vmatpush2.bf16.msra.mxu0 %v4616
  %5111 = vmatprep.subr.bf16.mxu0 %v4610
  %5112 = vmatpush2.bf16.msra.mxu0 %v4609
  %5113 = vmatprep.subr.bf16.mxu0 %v4603
  %5114 = vmatpush2.bf16.msra.mxu0 %v4602
  %5115 = vmatprep.subr.bf16.mxu0 %v4596
  %5116 = vmatpush2.bf16.msra.mxu0 %v4595
  %5117 = vmatprep.subr.bf16.mxu0 %v4589
  %5118 = vmatpush2.bf16.msra.mxu0 %v4588
  %5119 = vmatprep.mubr.bf16.mxu0 %v3644
  %5120 = vmatmul.mubr.bf16.gmra.mxu0 %v3643
  %v5121 = vpop.f32.mrf.mxu0
  %v5122 = vadd.f32 %v3896, %v5121
  %v5123 = vpop.f32.mrf.mxu0
  %v5124 = vadd.f32 %v3900, %v5123
  %v5125 = vpop.f32.mrf.mxu0
  %v5126 = vpop.f32.mrf.mxu0
  %5127 = vdwg.mxu0
  %5128 = vmatprep.subr.bf16.mxu0 %v4694
  %5129 = vmatpush1.bf16.msra.mxu0 %v4693
  %5130 = vmatprep.subr.bf16.mxu0 %v4687
  %5131 = vmatpush1.bf16.msra.mxu0 %v4686
  %5132 = vmatprep.subr.bf16.mxu0 %v4680
  %5133 = vmatpush1.bf16.msra.mxu0 %v4679
  %5134 = vmatprep.subr.bf16.mxu0 %v4673
  %5135 = vmatpush1.bf16.msra.mxu0 %v4672
  %5136 = vmatprep.subr.bf16.mxu0 %v4666
  %5137 = vmatpush1.bf16.msra.mxu0 %v4665
  %5138 = vmatprep.subr.bf16.mxu0 %v4659
  %5139 = vmatpush1.bf16.msra.mxu0 %v4658
  %5140 = vmatprep.subr.bf16.mxu0 %v4652
  %5141 = vmatpush1.bf16.msra.mxu0 %v4651
  %5142 = vmatprep.subr.bf16.mxu0 %v4645
  %5143 = vmatpush1.bf16.msra.mxu0 %v4644
  %5144 = vmatprep.subr.bf16.mxu0 0
  %5145 = vmatpush2.bf16.msra.mxu0 0
  %5146 = vmatprep.subr.bf16.mxu0 0
  %5147 = vmatpush2.bf16.msra.mxu0 0
  %5148 = vmatprep.subr.bf16.mxu0 0
  %5149 = vmatpush2.bf16.msra.mxu0 0
  %5150 = vmatprep.subr.bf16.mxu0 0
  %5151 = vmatpush2.bf16.msra.mxu0 0
  %5152 = vmatprep.subr.bf16.mxu0 %v4722
  %5153 = vmatpush2.bf16.msra.mxu0 %v4721
  %5154 = vmatprep.subr.bf16.mxu0 %v4715
  %5155 = vmatpush2.bf16.msra.mxu0 %v4714
  %5156 = vmatprep.subr.bf16.mxu0 %v4708
  %5157 = vmatpush2.bf16.msra.mxu0 %v4707
  %5158 = vmatprep.subr.bf16.mxu0 %v4701
  %5159 = vmatpush2.bf16.msra.mxu0 %v4700
  %5160 = vmatprep.mubr.bf16.mxu0 %v4921
  %5161 = vmatmul.mubr.bf16.gmra.mxu0 %v3645
  %v5162 = vpop.f32.mrf.mxu0
  %v5163 = vadd.f32 %v5122, %v5162
  %v5164 = vpop.f32.mrf.mxu0
  %v5165 = vadd.f32 %v5124, %v5164
  %v5166 = vpop.f32.mrf.mxu0
  %v5167 = vpop.f32.mrf.mxu0
  %5168 = vdwg.mxu0
  %5169 = vmatprep.subr.bf16.mxu0 0
  %5170 = vmatpush1.bf16.msra.mxu0 %v4583
  %5171 = vmatprep.subr.bf16.mxu0 0
  %5172 = vmatpush1.bf16.msra.mxu0 %v4576
  %5173 = vmatprep.subr.bf16.mxu0 0
  %5174 = vmatpush1.bf16.msra.mxu0 %v4569
  %5175 = vmatprep.subr.bf16.mxu0 0
  %5176 = vmatpush1.bf16.msra.mxu0 %v4562
  %5177 = vmatprep.subr.bf16.mxu0 0
  %5178 = vmatpush1.bf16.msra.mxu0 %v4555
  %5179 = vmatprep.subr.bf16.mxu0 0
  %5180 = vmatpush1.bf16.msra.mxu0 %v4548
  %5181 = vmatprep.subr.bf16.mxu0 0
  %5182 = vmatpush1.bf16.msra.mxu0 %v4541
  %5183 = vmatprep.subr.bf16.mxu0 0
  %5184 = vmatpush1.bf16.msra.mxu0 %v4534
  %5185 = vmatprep.subr.bf16.mxu0 0
  %5186 = vmatpush2.bf16.msra.mxu0 %v4639
  %5187 = vmatprep.subr.bf16.mxu0 0
  %5188 = vmatpush2.bf16.msra.mxu0 %v4632
  %5189 = vmatprep.subr.bf16.mxu0 0
  %5190 = vmatpush2.bf16.msra.mxu0 %v4625
  %5191 = vmatprep.subr.bf16.mxu0 0
  %5192 = vmatpush2.bf16.msra.mxu0 %v4618
  %5193 = vmatprep.subr.bf16.mxu0 0
  %5194 = vmatpush2.bf16.msra.mxu0 %v4611
  %5195 = vmatprep.subr.bf16.mxu0 0
  %5196 = vmatpush2.bf16.msra.mxu0 %v4604
  %5197 = vmatprep.subr.bf16.mxu0 0
  %5198 = vmatpush2.bf16.msra.mxu0 %v4597
  %5199 = vmatprep.subr.bf16.mxu0 0
  %5200 = vmatpush2.bf16.msra.mxu0 %v4590
  %5201 = vmatprep.mubr.bf16.mxu0 %v3644
  %5202 = vmatmul.mubr.bf16.gmra.mxu0 %v3643
  %v5203 = vpop.f32.mrf.mxu0
  %v5204 = vadd.f32 %v3904, %v5203
  %v5205 = vpop.f32.mrf.mxu0
  %v5206 = vpop.f32.mrf.mxu0
  %v5207 = vpop.f32.mrf.mxu0
  %5208 = vdwg.mxu0
  %5209 = vmatprep.subr.bf16.mxu0 0
  %5210 = vmatpush1.bf16.msra.mxu0 %v4695
  %5211 = vmatprep.subr.bf16.mxu0 0
  %5212 = vmatpush1.bf16.msra.mxu0 %v4688
  %5213 = vmatprep.subr.bf16.mxu0 0
  %5214 = vmatpush1.bf16.msra.mxu0 %v4681
  %5215 = vmatprep.subr.bf16.mxu0 0
  %5216 = vmatpush1.bf16.msra.mxu0 %v4674
  %5217 = vmatprep.subr.bf16.mxu0 0
  %5218 = vmatpush1.bf16.msra.mxu0 %v4667
  %5219 = vmatprep.subr.bf16.mxu0 0
  %5220 = vmatpush1.bf16.msra.mxu0 %v4660
  %5221 = vmatprep.subr.bf16.mxu0 0
  %5222 = vmatpush1.bf16.msra.mxu0 %v4653
  %5223 = vmatprep.subr.bf16.mxu0 0
  %5224 = vmatpush1.bf16.msra.mxu0 %v4646
  %5225 = vmatprep.subr.bf16.mxu0 0
  %5226 = vmatpush2.bf16.msra.mxu0 0
  %5227 = vmatprep.subr.bf16.mxu0 0
  %5228 = vmatpush2.bf16.msra.mxu0 0
  %5229 = vmatprep.subr.bf16.mxu0 0
  %5230 = vmatpush2.bf16.msra.mxu0 0
  %5231 = vmatprep.subr.bf16.mxu0 0
  %5232 = vmatpush2.bf16.msra.mxu0 0
  %5233 = vmatprep.subr.bf16.mxu0 0
  %5234 = vmatpush2.bf16.msra.mxu0 %v4723
  %5235 = vmatprep.subr.bf16.mxu0 0
  %5236 = vmatpush2.bf16.msra.mxu0 %v4716
  %5237 = vmatprep.subr.bf16.mxu0 0
  %5238 = vmatpush2.bf16.msra.mxu0 %v4709
  %5239 = vmatprep.subr.bf16.mxu0 0
  %5240 = vmatpush2.bf16.msra.mxu0 %v4702
  %5241 = vmatprep.mubr.bf16.mxu0 %v4921
  %5242 = vmatmul.mubr.bf16.gmra.mxu0 %v3645
  %v5243 = vpop.f32.mrf.mxu0
  %v5244 = vadd.f32 %v5204, %v5243
  %v5245 = vpop.f32.mrf.mxu0
  %v5246 = vpop.f32.mrf.mxu0
  %v5247 = vpop.f32.mrf.mxu0
  %5248 = vdwg.mxu0
  %v5249 = vmax.f32 %v4999, 0.0
  %v5250 = vmax.f32 %v5001, 0.0
  %v5251 = vmax.f32 %v5081, 0.0
  %v5252 = vmax.f32 %v5083, 0.0
  %v5253 = vadd.f32 %v3639, %v5249
  %v5254 = vadd.f32 %v3640, %v5250
  %v5255 = vadd.f32 %v3641, %v5251
  %v5256 = vadd.f32 %v3642, %v5252
  %v5257 = vmax.f32 %v5163, 0.0
  %v5258 = vmax.f32 %v5165, 0.0
  %v5259 = vmax.f32 %v5244, 0.0
  %5264 = vrot.lane.b32.xlu0 %v5252, 64
  %v5265 = vpop.permute.xlu0 %5264
  %5266 = vrot.lane.b32.xlu0 %v5257, 64
  %v5267 = vpop.permute.xlu0 %5266
  %5268 = vrot.lane.b32.xlu0 %v5258, 64
  %v5269 = vpop.permute.xlu0 %5268
  %5270 = vrot.lane.b32.xlu0 %v5259, 64
  %v5271 = vpop.permute.xlu0 %5270
  %v5272 = vsel %vm1891, %v5265, %v5267
  %v5273 = vsel %vm1891, %v5267, %v5269
  %v5274 = vsel %vm1891, %v5269, %v5271
  %v5279 = vadd.f32 %v3639, %v5272
  %v5280 = vadd.f32 %v3640, %v5273
  %v5281 = vadd.f32 %v3641, %v5274
  %v5282 = vadd.f32 %v3642, %v5271
  %5283 = vst [vmem:[#allocation5] sm:$0xff] %v5279
  %5284 = vst [vmem:[#allocation5 + $0x8] sm:$0xff] %v5280
  %5285 = vst [vmem:[#allocation5 + $0x10] sm:$0xff] %v5281
  %5286 = vst.msk [vmem:[#allocation5 + $0x18] sm:$0xff] %vm1891, %v5282
  %5287 = vst [vmem:[#allocation5 + $0x20] sm:$0xff] %v5253
  %5288 = vst [vmem:[#allocation5 + $0x28] sm:$0xff] %v5254
  %5289 = vst [vmem:[#allocation5 + $0x30] sm:$0xff] %v5255
  %5290 = vst.msk [vmem:[#allocation5 + $0x38] sm:$0xff] %vm1891, %v5256
  %s5291 = smul.u32 %s3647, 1
  %s5292 = sshll.u32 %s5291, 4
  %5293 = dma.done %s480, %s5292
  %v5294 = vld [vmem:[#allocation5] sm:$0xff]
  %v5295 = vld [vmem:[#allocation5 + $0x8] sm:$0xff]
  %v5296 = vld [vmem:[#allocation5 + $0x10] sm:$0xff]
  %v5297 = vld [vmem:[#allocation5 + $0x18] sm:$0xff]
  %v5298 = vld [vmem:[#allocation5 + $0x20] sm:$0xff]
  %v5299 = vld [vmem:[#allocation5 + $0x28] sm:$0xff]
  %v5300 = vld [vmem:[#allocation5 + $0x30] sm:$0xff]
  %v5301 = vld [vmem:[#allocation5 + $0x38] sm:$0xff]
  %v5302 = vpack.c.bf16 %v5298, %v5294
  %v5303 = vpack.c.bf16 %v5299, %v5295
  %v5304 = vpack.c.bf16 %v5300, %v5296
  %v5305 = vpack.c.bf16 %v5301, %v5297
  %v5306 = vld [vmem:[#allocation7] sm:$0xf]
  %v5307 = vld [vmem:[#allocation7 + $0x4] sm:$0xf]
  %v5308 = vld [vmem:[#allocation7 + $0x8] sm:$0xf]
  %v5309 = vld [vmem:[#allocation7 + $0xc] sm:$0xf]
  %v5310 = vld [vmem:[#allocation7 + $0x10] sm:$0xf]
  %v5311 = vld [vmem:[#allocation7 + $0x14] sm:$0xf]
  %v5312 = vld [vmem:[#allocation7 + $0x18] sm:$0xf]
  %v5313 = vld [vmem:[#allocation7 + $0x1c] sm:$0xf]
  %v5314 = vld [vmem:[#allocation7 + $0x20] sm:$0xf]
  %v5315 = vld [vmem:[#allocation7 + $0x24] sm:$0xf]
  %v5316 = vld [vmem:[#allocation7 + $0x28] sm:$0xf]
  %v5317 = vld [vmem:[#allocation7 + $0x2c] sm:$0xf]
  %v5318 = vld [vmem:[#allocation7 + $0x30] sm:$0xf]
  %v5319 = vld [vmem:[#allocation7 + $0x34] sm:$0xf]
  %v5320 = vld [vmem:[#allocation7 + $0x38] sm:$0xf]
  %v5321 = vld [vmem:[#allocation7 + $0x3c] sm:$0xf]
  %v5322 = vld [vmem:[#allocation7 + $0x40] sm:$0xf]
  %v5323 = vld [vmem:[#allocation7 + $0x44] sm:$0xf]
  %v5324 = vld [vmem:[#allocation7 + $0x48] sm:$0xf]
  %v5325 = vld [vmem:[#allocation7 + $0x4c] sm:$0xf]
  %v5326 = vld [vmem:[#allocation7 + $0x50] sm:$0xf]
  %v5327 = vld [vmem:[#allocation7 + $0x54] sm:$0xf]
  %v5328 = vld [vmem:[#allocation7 + $0x58] sm:$0xf]
  %v5329 = vld [vmem:[#allocation7 + $0x5c] sm:$0xf]
  %v5330 = vld [vmem:[#allocation7 + $0x60] sm:$0xf]
  %v5331 = vld [vmem:[#allocation7 + $0x64] sm:$0xf]
  %v5332 = vld [vmem:[#allocation7 + $0x68] sm:$0xf]
  %v5333 = vld [vmem:[#allocation7 + $0x6c] sm:$0xf]
  %v5334 = vld [vmem:[#allocation7 + $0x70] sm:$0xf]
  %v5335 = vld [vmem:[#allocation7 + $0x74] sm:$0xf]
  %v5336 = vld [vmem:[#allocation7 + $0x78] sm:$0xf]
  %v5337 = vld [vmem:[#allocation7 + $0x7c] sm:$0xf]
  %v5338 = vld [vmem:[#allocation7 + $0x80] sm:$0xf]
  %v5339 = vld [vmem:[#allocation7 + $0x84] sm:$0xf]
  %v5340 = vld [vmem:[#allocation7 + $0x88] sm:$0xf]
  %v5341 = vld [vmem:[#allocation7 + $0x8c] sm:$0xf]
  %v5342 = vld [vmem:[#allocation7 + $0x90] sm:$0xf]
  %v5343 = vld [vmem:[#allocation7 + $0x94] sm:$0xf]
  %v5344 = vld [vmem:[#allocation7 + $0x98] sm:$0xf]
  %v5345 = vld [vmem:[#allocation7 + $0x9c] sm:$0xf]
  %v5346 = vld [vmem:[#allocation7 + $0xa0] sm:$0xf]
  %v5347 = vld [vmem:[#allocation7 + $0xa4] sm:$0xf]
  %v5348 = vld [vmem:[#allocation7 + $0xa8] sm:$0xf]
  %v5349 = vld [vmem:[#allocation7 + $0xac] sm:$0xf]
  %v5350 = vld [vmem:[#allocation7 + $0xb0] sm:$0xf]
  %v5351 = vld [vmem:[#allocation7 + $0xb4] sm:$0xf]
  %v5352 = vld [vmem:[#allocation7 + $0xb8] sm:$0xf]
  %v5353 = vld [vmem:[#allocation7 + $0xbc] sm:$0xf]
  %v5354 = vld [vmem:[#allocation7 + $0xc0] sm:$0xf]
  %v5355 = vld [vmem:[#allocation7 + $0xc4] sm:$0xf]
  %v5356 = vld [vmem:[#allocation7 + $0xc8] sm:$0xf]
  %v5357 = vld [vmem:[#allocation7 + $0xcc] sm:$0xf]
  %v5358 = vld [vmem:[#allocation7 + $0xd0] sm:$0xf]
  %v5359 = vld [vmem:[#allocation7 + $0xd4] sm:$0xf]
  %v5360 = vld [vmem:[#allocation7 + $0xd8] sm:$0xf]
  %v5361 = vld [vmem:[#allocation7 + $0xdc] sm:$0xf]
  %v5362 = vld [vmem:[%s12] sm:$0x1]
  %v5364 = vlaneseq
  %v5365 = vshrl.u32 %v5364, 7
  %v5366 = vsub.s32 0, %v5365
  %v5367 = vrot.slane %v5362, %v5366
  %v5425 = vunpack.c.l.b16 %v5306
  %v5426 = vunpack.c.l.b16 %v5307
  %v5427 = vunpack.c.l.b16 %v5308
  %v5428 = vunpack.c.l.b16 %v5309
  %v5429 = vunpack.c.l.b16 %v5310
  %v5430 = vunpack.c.l.b16 %v5311
  %v5431 = vunpack.c.l.b16 %v5312
  %v5432 = vunpack.c.l.b16 %v5313
  %v5433 = vunpack.c.l.b16 %v5314
  %v5434 = vunpack.c.l.b16 %v5315
  %v5435 = vunpack.c.l.b16 %v5316
  %v5436 = vunpack.c.l.b16 %v5317
  %v5437 = vunpack.c.l.b16 %v5318
  %v5438 = vunpack.c.l.b16 %v5319
  %v5439 = vunpack.c.l.b16 %v5320
  %v5440 = vunpack.c.l.b16 %v5321
  %v5441 = vunpack.c.l.b16 %v5322
  %v5442 = vunpack.c.l.b16 %v5323
  %v5443 = vunpack.c.l.b16 %v5324
  %v5444 = vunpack.c.l.b16 %v5325
  %v5445 = vunpack.c.l.b16 %v5326
  %v5446 = vunpack.c.l.b16 %v5327
  %v5447 = vunpack.c.l.b16 %v5328
  %v5448 = vunpack.c.l.b16 %v5329
  %v5449 = vunpack.c.l.b16 %v5330
  %v5450 = vunpack.c.l.b16 %v5331
  %v5451 = vunpack.c.l.b16 %v5332
  %v5452 = vunpack.c.l.b16 %v5333
  %v5453 = vunpack.c.l.b16 %v5334
  %v5454 = vunpack.c.l.b16 %v5335
  %v5455 = vunpack.c.l.b16 %v5336
  %v5456 = vunpack.c.l.b16 %v5337
  %v5457 = vunpack.c.l.b16 %v5338
  %v5458 = vunpack.c.l.b16 %v5339
  %v5459 = vunpack.c.l.b16 %v5340
  %v5460 = vunpack.c.l.b16 %v5341
  %v5461 = vunpack.c.l.b16 %v5342
  %v5462 = vunpack.c.l.b16 %v5343
  %v5463 = vunpack.c.l.b16 %v5344
  %v5464 = vunpack.c.l.b16 %v5345
  %v5465 = vunpack.c.l.b16 %v5346
  %v5466 = vunpack.c.l.b16 %v5347
  %v5467 = vunpack.c.l.b16 %v5348
  %v5468 = vunpack.c.l.b16 %v5349
  %v5469 = vunpack.c.l.b16 %v5350
  %v5470 = vunpack.c.l.b16 %v5351
  %v5471 = vunpack.c.l.b16 %v5352
  %v5472 = vunpack.c.l.b16 %v5353
  %v5473 = vunpack.c.l.b16 %v5354
  %v5474 = vunpack.c.l.b16 %v5355
  %v5475 = vunpack.c.l.b16 %v5356
  %v5476 = vunpack.c.l.b16 %v5357
  %v5477 = vunpack.c.l.b16 %v5358
  %v5478 = vunpack.c.l.b16 %v5359
  %v5479 = vunpack.c.l.b16 %v5360
  %v5480 = vunpack.c.l.b16 %v5361
  %v5481 = vpack.c.b16 %v5426, %v5425
  %v5482 = vpack.c.b16 %v5428, %v5427
  %v5483 = vpack.c.b16 %v5430, %v5429
  %v5484 = vpack.c.b16 %v5432, %v5431
  %v5485 = vpack.c.b16 %v5434, %v5433
  %v5486 = vpack.c.b16 %v5436, %v5435
  %v5487 = vpack.c.b16 %v5438, %v5437
  %v5488 = vpack.c.b16 %v5440, %v5439
  %v5489 = vpack.c.b16 %v5442, %v5441
  %v5490 = vpack.c.b16 %v5444, %v5443
  %v5491 = vpack.c.b16 %v5446, %v5445
  %v5492 = vpack.c.b16 %v5448, %v5447
  %v5493 = vpack.c.b16 %v5450, %v5449
  %v5494 = vpack.c.b16 %v5452, %v5451
  %v5495 = vpack.c.b16 %v5454, %v5453
  %v5496 = vpack.c.b16 %v5456, %v5455
  %v5497 = vpack.c.b16 %v5458, %v5457
  %v5498 = vpack.c.b16 %v5460, %v5459
  %v5499 = vpack.c.b16 %v5462, %v5461
  %v5500 = vpack.c.b16 %v5464, %v5463
  %v5501 = vpack.c.b16 %v5466, %v5465
  %v5502 = vpack.c.b16 %v5468, %v5467
  %v5503 = vpack.c.b16 %v5470, %v5469
  %v5504 = vpack.c.b16 %v5472, %v5471
  %v5505 = vpack.c.b16 %v5474, %v5473
  %v5506 = vpack.c.b16 %v5476, %v5475
  %v5507 = vpack.c.b16 %v5478, %v5477
  %v5508 = vpack.c.b16 %v5480, %v5479
  %v5538 = vsel %vm1891, %v5305, 0
  %5540 = vmatprep.subr.bf16.mxu0 0
  %5541 = vmatpush1.bf16.msra.mxu0 %v5488
  %5542 = vmatprep.subr.bf16.mxu0 0
  %5543 = vmatpush1.bf16.msra.mxu0 %v5487
  %5544 = vmatprep.subr.bf16.mxu0 0
  %5545 = vmatpush1.bf16.msra.mxu0 %v5486
  %5546 = vmatprep.subr.bf16.mxu0 0
  %5547 = vmatpush1.bf16.msra.mxu0 %v5485
  %5548 = vmatprep.subr.bf16.mxu0 0
  %5549 = vmatpush1.bf16.msra.mxu0 %v5484
  %5550 = vmatprep.subr.bf16.mxu0 0
  %5551 = vmatpush1.bf16.msra.mxu0 %v5483
  %5552 = vmatprep.subr.bf16.mxu0 0
  %5553 = vmatpush1.bf16.msra.mxu0 %v5482
  %5554 = vmatprep.subr.bf16.mxu0 0
  %5555 = vmatpush1.bf16.msra.mxu0 %v5481
  %5556 = vmatprep.subr.bf16.mxu0 0
  %5557 = vmatpush2.bf16.msra.mxu0 %v5496
  %5558 = vmatprep.subr.bf16.mxu0 0
  %5559 = vmatpush2.bf16.msra.mxu0 %v5495
  %5560 = vmatprep.subr.bf16.mxu0 0
  %5561 = vmatpush2.bf16.msra.mxu0 %v5494
  %5562 = vmatprep.subr.bf16.mxu0 0
  %5563 = vmatpush2.bf16.msra.mxu0 %v5493
  %5564 = vmatprep.subr.bf16.mxu0 0
  %5565 = vmatpush2.bf16.msra.mxu0 %v5492
  %5566 = vmatprep.subr.bf16.mxu0 0
  %5567 = vmatpush2.bf16.msra.mxu0 %v5491
  %5568 = vmatprep.subr.bf16.mxu0 0
  %5569 = vmatpush2.bf16.msra.mxu0 %v5490
  %5570 = vmatprep.subr.bf16.mxu0 0
  %5571 = vmatpush2.bf16.msra.mxu0 %v5489
  %5572 = vmatprep.mubr.bf16.mxu0 %v5303
  %5573 = vmatmul.mubr.bf16.gmra.mxu0 %v5302
  %v5574 = vpop.f32.mrf.mxu0
  %v5575 = vadd.f32 %v5367, %v5574
  %v5576 = vpop.f32.mrf.mxu0
  %v5577 = vpop.f32.mrf.mxu0
  %v5578 = vadd.f32 %v5367, %v5577
  %v5579 = vpop.f32.mrf.mxu0
  %5580 = vdwg.mxu0
  %5581 = vmatprep.subr.bf16.mxu0 0
  %5582 = vmatpush1.bf16.msra.mxu0 %v5504
  %5583 = vmatprep.subr.bf16.mxu0 0
  %5584 = vmatpush1.bf16.msra.mxu0 %v5503
  %5585 = vmatprep.subr.bf16.mxu0 0
  %5586 = vmatpush1.bf16.msra.mxu0 %v5502
  %5587 = vmatprep.subr.bf16.mxu0 0
  %5588 = vmatpush1.bf16.msra.mxu0 %v5501
  %5589 = vmatprep.subr.bf16.mxu0 0
  %5590 = vmatpush1.bf16.msra.mxu0 %v5500
  %5591 = vmatprep.subr.bf16.mxu0 0
  %5592 = vmatpush1.bf16.msra.mxu0 %v5499
  %5593 = vmatprep.subr.bf16.mxu0 0
  %5594 = vmatpush1.bf16.msra.mxu0 %v5498
  %5595 = vmatprep.subr.bf16.mxu0 0
  %5596 = vmatpush1.bf16.msra.mxu0 %v5497
  %5597 = vmatprep.subr.bf16.mxu0 0
  %5598 = vmatpush2.bf16.msra.mxu0 0
  %5599 = vmatprep.subr.bf16.mxu0 0
  %5600 = vmatpush2.bf16.msra.mxu0 0
  %5601 = vmatprep.subr.bf16.mxu0 0
  %5602 = vmatpush2.bf16.msra.mxu0 0
  %5603 = vmatprep.subr.bf16.mxu0 0
  %5604 = vmatpush2.bf16.msra.mxu0 0
  %5605 = vmatprep.subr.bf16.mxu0 0
  %5606 = vmatpush2.bf16.msra.mxu0 %v5508
  %5607 = vmatprep.subr.bf16.mxu0 0
  %5608 = vmatpush2.bf16.msra.mxu0 %v5507
  %5609 = vmatprep.subr.bf16.mxu0 0
  %5610 = vmatpush2.bf16.msra.mxu0 %v5506
  %5611 = vmatprep.subr.bf16.mxu0 0
  %5612 = vmatpush2.bf16.msra.mxu0 %v5505
  %5613 = vmatprep.mubr.bf16.mxu0 %v5538
  %5614 = vmatmul.mubr.bf16.gmra.mxu0 %v5304
  %v5615 = vpop.f32.mrf.mxu0
  %v5616 = vadd.f32 %v5575, %v5615
  %v5617 = vpop.f32.mrf.mxu0
  %v5618 = vpop.f32.mrf.mxu0
  %v5619 = vadd.f32 %v5578, %v5618
  %v5620 = vpop.f32.mrf.mxu0
  %5621 = vdwg.mxu0
  %v5622 = vlaneseq
  %v5623 = vand.u32 %v5622, 127
  %vm5624 = vcmp.lt.s32.totalorder %v5623, 6
  %v5625 = vsel %vm5624, %v5616, -1e+30
  %5626 = vmax.xlane.f32.xlu0 %v5625
  %v5627 = vpop.xlane.xlu0 %5626
  %v5628 = vsub.f32 %v5625, %v5627
  %v5629 = vmul.f32 %v5628, 1.442695
  %v5630 = vpow.pop %v5629
  %5631 = vadd.xlane.f32.xlu0 %v5630
  %v5632 = vpop.xlane.xlu0 %5631
  %v5633 = vrcp.pop %v5632
  %v5634 = vmul.f32 %v5630, %v5633
  %vm5635 = vcmp.ge.s32.totalorder %v5623, 6
  %vm5636 = vcmp.lt.s32.totalorder %v5623, 8
  %vm5637 = vmand %vm5635, %vm5636
  %v5638 = vsel %vm5637, %v5619, 0.0
  %v5639 = vadd.f32 %v5634, %v5638
  %5640 = vst [vmem:[%s15] sm:$0xff] %v5639
  // Predicated region
  $region122: #{_lambda_.1} parent=0 // pred_check
    _
  $region123: #{_lambda_.1} parent=0 // pred_check_branch
    %5642 = sbr.rel (0) target = $region125
  $region124: #{_lambda_.1} parent=0 // pred_region
    _
  $region125: #{_lambda_.1} parent=0 // pred_fallthru
    _
  // Predicated region
  $region126: #{_lambda_.1} parent=0 // pred_check
    _
  $region127: #{_lambda_.1} parent=0 // pred_check_branch
    %5644 = sbr.rel (0) target = $region129
  $region128: #{_lambda_.1} parent=0 // pred_region
    _
  $region129: #{_lambda_.1} parent=0 // pred_fallthru
    _
  %5645 = vsyncmov [#allocation8]
  %s5646 = vpop.sfrf %5645
  %p5647 = scmp.eq.s32.totalorder %s5646, 0
  %p5648 = pneg %p5647
  %5650 = shalt.err (%p5648)
  %s5651 = scalar_lea.sflag [#allocation8], 1
  %5652 = vsyncmov %s5651
  %s5653 = vpop.sfrf %5652
  %p5654 = scmp.eq.s32.totalorder %s5653, 0
  %p5655 = pneg %p5654
  %5657 = shalt.err (%p5655)

</llo_original>
